<compile_context>
chip_gen: v6e
topology: v6e:2x2x1
jax: 0.10.0
libtpu: 0.0.40
codegen_flags: <defaults>
</compile_context>

<pallas_src>
import functools

import jax
import jax.numpy as jnp
from jax.experimental import pallas as pl
from jax.experimental.pallas import tpu as pltpu

LN_EPS = 1e-5


# ------------------------------------------------------------------------------------
# helpers
# ------------------------------------------------------------------------------------
def _round_up(x, m):
    return (x + m - 1) // m * m


def _pick_tile(dim, cap, align):
    """Pick (tile, padded_dim): tile multiple of `align` (or == padded dim), <= cap."""
    d = _round_up(dim, align)
    if d <= cap:
        return d, d
    t = cap
    while t >= align:
        if d % t == 0:
            return t, d
        t -= align
    return cap, _round_up(d, cap)


def _pad2(a, rows, cols):
    pr, pc = rows - a.shape[0], cols - a.shape[1]
    if pr == 0 and pc == 0:
        return a
    return jnp.pad(a, ((0, pr), (0, pc)))


# ------------------------------------------------------------------------------------
# Fused (LayerNorm) -> matmul -> bias -> QuickGELU -> residual kernel
# ------------------------------------------------------------------------------------
def _mm_kernel(*refs, activation, has_bias, has_res, has_ln, n_k, eps):
    it = iter(refs)
    x_ref = next(it)
    w_ref = next(it)
    g_ref = next(it) if has_ln else None
    bt_ref = next(it) if has_ln else None
    b_ref = next(it) if has_bias else None
    r_ref = next(it) if has_res else None
    o_ref = next(it)
    acc_ref = next(it) if n_k > 1 else None

    x = x_ref[...]
    if has_ln:
        # LayerNorm prologue in f32 on the (tm, K) tile (requires the full K in one tile).
        xf = x.astype(jnp.float32)
        mean = jnp.mean(xf, axis=-1, keepdims=True)
        xc = xf - mean
        var = jnp.mean(xc * xc, axis=-1, keepdims=True)
        xf = xc * jax.lax.rsqrt(var + eps)
        xf = xf * g_ref[...].astype(jnp.float32) + bt_ref[...].astype(jnp.float32)
        x = xf.astype(jnp.bfloat16)

    part = jnp.dot(x, w_ref[...], preferred_element_type=jnp.float32)

    def epilogue(y):
        if has_bias:
            y = y + b_ref[...].astype(jnp.float32)
        if activation == "quick_gelu":
            # x * sigmoid(1.702 x), exp on the EUP
            y = y * (1.0 / (1.0 + jnp.exp(-1.702 * y)))
        if has_res:
            y = y + r_ref[...].astype(jnp.float32)
        o_ref[...] = y.astype(o_ref.dtype)

    if n_k > 1:
        @pl.when(pl.program_id(2) == 0)
        def _init():
            acc_ref[...] = jnp.zeros_like(acc_ref)

        acc_ref[...] += part

        @pl.when(pl.program_id(2) == n_k - 1)
        def _finalize():
            epilogue(acc_ref[...])
    else:
        epilogue(part)


def matmul_bias_act(x, w, b=None, *, activation=None, residual=None, ln=None,
                    out_dtype=jnp.bfloat16, tm_cap=512, tn_cap=512, tk_cap=512):
    """y = act(LN?(x) @ w + b) [+ residual].  bf16 MXU inputs, f32 accumulate/epilogue."""
    M, K = x.shape
    K2, N = w.shape
    assert K == K2

    # Fuse LayerNorm into the prologue only when K needs no padding and fits one tile.
    fuse_ln = ln is not None and K % 128 == 0 and K <= 2048
    if ln is not None and not fuse_ln:
        x = layernorm(x, ln[0], ln[1])

    tm, Mp = _pick_tile(M, tm_cap, 16)       # 16-align sublanes for bf16 packing
    tn, Np = _pick_tile(N, tn_cap, 128)
    if fuse_ln:
        tk, Kp = K, K
    else:
        tk, Kp = _pick_tile(K, tk_cap, 128)
    n_k = Kp // tk

    xp = _pad2(x.astype(jnp.bfloat16), Mp, Kp)
    wp = _pad2(w.astype(jnp.bfloat16), Kp, Np)

    if n_k > 1:
        grid = (Mp // tm, Np // tn, n_k)
        x_map = lambda i, j, k: (i, k)
        w_map = lambda i, j, k: (k, j)
        o_map = lambda i, j, k: (i, j)
        v_map = lambda i, j, k: (0, j)
        ln_map = lambda i, j, k: (0, 0)
        sem = ("parallel", "parallel", "arbitrary")
        scratch = [pltpu.VMEM((tm, tn), jnp.float32)]
    else:
        grid = (Mp // tm, Np // tn)
        x_map = lambda i, j: (i, 0)
        w_map = lambda i, j: (0, j)
        o_map = lambda i, j: (i, j)
        v_map = lambda i, j: (0, j)
        ln_map = lambda i, j: (0, 0)
        sem = ("parallel", "parallel")
        scratch = []

    inputs = [xp, wp]
    in_specs = [pl.BlockSpec((tm, tk), x_map),
                pl.BlockSpec((tk, tn), w_map)]
    if fuse_ln:
        inputs += [ln[0].reshape(1, K).astype(jnp.float32),
                   ln[1].reshape(1, K).astype(jnp.float32)]
        in_specs += [pl.BlockSpec((1, K), ln_map), pl.BlockSpec((1, K), ln_map)]
    if b is not None:
        inputs.append(_pad2(b.reshape(1, N).astype(jnp.float32), 1, Np))
        in_specs.append(pl.BlockSpec((1, tn), v_map))
    if residual is not None:
        inputs.append(_pad2(residual.astype(jnp.bfloat16), Mp, Np))
        in_specs.append(pl.BlockSpec((tm, tn), o_map))

    out = pl.pallas_call(
        functools.partial(_mm_kernel, activation=activation, has_bias=b is not None,
                          has_res=residual is not None, has_ln=fuse_ln, n_k=n_k,
                          eps=LN_EPS),
        grid=grid,
        in_specs=in_specs,
        out_specs=pl.BlockSpec((tm, tn), o_map),
        out_shape=jax.ShapeDtypeStruct((Mp, Np), out_dtype),
        scratch_shapes=scratch,
        compiler_params=pltpu.CompilerParams(dimension_semantics=sem),
    )(*inputs)
    if Mp != M or Np != N:
        out = out[:M, :N]
    return out


# ------------------------------------------------------------------------------------
# Standalone LayerNorm kernel (only used for ln_pre; row-tiled, mem-bound)
# ------------------------------------------------------------------------------------
def _ln_kernel(x_ref, g_ref, b_ref, o_ref, *, eps):
    x = x_ref[...].astype(jnp.float32)
    mean = jnp.mean(x, axis=-1, keepdims=True)
    xc = x - mean
    var = jnp.mean(xc * xc, axis=-1, keepdims=True)
    y = xc * jax.lax.rsqrt(var + eps)
    y = y * g_ref[...].astype(jnp.float32) + b_ref[...].astype(jnp.float32)
    o_ref[...] = y.astype(o_ref.dtype)


def layernorm(x, gamma, beta, out_dtype=jnp.bfloat16, eps=LN_EPS):
    M, C = x.shape
    tm, Mp = _pick_tile(M, 1024, 16)
    xp = x if Mp == M else jnp.pad(x, ((0, Mp - M), (0, 0)))
    out = pl.pallas_call(
        functools.partial(_ln_kernel, eps=eps),
        grid=(Mp // tm,),
        in_specs=[pl.BlockSpec((tm, C), lambda i: (i, 0)),
                  pl.BlockSpec((1, C), lambda i: (0, 0)),
                  pl.BlockSpec((1, C), lambda i: (0, 0))],
        out_specs=pl.BlockSpec((tm, C), lambda i: (i, 0)),
        out_shape=jax.ShapeDtypeStruct((Mp, C), out_dtype),
        compiler_params=pltpu.CompilerParams(dimension_semantics=("parallel",)),
    )(xp, gamma.reshape(1, C), beta.reshape(1, C))
    return out[:M] if Mp != M else out


# ------------------------------------------------------------------------------------
# Attention core: per-batch kernel, consumes the flat [B, L1, 3C] QKV buffer directly
# and writes a lane-dense [B, L1, C] output (no XLA transposes before/after).
# ------------------------------------------------------------------------------------
def _attention_kernel(qkv_ref, o_ref, *, num_heads, head_dim, scale):
    C = num_heads * head_dim
    qkv = qkv_ref[0]                                      # (L1, 3C) bf16
    outs = []
    for h in range(num_heads):                            # static unroll over heads
        q = qkv[:, h * head_dim:(h + 1) * head_dim]
        k = qkv[:, C + h * head_dim:C + (h + 1) * head_dim]
        v = qkv[:, 2 * C + h * head_dim:2 * C + (h + 1) * head_dim]
        # q @ k^T without materializing a transpose
        s = jax.lax.dot_general(q, k, (((1,), (1,)), ((), ())),
                                preferred_element_type=jnp.float32) * scale
        s = s - jnp.max(s, axis=-1, keepdims=True)
        p = jnp.exp(s)
        p = p * pl.reciprocal(jnp.sum(p, axis=-1, keepdims=True), approx=True)
        outs.append(jnp.dot(p.astype(jnp.bfloat16), v,
                            preferred_element_type=jnp.float32))
    o_ref[0] = jnp.concatenate(outs, axis=-1).astype(o_ref.dtype)


def attention_core(qkv, num_heads):
    B, L, C3 = qkv.shape
    C = C3 // 3
    hd = C // num_heads
    return pl.pallas_call(
        functools.partial(_attention_kernel, num_heads=num_heads, head_dim=hd,
                          scale=float(hd) ** -0.5),
        grid=(B,),
        in_specs=[pl.BlockSpec((1, L, C3), lambda b: (b, 0, 0))],
        out_specs=pl.BlockSpec((1, L, C), lambda b: (b, 0, 0)),
        out_shape=jax.ShapeDtypeStruct((B, L, C), jnp.bfloat16),
        compiler_params=pltpu.CompilerParams(dimension_semantics=("parallel",)),
    )(qkv)


# ------------------------------------------------------------------------------------
# ResidualAttentionBlock / Transformer / VisionTransformer forward (JAX glue)
# ------------------------------------------------------------------------------------
def resblock_forward(x, p, num_heads, return_tokens):
    B, L1, C = x.shape
    x2 = x.reshape(B * L1, C)                                          # bf16 residual stream

    # ln_1 fused into the QKV matmul prologue; output is head-major flat [B*L1, 3C].
    qkv = matmul_bias_act(x2, p["w_qkv"], p["b_qkv"], ln=(p["ln1_g"], p["ln1_b"]))
    attn = attention_core(qkv.reshape(B, L1, 3 * C), num_heads)        # (B, L1, C) bf16
    x_att = matmul_bias_act(attn.reshape(B * L1, C), p["w_out"], p["b_out"],
                            residual=x2)                               # x + att

    # MLP branch: ln_2 fused into c_fc, QuickGELU in the epilogue, residual in c_proj.
    h = matmul_bias_act(x_att, p["w_fc"], p["b_fc"], activation="quick_gelu",
                        ln=(p["ln2_g"], p["ln2_b"]))
    x_new = matmul_bias_act(h, p["w_proj"], p["b_proj"], residual=x_att)
    x_new = x_new.reshape(B, L1, C)

    if not return_tokens:
        return x_new, None

    # tokens = cls(block input) + out_proj(v_proj(ln1 x));  tokens += mlp(ln_2(tokens))
    v_flat = qkv[:, 2 * C:]                                            # reuse v (no recompute)
    vproj = matmul_bias_act(v_flat, p["w_out"], p["b_out"])            # (B*L1, C) bf16
    cls = x[:, 0, :]                                                   # block-input cls token
    # fused XLA broadcast-add (no materialized B*L1*C residual array)
    tokens = (vproj.reshape(B, L1, C) + cls[:, None, :]).reshape(B * L1, C)
    ht = matmul_bias_act(tokens, p["w_fc"], p["b_fc"], activation="quick_gelu",
                         ln=(p["ln2_g"], p["ln2_b"]))
    tokens_out = matmul_bias_act(ht, p["w_proj"], p["b_proj"], residual=tokens)
    return x_new, tokens_out.reshape(B, L1, C)


def vision_transformer_forward(x_nchw, params, *, patch_size, num_heads,
                               return_tokens=True):
    width = params["class_embedding"].shape[0]
    output_dim = params["proj"].shape[1]
    B, Cin, H, W = x_nchw.shape
    P = patch_size
    gh, gw = H // P, W // P
    L = gh * gw
    L1 = L + 1

    # conv1 (kernel == stride == P, no bias): bf16 patch rearrangement + MXU matmul.
    xim = jnp.transpose(x_nchw.astype(jnp.bfloat16), (0, 2, 3, 1))     # NHWC, bf16
    patches = xim.reshape(B, gh, P, gw, P, Cin).transpose(0, 1, 3, 2, 4, 5)
    patches = patches.reshape(B * L, P * P * Cin)
    emb = matmul_bias_act(patches, params["conv1_w"])                  # no bias
    emb = emb.reshape(B, L, width)

    cls_tok = jnp.broadcast_to(
        params["class_embedding"].astype(jnp.bfloat16)[None, None, :], (B, 1, width))
    tok = jnp.concatenate([cls_tok, emb], axis=1)                      # (B, L+1, width)
    # TODO(synk): rescale_positional_embedding (bilinear interpolation) for grid_size !=
    #             pe_grid_size is not implemented; this forward uses matching grid size.
    tok = tok + params["positional_embedding"].astype(jnp.bfloat16)[None]

    xr = layernorm(tok.reshape(B * L1, width), params["ln_pre_g"], params["ln_pre_b"])
    xr = xr.reshape(B, L1, width)

    img_tokens = None
    n_blocks = len(params["blocks"])
    for i, blk in enumerate(params["blocks"]):
        want = return_tokens and (i == n_blocks - 1)
        xr, t = resblock_forward(xr, blk, num_heads, want)
        if want:
            img_tokens = t

    # pooled cls output: ln_post fused into the projection matmul (proj has no bias).
    pooled = matmul_bias_act(xr[:, 0, :], params["proj"],
                             ln=(params["ln_post_g"], params["ln_post_b"]),
                             out_dtype=jnp.float32)                    # (B, output_dim)

    if return_tokens:
        tk = matmul_bias_act(img_tokens.reshape(B * L1, width), params["proj"],
                             ln=(params["ln_post_g"], params["ln_post_b"]),
                             out_dtype=jnp.float32)
        tk = tk.reshape(B, L1, output_dim)[:, 1:]                      # drop cls
        image_tokens = tk.transpose(0, 2, 1).reshape(B, output_dim, gh, gw)
    else:
        image_tokens = None
    return pooled, image_tokens


# ------------------------------------------------------------------------------------
# Deterministic parameter construction (shapes follow the PyTorch __init__)
# ------------------------------------------------------------------------------------
def init_params(key, *, input_resolution, patch_size, width, layers, heads, output_dim):
    keys = iter(jax.random.split(key, 8 + 8 * layers))

    def nk():
        return next(keys)

    scale = width ** -0.5
    grid = input_resolution // patch_size
    params = dict(
        conv1_w=(jax.random.normal(nk(), (patch_size * patch_size * 3, width), jnp.float32)
                 * (patch_size * patch_size * 3) ** -0.5).astype(jnp.bfloat16),
        class_embedding=scale * jax.random.normal(nk(), (width,), jnp.float32),
        positional_embedding=scale * jax.random.normal(
            nk(), (grid * grid + 1, width), jnp.float32),
        ln_pre_g=jnp.ones((width,), jnp.float32),
        ln_pre_b=jnp.zeros((width,), jnp.float32),
        ln_post_g=jnp.ones((width,), jnp.float32),
        ln_post_b=jnp.zeros((width,), jnp.float32),
        proj=(scale * jax.random.normal(nk(), (width, output_dim), jnp.float32)
              ).astype(jnp.bfloat16),
    )

    def lin(cin, cout):
        w = (jax.random.normal(nk(), (cin, cout), jnp.float32) * cin ** -0.5
             ).astype(jnp.bfloat16)
        b = jnp.zeros((cout,), jnp.float32)
        return w, b

    blocks = []
    for _ in range(layers):
        w_qkv, b_qkv = lin(width, 3 * width)
        w_out, b_out = lin(width, width)
        w_fc, b_fc = lin(width, 4 * width)
        w_proj, b_proj = lin(4 * width, width)
        blocks.append(dict(
            ln1_g=jnp.ones((width,), jnp.float32),
            ln1_b=jnp.zeros((width,), jnp.float32),
            ln2_g=jnp.ones((width,), jnp.float32),
            ln2_b=jnp.zeros((width,), jnp.float32),
            w_qkv=w_qkv, b_qkv=b_qkv, w_out=w_out, b_out=b_out,
            w_fc=w_fc, b_fc=b_fc, w_proj=w_proj, b_proj=b_proj))
    params["blocks"] = blocks
    return params


if __name__ == "__main__":
    INPUT_RES = 32
    PATCH = 8
    WIDTH = 128
    LAYERS = 2
    HEADS = 4
    OUTPUT_DIM = 64
    GRID = INPUT_RES // PATCH

    key = jax.random.PRNGKey(0)
    pkey, xkey = jax.random.split(key)
    params = init_params(pkey, input_resolution=INPUT_RES, patch_size=PATCH,
                         width=WIDTH, layers=LAYERS, heads=HEADS,
                         output_dim=OUTPUT_DIM)
    x = jax.random.normal(xkey, (2, 3, INPUT_RES, INPUT_RES), jnp.float32)

    fwd = jax.jit(functools.partial(vision_transformer_forward,
                                    patch_size=PATCH, num_heads=HEADS,
                                    return_tokens=True))
    pooled, image_tokens = fwd(x, params)
    jax.block_until_ready((pooled, image_tokens))

    assert pooled.shape == (2, OUTPUT_DIM)
    assert image_tokens.shape == (2, OUTPUT_DIM, GRID, GRID)
    assert bool(jnp.all(jnp.isfinite(pooled)))
    assert bool(jnp.all(jnp.isfinite(image_tokens)))
    print("KERNEL_OK")
</pallas_src>

<mosaic_0001>
module attributes {stable_mosaic.version = 11 : i64} {
  func.func @_mm_kernel(%arg0: i32, %arg1: i32, %arg2: memref<32x256xbf16, #tpu.memory_space<vmem>>, %arg3: memref<256x128xbf16, #tpu.memory_space<vmem>>, %arg4: memref<32x128xbf16, #tpu.memory_space<vmem>>) attributes {dimension_semantics = [#tpu.dimension_semantics<parallel>, #tpu.dimension_semantics<parallel>], iteration_bounds = array<i64: 1, 1>, scalar_prefetch = 0 : i64, scratch_operands = 0 : i64, tpu.core_type = #tpu.core_type<tc>, window_params = [{transform_indices = @transform_0, window_bounds = array<i64: 32, 256>}, {transform_indices = @transform_1, window_bounds = array<i64: 256, 128>}, {transform_indices = @transform_2, window_bounds = array<i64: 32, 128>}]} {
    %c0 = arith.constant 0 : index
    %c0_0 = arith.constant 0 : index
    %0 = vector.load %arg2[%c0, %c0_0] : memref<32x256xbf16, #tpu.memory_space<vmem>>, vector<32x256xbf16>
    %c0_1 = arith.constant 0 : index
    %c0_2 = arith.constant 0 : index
    %1 = vector.load %arg3[%c0_1, %c0_2] : memref<256x128xbf16, #tpu.memory_space<vmem>>, vector<256x128xbf16>
    %cst = arith.constant dense<0.000000e+00> : vector<32x128xf32>
    %2 = tpu.matmul %0, %1, %cst {dimension_numbers = #tpu.dot_dimension_numbers<[1], [0], [0], [1], [0, 0, 1, 1], [], []>} : vector<32x256xbf16>, vector<256x128xbf16>, vector<32x128xf32> -> vector<32x128xf32>
    %3 = arith.truncf %2 : vector<32x128xf32> to vector<32x128xbf16>
    %c0_3 = arith.constant 0 : index
    %c0_4 = arith.constant 0 : index
    %4 = vector.load %arg4[%c0_3, %c0_4] : memref<32x128xbf16, #tpu.memory_space<vmem>>, vector<32x128xbf16>
    tpu.vector_store %arg4[%c0_3, %c0_4], %3 {strides = array<i32>} : memref<32x128xbf16, #tpu.memory_space<vmem>>, vector<32x128xbf16>,
    return
  }
  func.func @transform_0(%arg0: i32, %arg1: i32) -> (i32, i32) {
    %c0_i32 = arith.constant 0 : i32
    %c0_i32_0 = arith.constant 0 : i32
    return %arg0, %c0_i32 : i32, i32
  }
  func.func @transform_1(%arg0: i32, %arg1: i32) -> (i32, i32) {
    %c0_i32 = arith.constant 0 : i32
    %c0_i32_0 = arith.constant 0 : i32
    return %c0_i32, %arg1 : i32, i32
  }
  func.func @transform_2(%arg0: i32, %arg1: i32) -> (i32, i32) {
    %c0_i32 = arith.constant 0 : i32
    return %arg0, %arg1 : i32, i32
  }
}

module attributes {stable_mosaic.version = 11 : i64} {
  func.func @_ln_kernel(%arg0: i32, %arg1: memref<48x128xbf16, #tpu.memory_space<vmem>>, %arg2: memref<1x128xf32, #tpu.memory_space<vmem>>, %arg3: memref<1x128xf32, #tpu.memory_space<vmem>>, %arg4: memref<48x128xbf16, #tpu.memory_space<vmem>>) attributes {dimension_semantics = [#tpu.dimension_semantics<parallel>], iteration_bounds = array<i64: 1>, scalar_prefetch = 0 : i64, scratch_operands = 0 : i64, tpu.core_type = #tpu.core_type<tc>, window_params = [{transform_indices = @transform_0, window_bounds = array<i64: 48, 128>}, {pipeline_mode = #tpu.pipeline_mode<synchronous>, transform_indices = @transform_1, window_bounds = array<i64: 1, 128>}, {pipeline_mode = #tpu.pipeline_mode<synchronous>, transform_indices = @transform_2, window_bounds = array<i64: 1, 128>}, {transform_indices = @transform_3, window_bounds = array<i64: 48, 128>}]} {
    %c0 = arith.constant 0 : index
    %c0_0 = arith.constant 0 : index
    %0 = vector.load %arg1[%c0, %c0_0] : memref<48x128xbf16, #tpu.memory_space<vmem>>, vector<48x128xbf16>
    %1 = arith.extf %0 : vector<48x128xbf16> to vector<48x128xf32>
    %cst = arith.constant dense<0.000000e+00> : vector<48xf32>
    %2 = vector.multi_reduction <add>, %1, %cst [1] : vector<48x128xf32> to vector<48xf32>
    %3 = vector.shape_cast %2 : vector<48xf32> to vector<48x1xf32>
    %cst_1 = arith.constant 1.280000e+02 : f32
    %4 = vector.broadcast %cst_1 : f32 to vector<48x1xf32>
    %5 = arith.divf %3, %4 : vector<48x1xf32>
    %6 = vector.broadcast %5 : vector<48x1xf32> to vector<48x128xf32>
    %7 = arith.subf %1, %6 : vector<48x128xf32>
    %8 = arith.mulf %7, %7 : vector<48x128xf32>
    %cst_2 = arith.constant dense<0.000000e+00> : vector<48xf32>
    %9 = vector.multi_reduction <add>, %8, %cst_2 [1] : vector<48x128xf32> to vector<48xf32>
    %10 = vector.shape_cast %9 : vector<48xf32> to vector<48x1xf32>
    %cst_3 = arith.constant 1.280000e+02 : f32
    %11 = vector.broadcast %cst_3 : f32 to vector<48x1xf32>
    %12 = arith.divf %10, %11 : vector<48x1xf32>
    %cst_4 = arith.constant 9.99999974E-6 : f32
    %13 = vector.broadcast %cst_4 : f32 to vector<48x1xf32>
    %14 = arith.addf %12, %13 : vector<48x1xf32>
    %15 = math.rsqrt %14 : vector<48x1xf32>
    %16 = vector.broadcast %15 : vector<48x1xf32> to vector<48x128xf32>
    %17 = arith.mulf %7, %16 : vector<48x128xf32>
    %c0_5 = arith.constant 0 : index
    %c0_6 = arith.constant 0 : index
    %18 = vector.load %arg2[%c0_5, %c0_6] : memref<1x128xf32, #tpu.memory_space<vmem>>, vector<1x128xf32>
    %19 = vector.broadcast %18 : vector<1x128xf32> to vector<48x128xf32>
    %20 = arith.mulf %17, %19 : vector<48x128xf32>
    %c0_7 = arith.constant 0 : index
    %c0_8 = arith.constant 0 : index
    %21 = vector.load %arg3[%c0_7, %c0_8] : memref<1x128xf32, #tpu.memory_space<vmem>>, vector<1x128xf32>
    %22 = vector.broadcast %21 : vector<1x128xf32> to vector<48x128xf32>
    %23 = arith.addf %20, %22 : vector<48x128xf32>
    %24 = arith.truncf %23 : vector<48x128xf32> to vector<48x128xbf16>
    %c0_9 = arith.constant 0 : index
    %c0_10 = arith.constant 0 : index
    %25 = vector.load %arg4[%c0_9, %c0_10] : memref<48x128xbf16, #tpu.memory_space<vmem>>, vector<48x128xbf16>
    tpu.vector_store %arg4[%c0_9, %c0_10], %24 {strides = array<i32>} : memref<48x128xbf16, #tpu.memory_space<vmem>>, vector<48x128xbf16>,
    return
  }
  func.func @transform_0(%arg0: i32) -> (i32, i32) {
    %c0_i32 = arith.constant 0 : i32
    %c0_i32_0 = arith.constant 0 : i32
    return %arg0, %c0_i32 : i32, i32
  }
  func.func @transform_1(%arg0: i32) -> (i32, i32) {
    %c0_i32 = arith.constant 0 : i32
    %c0_i32_0 = arith.constant 0 : i32
    %c0_i32_1 = arith.constant 0 : i32
    return %c0_i32, %c0_i32_0 : i32, i32
  }
  func.func @transform_2(%arg0: i32) -> (i32, i32) {
    %c0_i32 = arith.constant 0 : i32
    %c0_i32_0 = arith.constant 0 : i32
    %c0_i32_1 = arith.constant 0 : i32
    return %c0_i32, %c0_i32_0 : i32, i32
  }
  func.func @transform_3(%arg0: i32) -> (i32, i32) {
    %c0_i32 = arith.constant 0 : i32
    %c0_i32_0 = arith.constant 0 : i32
    return %arg0, %c0_i32 : i32, i32
  }
}

module attributes {stable_mosaic.version = 11 : i64} {
  func.func @_mm_kernel(%arg0: i32, %arg1: i32, %arg2: memref<48x128xbf16, #tpu.memory_space<vmem>>, %arg3: memref<128x384xbf16, #tpu.memory_space<vmem>>, %arg4: memref<1x128xf32, #tpu.memory_space<vmem>>, %arg5: memref<1x128xf32, #tpu.memory_space<vmem>>, %arg6: memref<1x384xf32, #tpu.memory_space<vmem>>, %arg7: memref<48x384xbf16, #tpu.memory_space<vmem>>) attributes {dimension_semantics = [#tpu.dimension_semantics<parallel>, #tpu.dimension_semantics<parallel>], iteration_bounds = array<i64: 1, 1>, scalar_prefetch = 0 : i64, scratch_operands = 0 : i64, tpu.core_type = #tpu.core_type<tc>, window_params = [{transform_indices = @transform_0, window_bounds = array<i64: 48, 128>}, {transform_indices = @transform_1, window_bounds = array<i64: 128, 384>}, {pipeline_mode = #tpu.pipeline_mode<synchronous>, transform_indices = @transform_2, window_bounds = array<i64: 1, 128>}, {pipeline_mode = #tpu.pipeline_mode<synchronous>, transform_indices = @transform_3, window_bounds = array<i64: 1, 128>}, {transform_indices = @transform_4, window_bounds = array<i64: 1, 384>}, {transform_indices = @transform_5, window_bounds = array<i64: 48, 384>}]} {
    %c0 = arith.constant 0 : index
    %c0_0 = arith.constant 0 : index
    %0 = vector.load %arg2[%c0, %c0_0] : memref<48x128xbf16, #tpu.memory_space<vmem>>, vector<48x128xbf16>
    %1 = arith.extf %0 : vector<48x128xbf16> to vector<48x128xf32>
    %cst = arith.constant dense<0.000000e+00> : vector<48xf32>
    %2 = vector.multi_reduction <add>, %1, %cst [1] : vector<48x128xf32> to vector<48xf32>
    %3 = vector.shape_cast %2 : vector<48xf32> to vector<48x1xf32>
    %cst_1 = arith.constant 1.280000e+02 : f32
    %4 = vector.broadcast %cst_1 : f32 to vector<48x1xf32>
    %5 = arith.divf %3, %4 : vector<48x1xf32>
    %6 = vector.broadcast %5 : vector<48x1xf32> to vector<48x128xf32>
    %7 = arith.subf %1, %6 : vector<48x128xf32>
    %8 = arith.mulf %7, %7 : vector<48x128xf32>
    %cst_2 = arith.constant dense<0.000000e+00> : vector<48xf32>
    %9 = vector.multi_reduction <add>, %8, %cst_2 [1] : vector<48x128xf32> to vector<48xf32>
    %10 = vector.shape_cast %9 : vector<48xf32> to vector<48x1xf32>
    %cst_3 = arith.constant 1.280000e+02 : f32
    %11 = vector.broadcast %cst_3 : f32 to vector<48x1xf32>
    %12 = arith.divf %10, %11 : vector<48x1xf32>
    %cst_4 = arith.constant 9.99999974E-6 : f32
    %13 = vector.broadcast %cst_4 : f32 to vector<48x1xf32>
    %14 = arith.addf %12, %13 : vector<48x1xf32>
    %15 = math.rsqrt %14 : vector<48x1xf32>
    %16 = vector.broadcast %15 : vector<48x1xf32> to vector<48x128xf32>
    %17 = arith.mulf %7, %16 : vector<48x128xf32>
    %c0_5 = arith.constant 0 : index
    %c0_6 = arith.constant 0 : index
    %18 = vector.load %arg4[%c0_5, %c0_6] : memref<1x128xf32, #tpu.memory_space<vmem>>, vector<1x128xf32>
    %19 = vector.broadcast %18 : vector<1x128xf32> to vector<48x128xf32>
    %20 = arith.mulf %17, %19 : vector<48x128xf32>
    %c0_7 = arith.constant 0 : index
    %c0_8 = arith.constant 0 : index
    %21 = vector.load %arg5[%c0_7, %c0_8] : memref<1x128xf32, #tpu.memory_space<vmem>>, vector<1x128xf32>
    %22 = vector.broadcast %21 : vector<1x128xf32> to vector<48x128xf32>
    %23 = arith.addf %20, %22 : vector<48x128xf32>
    %24 = arith.truncf %23 : vector<48x128xf32> to vector<48x128xbf16>
    %c0_9 = arith.constant 0 : index
    %c0_10 = arith.constant 0 : index
    %25 = vector.load %arg3[%c0_9, %c0_10] : memref<128x384xbf16, #tpu.memory_space<vmem>>, vector<128x384xbf16>
    %cst_11 = arith.constant dense<0.000000e+00> : vector<48x384xf32>
    %26 = tpu.matmul %24, %25, %cst_11 {dimension_numbers = #tpu.dot_dimension_numbers<[1], [0], [0], [1], [0, 0, 1, 1], [], []>} : vector<48x128xbf16>, vector<128x384xbf16>, vector<48x384xf32> -> vector<48x384xf32>
    %c0_12 = arith.constant 0 : index
    %c0_13 = arith.constant 0 : index
    %27 = vector.load %arg6[%c0_12, %c0_13] : memref<1x384xf32, #tpu.memory_space<vmem>>, vector<1x384xf32>
    %28 = vector.broadcast %27 : vector<1x384xf32> to vector<48x384xf32>
    %29 = arith.addf %26, %28 : vector<48x384xf32>
    %30 = arith.truncf %29 : vector<48x384xf32> to vector<48x384xbf16>
    %c0_14 = arith.constant 0 : index
    %c0_15 = arith.constant 0 : index
    %31 = vector.load %arg7[%c0_14, %c0_15] : memref<48x384xbf16, #tpu.memory_space<vmem>>, vector<48x384xbf16>
    tpu.vector_store %arg7[%c0_14, %c0_15], %30 {strides = array<i32>} : memref<48x384xbf16, #tpu.memory_space<vmem>>, vector<48x384xbf16>,
    return
  }
  func.func @transform_0(%arg0: i32, %arg1: i32) -> (i32, i32) {
    %c0_i32 = arith.constant 0 : i32
    %c0_i32_0 = arith.constant 0 : i32
    return %arg0, %c0_i32 : i32, i32
  }
  func.func @transform_1(%arg0: i32, %arg1: i32) -> (i32, i32) {
    %c0_i32 = arith.constant 0 : i32
    %c0_i32_0 = arith.constant 0 : i32
    return %c0_i32, %arg1 : i32, i32
  }
  func.func @transform_2(%arg0: i32, %arg1: i32) -> (i32, i32) {
    %c0_i32 = arith.constant 0 : i32
    %c0_i32_0 = arith.constant 0 : i32
    %c0_i32_1 = arith.constant 0 : i32
    return %c0_i32, %c0_i32_0 : i32, i32
  }
  func.func @transform_3(%arg0: i32, %arg1: i32) -> (i32, i32) {
    %c0_i32 = arith.constant 0 : i32
    %c0_i32_0 = arith.constant 0 : i32
    %c0_i32_1 = arith.constant 0 : i32
    return %c0_i32, %c0_i32_0 : i32, i32
  }
  func.func @transform_4(%arg0: i32, %arg1: i32) -> (i32, i32) {
    %c0_i32 = arith.constant 0 : i32
    %c0_i32_0 = arith.constant 0 : i32
    return %c0_i32, %arg1 : i32, i32
  }
  func.func @transform_5(%arg0: i32, %arg1: i32) -> (i32, i32) {
    %c0_i32 = arith.constant 0 : i32
    return %arg0, %arg1 : i32, i32
  }
}

module attributes {stable_mosaic.version = 11 : i64} {
  func.func @_attention_kernel(%arg0: i32, %arg1: memref<1x17x384xbf16, #tpu.memory_space<vmem>>, %arg2: memref<1x17x128xbf16, #tpu.memory_space<vmem>>) attributes {dimension_semantics = [#tpu.dimension_semantics<parallel>], iteration_bounds = array<i64: 2>, scalar_prefetch = 0 : i64, scratch_operands = 0 : i64, tpu.core_type = #tpu.core_type<tc>, window_params = [{transform_indices = @transform_0, window_bounds = array<i64: 1, 17, 384>}, {transform_indices = @transform_1, window_bounds = array<i64: 1, 17, 128>}]} {
    %c0 = arith.constant 0 : index
    %c0_0 = arith.constant 0 : index
    %c0_1 = arith.constant 0 : index
    %0 = vector.load %arg1[%c0, %c0_0, %c0_1] : memref<1x17x384xbf16, #tpu.memory_space<vmem>>, vector<1x17x384xbf16>
    %1 = vector.shape_cast %0 : vector<1x17x384xbf16> to vector<17x384xbf16>
    %2 = vector.extract_strided_slice %1 {offsets = [0, 0], sizes = [17, 32], strides = [1, 1]} : vector<17x384xbf16> to vector<17x32xbf16>
    %3 = vector.extract_strided_slice %1 {offsets = [0, 128], sizes = [17, 32], strides = [1, 1]} : vector<17x384xbf16> to vector<17x32xbf16>
    %4 = vector.extract_strided_slice %1 {offsets = [0, 256], sizes = [17, 32], strides = [1, 1]} : vector<17x384xbf16> to vector<17x32xbf16>
    %cst = arith.constant dense<0.000000e+00> : vector<17x17xf32>
    %5 = tpu.matmul %2, %3, %cst {dimension_numbers = #tpu.dot_dimension_numbers<[1], [1], [0], [0], [0, 0, 1, 0], [], []>} : vector<17x32xbf16>, vector<17x32xbf16>, vector<17x17xf32> -> vector<17x17xf32>
    %cst_2 = arith.constant 0.176776692 : f32
    %6 = vector.broadcast %cst_2 : f32 to vector<17x17xf32>
    %7 = arith.mulf %5, %6 : vector<17x17xf32>
    %cst_3 = arith.constant dense<0xFF800000> : vector<17xf32>
    %8 = vector.multi_reduction <maximumf>, %7, %cst_3 [1] : vector<17x17xf32> to vector<17xf32>
    %9 = vector.shape_cast %8 : vector<17xf32> to vector<17x1xf32>
    %10 = vector.broadcast %9 : vector<17x1xf32> to vector<17x17xf32>
    %11 = arith.subf %7, %10 : vector<17x17xf32>
    %12 = math.exp %11 : vector<17x17xf32>
    %cst_4 = arith.constant dense<0.000000e+00> : vector<17xf32>
    %13 = vector.multi_reduction <add>, %12, %cst_4 [1] : vector<17x17xf32> to vector<17xf32>
    %14 = vector.shape_cast %13 : vector<17xf32> to vector<17x1xf32>
    %15 = tpu.reciprocal %14 {approx = true} : vector<17x1xf32> -> vector<17x1xf32>
    %16 = vector.broadcast %15 : vector<17x1xf32> to vector<17x17xf32>
    %17 = arith.mulf %12, %16 : vector<17x17xf32>
    %18 = arith.truncf %17 : vector<17x17xf32> to vector<17x17xbf16>
    %cst_5 = arith.constant dense<0.000000e+00> : vector<17x32xf32>
    %19 = tpu.matmul %18, %4, %cst_5 {dimension_numbers = #tpu.dot_dimension_numbers<[1], [0], [0], [1], [0, 0, 1, 1], [], []>} : vector<17x17xbf16>, vector<17x32xbf16>, vector<17x32xf32> -> vector<17x32xf32>
    %20 = vector.extract_strided_slice %1 {offsets = [0, 32], sizes = [17, 32], strides = [1, 1]} : vector<17x384xbf16> to vector<17x32xbf16>
    %21 = vector.extract_strided_slice %1 {offsets = [0, 160], sizes = [17, 32], strides = [1, 1]} : vector<17x384xbf16> to vector<17x32xbf16>
    %22 = vector.extract_strided_slice %1 {offsets = [0, 288], sizes = [17, 32], strides = [1, 1]} : vector<17x384xbf16> to vector<17x32xbf16>
    %cst_6 = arith.constant dense<0.000000e+00> : vector<17x17xf32>
    %23 = tpu.matmul %20, %21, %cst_6 {dimension_numbers = #tpu.dot_dimension_numbers<[1], [1], [0], [0], [0, 0, 1, 0], [], []>} : vector<17x32xbf16>, vector<17x32xbf16>, vector<17x17xf32> -> vector<17x17xf32>
    %cst_7 = arith.constant 0.176776692 : f32
    %24 = vector.broadcast %cst_7 : f32 to vector<17x17xf32>
    %25 = arith.mulf %23, %24 : vector<17x17xf32>
    %cst_8 = arith.constant dense<0xFF800000> : vector<17xf32>
    %26 = vector.multi_reduction <maximumf>, %25, %cst_8 [1] : vector<17x17xf32> to vector<17xf32>
    %27 = vector.shape_cast %26 : vector<17xf32> to vector<17x1xf32>
    %28 = vector.broadcast %27 : vector<17x1xf32> to vector<17x17xf32>
    %29 = arith.subf %25, %28 : vector<17x17xf32>
    %30 = math.exp %29 : vector<17x17xf32>
    %cst_9 = arith.constant dense<0.000000e+00> : vector<17xf32>
    %31 = vector.multi_reduction <add>, %30, %cst_9 [1] : vector<17x17xf32> to vector<17xf32>
    %32 = vector.shape_cast %31 : vector<17xf32> to vector<17x1xf32>
    %33 = tpu.reciprocal %32 {approx = true} : vector<17x1xf32> -> vector<17x1xf32>
    %34 = vector.broadcast %33 : vector<17x1xf32> to vector<17x17xf32>
    %35 = arith.mulf %30, %34 : vector<17x17xf32>
    %36 = arith.truncf %35 : vector<17x17xf32> to vector<17x17xbf16>
    %cst_10 = arith.constant dense<0.000000e+00> : vector<17x32xf32>
    %37 = tpu.matmul %36, %22, %cst_10 {dimension_numbers = #tpu.dot_dimension_numbers<[1], [0], [0], [1], [0, 0, 1, 1], [], []>} : vector<17x17xbf16>, vector<17x32xbf16>, vector<17x32xf32> -> vector<17x32xf32>
    %38 = vector.extract_strided_slice %1 {offsets = [0, 64], sizes = [17, 32], strides = [1, 1]} : vector<17x384xbf16> to vector<17x32xbf16>
    %39 = vector.extract_strided_slice %1 {offsets = [0, 192], sizes = [17, 32], strides = [1, 1]} : vector<17x384xbf16> to vector<17x32xbf16>
    %40 = vector.extract_strided_slice %1 {offsets = [0, 320], sizes = [17, 32], strides = [1, 1]} : vector<17x384xbf16> to vector<17x32xbf16>
    %cst_11 = arith.constant dense<0.000000e+00> : vector<17x17xf32>
    %41 = tpu.matmul %38, %39, %cst_11 {dimension_numbers = #tpu.dot_dimension_numbers<[1], [1], [0], [0], [0, 0, 1, 0], [], []>} : vector<17x32xbf16>, vector<17x32xbf16>, vector<17x17xf32> -> vector<17x17xf32>
    %cst_12 = arith.constant 0.176776692 : f32
    %42 = vector.broadcast %cst_12 : f32 to vector<17x17xf32>
    %43 = arith.mulf %41, %42 : vector<17x17xf32>
    %cst_13 = arith.constant dense<0xFF800000> : vector<17xf32>
    %44 = vector.multi_reduction <maximumf>, %43, %cst_13 [1] : vector<17x17xf32> to vector<17xf32>
    %45 = vector.shape_cast %44 : vector<17xf32> to vector<17x1xf32>
    %46 = vector.broadcast %45 : vector<17x1xf32> to vector<17x17xf32>
    %47 = arith.subf %43, %46 : vector<17x17xf32>
    %48 = math.exp %47 : vector<17x17xf32>
    %cst_14 = arith.constant dense<0.000000e+00> : vector<17xf32>
    %49 = vector.multi_reduction <add>, %48, %cst_14 [1] : vector<17x17xf32> to vector<17xf32>
    %50 = vector.shape_cast %49 : vector<17xf32> to vector<17x1xf32>
    %51 = tpu.reciprocal %50 {approx = true} : vector<17x1xf32> -> vector<17x1xf32>
    %52 = vector.broadcast %51 : vector<17x1xf32> to vector<17x17xf32>
    %53 = arith.mulf %48, %52 : vector<17x17xf32>
    %54 = arith.truncf %53 : vector<17x17xf32> to vector<17x17xbf16>
    %cst_15 = arith.constant dense<0.000000e+00> : vector<17x32xf32>
    %55 = tpu.matmul %54, %40, %cst_15 {dimension_numbers = #tpu.dot_dimension_numbers<[1], [0], [0], [1], [0, 0, 1, 1], [], []>} : vector<17x17xbf16>, vector<17x32xbf16>, vector<17x32xf32> -> vector<17x32xf32>
    %56 = vector.extract_strided_slice %1 {offsets = [0, 96], sizes = [17, 32], strides = [1, 1]} : vector<17x384xbf16> to vector<17x32xbf16>
    %57 = vector.extract_strided_slice %1 {offsets = [0, 224], sizes = [17, 32], strides = [1, 1]} : vector<17x384xbf16> to vector<17x32xbf16>
    %58 = vector.extract_strided_slice %1 {offsets = [0, 352], sizes = [17, 32], strides = [1, 1]} : vector<17x384xbf16> to vector<17x32xbf16>
    %cst_16 = arith.constant dense<0.000000e+00> : vector<17x17xf32>
    %59 = tpu.matmul %56, %57, %cst_16 {dimension_numbers = #tpu.dot_dimension_numbers<[1], [1], [0], [0], [0, 0, 1, 0], [], []>} : vector<17x32xbf16>, vector<17x32xbf16>, vector<17x17xf32> -> vector<17x17xf32>
    %cst_17 = arith.constant 0.176776692 : f32
    %60 = vector.broadcast %cst_17 : f32 to vector<17x17xf32>
    %61 = arith.mulf %59, %60 : vector<17x17xf32>
    %cst_18 = arith.constant dense<0xFF800000> : vector<17xf32>
    %62 = vector.multi_reduction <maximumf>, %61, %cst_18 [1] : vector<17x17xf32> to vector<17xf32>
    %63 = vector.shape_cast %62 : vector<17xf32> to vector<17x1xf32>
    %64 = vector.broadcast %63 : vector<17x1xf32> to vector<17x17xf32>
    %65 = arith.subf %61, %64 : vector<17x17xf32>
    %66 = math.exp %65 : vector<17x17xf32>
    %cst_19 = arith.constant dense<0.000000e+00> : vector<17xf32>
    %67 = vector.multi_reduction <add>, %66, %cst_19 [1] : vector<17x17xf32> to vector<17xf32>
    %68 = vector.shape_cast %67 : vector<17xf32> to vector<17x1xf32>
    %69 = tpu.reciprocal %68 {approx = true} : vector<17x1xf32> -> vector<17x1xf32>
    %70 = vector.broadcast %69 : vector<17x1xf32> to vector<17x17xf32>
    %71 = arith.mulf %66, %70 : vector<17x17xf32>
    %72 = arith.truncf %71 : vector<17x17xf32> to vector<17x17xbf16>
    %cst_20 = arith.constant dense<0.000000e+00> : vector<17x32xf32>
    %73 = tpu.matmul %72, %58, %cst_20 {dimension_numbers = #tpu.dot_dimension_numbers<[1], [0], [0], [1], [0, 0, 1, 1], [], []>} : vector<17x17xbf16>, vector<17x32xbf16>, vector<17x32xf32> -> vector<17x32xf32>
    %74 = tpu.concatenate %19, %37, %55, %73 in 1 : vector<17x32xf32>, vector<17x32xf32>, vector<17x32xf32>, vector<17x32xf32> -> vector<17x128xf32>
    %75 = arith.truncf %74 : vector<17x128xf32> to vector<17x128xbf16>
    %c0_21 = arith.constant 0 : index
    %c0_22 = arith.constant 0 : index
    %c0_23 = arith.constant 0 : index
    %76 = vector.load %arg2[%c0_21, %c0_22, %c0_23] : memref<1x17x128xbf16, #tpu.memory_space<vmem>>, vector<1x17x128xbf16>
    %77 = vector.shape_cast %76 : vector<1x17x128xbf16> to vector<17x128xbf16>
    %78 = vector.shape_cast %75 : vector<17x128xbf16> to vector<1x17x128xbf16>
    tpu.vector_store %arg2[%c0_21, %c0_22, %c0_23], %78 {strides = array<i32>} : memref<1x17x128xbf16, #tpu.memory_space<vmem>>, vector<1x17x128xbf16>,
    return
  }
  func.func @transform_0(%arg0: i32) -> (i32, i32, i32) {
    %c0_i32 = arith.constant 0 : i32
    %c0_i32_0 = arith.constant 0 : i32
    %c0_i32_1 = arith.constant 0 : i32
    return %arg0, %c0_i32, %c0_i32_0 : i32, i32, i32
  }
  func.func @transform_1(%arg0: i32) -> (i32, i32, i32) {
    %c0_i32 = arith.constant 0 : i32
    %c0_i32_0 = arith.constant 0 : i32
    %c0_i32_1 = arith.constant 0 : i32
    return %arg0, %c0_i32, %c0_i32_0 : i32, i32, i32
  }
}

module attributes {stable_mosaic.version = 11 : i64} {
  func.func @_mm_kernel(%arg0: i32, %arg1: i32, %arg2: memref<48x128xbf16, #tpu.memory_space<vmem>>, %arg3: memref<128x128xbf16, #tpu.memory_space<vmem>>, %arg4: memref<1x128xf32, #tpu.memory_space<vmem>>, %arg5: memref<48x128xbf16, #tpu.memory_space<vmem>>, %arg6: memref<48x128xbf16, #tpu.memory_space<vmem>>) attributes {dimension_semantics = [#tpu.dimension_semantics<parallel>, #tpu.dimension_semantics<parallel>], iteration_bounds = array<i64: 1, 1>, scalar_prefetch = 0 : i64, scratch_operands = 0 : i64, tpu.core_type = #tpu.core_type<tc>, window_params = [{transform_indices = @transform_0, window_bounds = array<i64: 48, 128>}, {transform_indices = @transform_1, window_bounds = array<i64: 128, 128>}, {transform_indices = @transform_2, window_bounds = array<i64: 1, 128>}, {transform_indices = @transform_3, window_bounds = array<i64: 48, 128>}, {transform_indices = @transform_4, window_bounds = array<i64: 48, 128>}]} {
    %c0 = arith.constant 0 : index
    %c0_0 = arith.constant 0 : index
    %0 = vector.load %arg2[%c0, %c0_0] : memref<48x128xbf16, #tpu.memory_space<vmem>>, vector<48x128xbf16>
    %c0_1 = arith.constant 0 : index
    %c0_2 = arith.constant 0 : index
    %1 = vector.load %arg3[%c0_1, %c0_2] : memref<128x128xbf16, #tpu.memory_space<vmem>>, vector<128x128xbf16>
    %cst = arith.constant dense<0.000000e+00> : vector<48x128xf32>
    %2 = tpu.matmul %0, %1, %cst {dimension_numbers = #tpu.dot_dimension_numbers<[1], [0], [0], [1], [0, 0, 1, 1], [], []>} : vector<48x128xbf16>, vector<128x128xbf16>, vector<48x128xf32> -> vector<48x128xf32>
    %c0_3 = arith.constant 0 : index
    %c0_4 = arith.constant 0 : index
    %3 = vector.load %arg4[%c0_3, %c0_4] : memref<1x128xf32, #tpu.memory_space<vmem>>, vector<1x128xf32>
    %4 = vector.broadcast %3 : vector<1x128xf32> to vector<48x128xf32>
    %5 = arith.addf %2, %4 : vector<48x128xf32>
    %c0_5 = arith.constant 0 : index
    %c0_6 = arith.constant 0 : index
    %6 = vector.load %arg5[%c0_5, %c0_6] : memref<48x128xbf16, #tpu.memory_space<vmem>>, vector<48x128xbf16>
    %7 = arith.extf %6 : vector<48x128xbf16> to vector<48x128xf32>
    %8 = arith.addf %5, %7 : vector<48x128xf32>
    %9 = arith.truncf %8 : vector<48x128xf32> to vector<48x128xbf16>
    %c0_7 = arith.constant 0 : index
    %c0_8 = arith.constant 0 : index
    %10 = vector.load %arg6[%c0_7, %c0_8] : memref<48x128xbf16, #tpu.memory_space<vmem>>, vector<48x128xbf16>
    tpu.vector_store %arg6[%c0_7, %c0_8], %9 {strides = array<i32>} : memref<48x128xbf16, #tpu.memory_space<vmem>>, vector<48x128xbf16>,
    return
  }
  func.func @transform_0(%arg0: i32, %arg1: i32) -> (i32, i32) {
    %c0_i32 = arith.constant 0 : i32
    %c0_i32_0 = arith.constant 0 : i32
    return %arg0, %c0_i32 : i32, i32
  }
  func.func @transform_1(%arg0: i32, %arg1: i32) -> (i32, i32) {
    %c0_i32 = arith.constant 0 : i32
    %c0_i32_0 = arith.constant 0 : i32
    return %c0_i32, %arg1 : i32, i32
  }
  func.func @transform_2(%arg0: i32, %arg1: i32) -> (i32, i32) {
    %c0_i32 = arith.constant 0 : i32
    %c0_i32_0 = arith.constant 0 : i32
    return %c0_i32, %arg1 : i32, i32
  }
  func.func @transform_3(%arg0: i32, %arg1: i32) -> (i32, i32) {
    %c0_i32 = arith.constant 0 : i32
    return %arg0, %arg1 : i32, i32
  }
  func.func @transform_4(%arg0: i32, %arg1: i32) -> (i32, i32) {
    %c0_i32 = arith.constant 0 : i32
    return %arg0, %arg1 : i32, i32
  }
}

module attributes {stable_mosaic.version = 11 : i64} {
  func.func @_mm_kernel(%arg0: i32, %arg1: i32, %arg2: memref<48x128xbf16, #tpu.memory_space<vmem>>, %arg3: memref<128x512xbf16, #tpu.memory_space<vmem>>, %arg4: memref<1x128xf32, #tpu.memory_space<vmem>>, %arg5: memref<1x128xf32, #tpu.memory_space<vmem>>, %arg6: memref<1x512xf32, #tpu.memory_space<vmem>>, %arg7: memref<48x512xbf16, #tpu.memory_space<vmem>>) attributes {dimension_semantics = [#tpu.dimension_semantics<parallel>, #tpu.dimension_semantics<parallel>], iteration_bounds = array<i64: 1, 1>, scalar_prefetch = 0 : i64, scratch_operands = 0 : i64, tpu.core_type = #tpu.core_type<tc>, window_params = [{transform_indices = @transform_0, window_bounds = array<i64: 48, 128>}, {transform_indices = @transform_1, window_bounds = array<i64: 128, 512>}, {pipeline_mode = #tpu.pipeline_mode<synchronous>, transform_indices = @transform_2, window_bounds = array<i64: 1, 128>}, {pipeline_mode = #tpu.pipeline_mode<synchronous>, transform_indices = @transform_3, window_bounds = array<i64: 1, 128>}, {transform_indices = @transform_4, window_bounds = array<i64: 1, 512>}, {transform_indices = @transform_5, window_bounds = array<i64: 48, 512>}]} {
    %c0 = arith.constant 0 : index
    %c0_0 = arith.constant 0 : index
    %0 = vector.load %arg2[%c0, %c0_0] : memref<48x128xbf16, #tpu.memory_space<vmem>>, vector<48x128xbf16>
    %1 = arith.extf %0 : vector<48x128xbf16> to vector<48x128xf32>
    %cst = arith.constant dense<0.000000e+00> : vector<48xf32>
    %2 = vector.multi_reduction <add>, %1, %cst [1] : vector<48x128xf32> to vector<48xf32>
    %3 = vector.shape_cast %2 : vector<48xf32> to vector<48x1xf32>
    %cst_1 = arith.constant 1.280000e+02 : f32
    %4 = vector.broadcast %cst_1 : f32 to vector<48x1xf32>
    %5 = arith.divf %3, %4 : vector<48x1xf32>
    %6 = vector.broadcast %5 : vector<48x1xf32> to vector<48x128xf32>
    %7 = arith.subf %1, %6 : vector<48x128xf32>
    %8 = arith.mulf %7, %7 : vector<48x128xf32>
    %cst_2 = arith.constant dense<0.000000e+00> : vector<48xf32>
    %9 = vector.multi_reduction <add>, %8, %cst_2 [1] : vector<48x128xf32> to vector<48xf32>
    %10 = vector.shape_cast %9 : vector<48xf32> to vector<48x1xf32>
    %cst_3 = arith.constant 1.280000e+02 : f32
    %11 = vector.broadcast %cst_3 : f32 to vector<48x1xf32>
    %12 = arith.divf %10, %11 : vector<48x1xf32>
    %cst_4 = arith.constant 9.99999974E-6 : f32
    %13 = vector.broadcast %cst_4 : f32 to vector<48x1xf32>
    %14 = arith.addf %12, %13 : vector<48x1xf32>
    %15 = math.rsqrt %14 : vector<48x1xf32>
    %16 = vector.broadcast %15 : vector<48x1xf32> to vector<48x128xf32>
    %17 = arith.mulf %7, %16 : vector<48x128xf32>
    %c0_5 = arith.constant 0 : index
    %c0_6 = arith.constant 0 : index
    %18 = vector.load %arg4[%c0_5, %c0_6] : memref<1x128xf32, #tpu.memory_space<vmem>>, vector<1x128xf32>
    %19 = vector.broadcast %18 : vector<1x128xf32> to vector<48x128xf32>
    %20 = arith.mulf %17, %19 : vector<48x128xf32>
    %c0_7 = arith.constant 0 : index
    %c0_8 = arith.constant 0 : index
    %21 = vector.load %arg5[%c0_7, %c0_8] : memref<1x128xf32, #tpu.memory_space<vmem>>, vector<1x128xf32>
    %22 = vector.broadcast %21 : vector<1x128xf32> to vector<48x128xf32>
    %23 = arith.addf %20, %22 : vector<48x128xf32>
    %24 = arith.truncf %23 : vector<48x128xf32> to vector<48x128xbf16>
    %c0_9 = arith.constant 0 : index
    %c0_10 = arith.constant 0 : index
    %25 = vector.load %arg3[%c0_9, %c0_10] : memref<128x512xbf16, #tpu.memory_space<vmem>>, vector<128x512xbf16>
    %cst_11 = arith.constant dense<0.000000e+00> : vector<48x512xf32>
    %26 = tpu.matmul %24, %25, %cst_11 {dimension_numbers = #tpu.dot_dimension_numbers<[1], [0], [0], [1], [0, 0, 1, 1], [], []>} : vector<48x128xbf16>, vector<128x512xbf16>, vector<48x512xf32> -> vector<48x512xf32>
    %c0_12 = arith.constant 0 : index
    %c0_13 = arith.constant 0 : index
    %27 = vector.load %arg6[%c0_12, %c0_13] : memref<1x512xf32, #tpu.memory_space<vmem>>, vector<1x512xf32>
    %28 = vector.broadcast %27 : vector<1x512xf32> to vector<48x512xf32>
    %29 = arith.addf %26, %28 : vector<48x512xf32>
    %cst_14 = arith.constant -1.702000e+00 : f32
    %30 = vector.broadcast %cst_14 : f32 to vector<48x512xf32>
    %31 = arith.mulf %30, %29 : vector<48x512xf32>
    %32 = math.exp %31 : vector<48x512xf32>
    %cst_15 = arith.constant 1.000000e+00 : f32
    %33 = vector.broadcast %cst_15 : f32 to vector<48x512xf32>
    %34 = arith.addf %33, %32 : vector<48x512xf32>
    %cst_16 = arith.constant 1.000000e+00 : f32
    %35 = vector.broadcast %cst_16 : f32 to vector<48x512xf32>
    %36 = arith.divf %35, %34 : vector<48x512xf32>
    %37 = arith.mulf %29, %36 : vector<48x512xf32>
    %38 = arith.truncf %37 : vector<48x512xf32> to vector<48x512xbf16>
    %c0_17 = arith.constant 0 : index
    %c0_18 = arith.constant 0 : index
    %39 = vector.load %arg7[%c0_17, %c0_18] : memref<48x512xbf16, #tpu.memory_space<vmem>>, vector<48x512xbf16>
    tpu.vector_store %arg7[%c0_17, %c0_18], %38 {strides = array<i32>} : memref<48x512xbf16, #tpu.memory_space<vmem>>, vector<48x512xbf16>,
    return
  }
  func.func @transform_0(%arg0: i32, %arg1: i32) -> (i32, i32) {
    %c0_i32 = arith.constant 0 : i32
    %c0_i32_0 = arith.constant 0 : i32
    return %arg0, %c0_i32 : i32, i32
  }
  func.func @transform_1(%arg0: i32, %arg1: i32) -> (i32, i32) {
    %c0_i32 = arith.constant 0 : i32
    %c0_i32_0 = arith.constant 0 : i32
    return %c0_i32, %arg1 : i32, i32
  }
  func.func @transform_2(%arg0: i32, %arg1: i32) -> (i32, i32) {
    %c0_i32 = arith.constant 0 : i32
    %c0_i32_0 = arith.constant 0 : i32
    %c0_i32_1 = arith.constant 0 : i32
    return %c0_i32, %c0_i32_0 : i32, i32
  }
  func.func @transform_3(%arg0: i32, %arg1: i32) -> (i32, i32) {
    %c0_i32 = arith.constant 0 : i32
    %c0_i32_0 = arith.constant 0 : i32
    %c0_i32_1 = arith.constant 0 : i32
    return %c0_i32, %c0_i32_0 : i32, i32
  }
  func.func @transform_4(%arg0: i32, %arg1: i32) -> (i32, i32) {
    %c0_i32 = arith.constant 0 : i32
    %c0_i32_0 = arith.constant 0 : i32
    return %c0_i32, %arg1 : i32, i32
  }
  func.func @transform_5(%arg0: i32, %arg1: i32) -> (i32, i32) {
    %c0_i32 = arith.constant 0 : i32
    return %arg0, %arg1 : i32, i32
  }
}

module attributes {stable_mosaic.version = 11 : i64} {
  func.func @_mm_kernel(%arg0: i32, %arg1: i32, %arg2: memref<48x512xbf16, #tpu.memory_space<vmem>>, %arg3: memref<512x128xbf16, #tpu.memory_space<vmem>>, %arg4: memref<1x128xf32, #tpu.memory_space<vmem>>, %arg5: memref<48x128xbf16, #tpu.memory_space<vmem>>, %arg6: memref<48x128xbf16, #tpu.memory_space<vmem>>) attributes {dimension_semantics = [#tpu.dimension_semantics<parallel>, #tpu.dimension_semantics<parallel>], iteration_bounds = array<i64: 1, 1>, scalar_prefetch = 0 : i64, scratch_operands = 0 : i64, tpu.core_type = #tpu.core_type<tc>, window_params = [{transform_indices = @transform_0, window_bounds = array<i64: 48, 512>}, {transform_indices = @transform_1, window_bounds = array<i64: 512, 128>}, {transform_indices = @transform_2, window_bounds = array<i64: 1, 128>}, {transform_indices = @transform_3, window_bounds = array<i64: 48, 128>}, {transform_indices = @transform_4, window_bounds = array<i64: 48, 128>}]} {
    %c0 = arith.constant 0 : index
    %c0_0 = arith.constant 0 : index
    %0 = vector.load %arg2[%c0, %c0_0] : memref<48x512xbf16, #tpu.memory_space<vmem>>, vector<48x512xbf16>
    %c0_1 = arith.constant 0 : index
    %c0_2 = arith.constant 0 : index
    %1 = vector.load %arg3[%c0_1, %c0_2] : memref<512x128xbf16, #tpu.memory_space<vmem>>, vector<512x128xbf16>
    %cst = arith.constant dense<0.000000e+00> : vector<48x128xf32>
    %2 = tpu.matmul %0, %1, %cst {dimension_numbers = #tpu.dot_dimension_numbers<[1], [0], [0], [1], [0, 0, 1, 1], [], []>} : vector<48x512xbf16>, vector<512x128xbf16>, vector<48x128xf32> -> vector<48x128xf32>
    %c0_3 = arith.constant 0 : index
    %c0_4 = arith.constant 0 : index
    %3 = vector.load %arg4[%c0_3, %c0_4] : memref<1x128xf32, #tpu.memory_space<vmem>>, vector<1x128xf32>
    %4 = vector.broadcast %3 : vector<1x128xf32> to vector<48x128xf32>
    %5 = arith.addf %2, %4 : vector<48x128xf32>
    %c0_5 = arith.constant 0 : index
    %c0_6 = arith.constant 0 : index
    %6 = vector.load %arg5[%c0_5, %c0_6] : memref<48x128xbf16, #tpu.memory_space<vmem>>, vector<48x128xbf16>
    %7 = arith.extf %6 : vector<48x128xbf16> to vector<48x128xf32>
    %8 = arith.addf %5, %7 : vector<48x128xf32>
    %9 = arith.truncf %8 : vector<48x128xf32> to vector<48x128xbf16>
    %c0_7 = arith.constant 0 : index
    %c0_8 = arith.constant 0 : index
    %10 = vector.load %arg6[%c0_7, %c0_8] : memref<48x128xbf16, #tpu.memory_space<vmem>>, vector<48x128xbf16>
    tpu.vector_store %arg6[%c0_7, %c0_8], %9 {strides = array<i32>} : memref<48x128xbf16, #tpu.memory_space<vmem>>, vector<48x128xbf16>,
    return
  }
  func.func @transform_0(%arg0: i32, %arg1: i32) -> (i32, i32) {
    %c0_i32 = arith.constant 0 : i32
    %c0_i32_0 = arith.constant 0 : i32
    return %arg0, %c0_i32 : i32, i32
  }
  func.func @transform_1(%arg0: i32, %arg1: i32) -> (i32, i32) {
    %c0_i32 = arith.constant 0 : i32
    %c0_i32_0 = arith.constant 0 : i32
    return %c0_i32, %arg1 : i32, i32
  }
  func.func @transform_2(%arg0: i32, %arg1: i32) -> (i32, i32) {
    %c0_i32 = arith.constant 0 : i32
    %c0_i32_0 = arith.constant 0 : i32
    return %c0_i32, %arg1 : i32, i32
  }
  func.func @transform_3(%arg0: i32, %arg1: i32) -> (i32, i32) {
    %c0_i32 = arith.constant 0 : i32
    return %arg0, %arg1 : i32, i32
  }
  func.func @transform_4(%arg0: i32, %arg1: i32) -> (i32, i32) {
    %c0_i32 = arith.constant 0 : i32
    return %arg0, %arg1 : i32, i32
  }
}

module attributes {stable_mosaic.version = 11 : i64} {
  func.func @_mm_kernel(%arg0: i32, %arg1: i32, %arg2: memref<48x128xbf16, #tpu.memory_space<vmem>>, %arg3: memref<128x128xbf16, #tpu.memory_space<vmem>>, %arg4: memref<1x128xf32, #tpu.memory_space<vmem>>, %arg5: memref<48x128xbf16, #tpu.memory_space<vmem>>) attributes {dimension_semantics = [#tpu.dimension_semantics<parallel>, #tpu.dimension_semantics<parallel>], iteration_bounds = array<i64: 1, 1>, scalar_prefetch = 0 : i64, scratch_operands = 0 : i64, tpu.core_type = #tpu.core_type<tc>, window_params = [{transform_indices = @transform_0, window_bounds = array<i64: 48, 128>}, {transform_indices = @transform_1, window_bounds = array<i64: 128, 128>}, {transform_indices = @transform_2, window_bounds = array<i64: 1, 128>}, {transform_indices = @transform_3, window_bounds = array<i64: 48, 128>}]} {
    %c0 = arith.constant 0 : index
    %c0_0 = arith.constant 0 : index
    %0 = vector.load %arg2[%c0, %c0_0] : memref<48x128xbf16, #tpu.memory_space<vmem>>, vector<48x128xbf16>
    %c0_1 = arith.constant 0 : index
    %c0_2 = arith.constant 0 : index
    %1 = vector.load %arg3[%c0_1, %c0_2] : memref<128x128xbf16, #tpu.memory_space<vmem>>, vector<128x128xbf16>
    %cst = arith.constant dense<0.000000e+00> : vector<48x128xf32>
    %2 = tpu.matmul %0, %1, %cst {dimension_numbers = #tpu.dot_dimension_numbers<[1], [0], [0], [1], [0, 0, 1, 1], [], []>} : vector<48x128xbf16>, vector<128x128xbf16>, vector<48x128xf32> -> vector<48x128xf32>
    %c0_3 = arith.constant 0 : index
    %c0_4 = arith.constant 0 : index
    %3 = vector.load %arg4[%c0_3, %c0_4] : memref<1x128xf32, #tpu.memory_space<vmem>>, vector<1x128xf32>
    %4 = vector.broadcast %3 : vector<1x128xf32> to vector<48x128xf32>
    %5 = arith.addf %2, %4 : vector<48x128xf32>
    %6 = arith.truncf %5 : vector<48x128xf32> to vector<48x128xbf16>
    %c0_5 = arith.constant 0 : index
    %c0_6 = arith.constant 0 : index
    %7 = vector.load %arg5[%c0_5, %c0_6] : memref<48x128xbf16, #tpu.memory_space<vmem>>, vector<48x128xbf16>
    tpu.vector_store %arg5[%c0_5, %c0_6], %6 {strides = array<i32>} : memref<48x128xbf16, #tpu.memory_space<vmem>>, vector<48x128xbf16>,
    return
  }
  func.func @transform_0(%arg0: i32, %arg1: i32) -> (i32, i32) {
    %c0_i32 = arith.constant 0 : i32
    %c0_i32_0 = arith.constant 0 : i32
    return %arg0, %c0_i32 : i32, i32
  }
  func.func @transform_1(%arg0: i32, %arg1: i32) -> (i32, i32) {
    %c0_i32 = arith.constant 0 : i32
    %c0_i32_0 = arith.constant 0 : i32
    return %c0_i32, %arg1 : i32, i32
  }
  func.func @transform_2(%arg0: i32, %arg1: i32) -> (i32, i32) {
    %c0_i32 = arith.constant 0 : i32
    %c0_i32_0 = arith.constant 0 : i32
    return %c0_i32, %arg1 : i32, i32
  }
  func.func @transform_3(%arg0: i32, %arg1: i32) -> (i32, i32) {
    %c0_i32 = arith.constant 0 : i32
    return %arg0, %arg1 : i32, i32
  }
}

module attributes {stable_mosaic.version = 11 : i64} {
  func.func @_mm_kernel(%arg0: i32, %arg1: i32, %arg2: memref<48x128xbf16, #tpu.memory_space<vmem>>, %arg3: memref<128x128xbf16, #tpu.memory_space<vmem>>, %arg4: memref<1x128xf32, #tpu.memory_space<vmem>>, %arg5: memref<1x128xf32, #tpu.memory_space<vmem>>, %arg6: memref<48x128xf32, #tpu.memory_space<vmem>>) attributes {dimension_semantics = [#tpu.dimension_semantics<parallel>, #tpu.dimension_semantics<parallel>], iteration_bounds = array<i64: 1, 1>, scalar_prefetch = 0 : i64, scratch_operands = 0 : i64, tpu.core_type = #tpu.core_type<tc>, window_params = [{transform_indices = @transform_0, window_bounds = array<i64: 48, 128>}, {transform_indices = @transform_1, window_bounds = array<i64: 128, 128>}, {pipeline_mode = #tpu.pipeline_mode<synchronous>, transform_indices = @transform_2, window_bounds = array<i64: 1, 128>}, {pipeline_mode = #tpu.pipeline_mode<synchronous>, transform_indices = @transform_3, window_bounds = array<i64: 1, 128>}, {transform_indices = @transform_4, window_bounds = array<i64: 48, 128>}]} {
    %c0 = arith.constant 0 : index
    %c0_0 = arith.constant 0 : index
    %0 = vector.load %arg2[%c0, %c0_0] : memref<48x128xbf16, #tpu.memory_space<vmem>>, vector<48x128xbf16>
    %1 = arith.extf %0 : vector<48x128xbf16> to vector<48x128xf32>
    %cst = arith.constant dense<0.000000e+00> : vector<48xf32>
    %2 = vector.multi_reduction <add>, %1, %cst [1] : vector<48x128xf32> to vector<48xf32>
    %3 = vector.shape_cast %2 : vector<48xf32> to vector<48x1xf32>
    %cst_1 = arith.constant 1.280000e+02 : f32
    %4 = vector.broadcast %cst_1 : f32 to vector<48x1xf32>
    %5 = arith.divf %3, %4 : vector<48x1xf32>
    %6 = vector.broadcast %5 : vector<48x1xf32> to vector<48x128xf32>
    %7 = arith.subf %1, %6 : vector<48x128xf32>
    %8 = arith.mulf %7, %7 : vector<48x128xf32>
    %cst_2 = arith.constant dense<0.000000e+00> : vector<48xf32>
    %9 = vector.multi_reduction <add>, %8, %cst_2 [1] : vector<48x128xf32> to vector<48xf32>
    %10 = vector.shape_cast %9 : vector<48xf32> to vector<48x1xf32>
    %cst_3 = arith.constant 1.280000e+02 : f32
    %11 = vector.broadcast %cst_3 : f32 to vector<48x1xf32>
    %12 = arith.divf %10, %11 : vector<48x1xf32>
    %cst_4 = arith.constant 9.99999974E-6 : f32
    %13 = vector.broadcast %cst_4 : f32 to vector<48x1xf32>
    %14 = arith.addf %12, %13 : vector<48x1xf32>
    %15 = math.rsqrt %14 : vector<48x1xf32>
    %16 = vector.broadcast %15 : vector<48x1xf32> to vector<48x128xf32>
    %17 = arith.mulf %7, %16 : vector<48x128xf32>
    %c0_5 = arith.constant 0 : index
    %c0_6 = arith.constant 0 : index
    %18 = vector.load %arg4[%c0_5, %c0_6] : memref<1x128xf32, #tpu.memory_space<vmem>>, vector<1x128xf32>
    %19 = vector.broadcast %18 : vector<1x128xf32> to vector<48x128xf32>
    %20 = arith.mulf %17, %19 : vector<48x128xf32>
    %c0_7 = arith.constant 0 : index
    %c0_8 = arith.constant 0 : index
    %21 = vector.load %arg5[%c0_7, %c0_8] : memref<1x128xf32, #tpu.memory_space<vmem>>, vector<1x128xf32>
    %22 = vector.broadcast %21 : vector<1x128xf32> to vector<48x128xf32>
    %23 = arith.addf %20, %22 : vector<48x128xf32>
    %24 = arith.truncf %23 : vector<48x128xf32> to vector<48x128xbf16>
    %c0_9 = arith.constant 0 : index
    %c0_10 = arith.constant 0 : index
    %25 = vector.load %arg3[%c0_9, %c0_10] : memref<128x128xbf16, #tpu.memory_space<vmem>>, vector<128x128xbf16>
    %cst_11 = arith.constant dense<0.000000e+00> : vector<48x128xf32>
    %26 = tpu.matmul %24, %25, %cst_11 {dimension_numbers = #tpu.dot_dimension_numbers<[1], [0], [0], [1], [0, 0, 1, 1], [], []>} : vector<48x128xbf16>, vector<128x128xbf16>, vector<48x128xf32> -> vector<48x128xf32>
    %c0_12 = arith.constant 0 : index
    %c0_13 = arith.constant 0 : index
    %27 = vector.load %arg6[%c0_12, %c0_13] : memref<48x128xf32, #tpu.memory_space<vmem>>, vector<48x128xf32>
    tpu.vector_store %arg6[%c0_12, %c0_13], %26 {strides = array<i32>} : memref<48x128xf32, #tpu.memory_space<vmem>>, vector<48x128xf32>,
    return
  }
  func.func @transform_0(%arg0: i32, %arg1: i32) -> (i32, i32) {
    %c0_i32 = arith.constant 0 : i32
    %c0_i32_0 = arith.constant 0 : i32
    return %arg0, %c0_i32 : i32, i32
  }
  func.func @transform_1(%arg0: i32, %arg1: i32) -> (i32, i32) {
    %c0_i32 = arith.constant 0 : i32
    %c0_i32_0 = arith.constant 0 : i32
    return %c0_i32, %arg1 : i32, i32
  }
  func.func @transform_2(%arg0: i32, %arg1: i32) -> (i32, i32) {
    %c0_i32 = arith.constant 0 : i32
    %c0_i32_0 = arith.constant 0 : i32
    %c0_i32_1 = arith.constant 0 : i32
    return %c0_i32, %c0_i32_0 : i32, i32
  }
  func.func @transform_3(%arg0: i32, %arg1: i32) -> (i32, i32) {
    %c0_i32 = arith.constant 0 : i32
    %c0_i32_0 = arith.constant 0 : i32
    %c0_i32_1 = arith.constant 0 : i32
    return %c0_i32, %c0_i32_0 : i32, i32
  }
  func.func @transform_4(%arg0: i32, %arg1: i32) -> (i32, i32) {
    %c0_i32 = arith.constant 0 : i32
    return %arg0, %arg1 : i32, i32
  }
}

module attributes {stable_mosaic.version = 11 : i64} {
  func.func @_mm_kernel(%arg0: i32, %arg1: i32, %arg2: memref<16x128xbf16, #tpu.memory_space<vmem>>, %arg3: memref<128x128xbf16, #tpu.memory_space<vmem>>, %arg4: memref<1x128xf32, #tpu.memory_space<vmem>>, %arg5: memref<1x128xf32, #tpu.memory_space<vmem>>, %arg6: memref<16x128xf32, #tpu.memory_space<vmem>>) attributes {dimension_semantics = [#tpu.dimension_semantics<parallel>, #tpu.dimension_semantics<parallel>], iteration_bounds = array<i64: 1, 1>, scalar_prefetch = 0 : i64, scratch_operands = 0 : i64, tpu.core_type = #tpu.core_type<tc>, window_params = [{transform_indices = @transform_0, window_bounds = array<i64: 16, 128>}, {transform_indices = @transform_1, window_bounds = array<i64: 128, 128>}, {pipeline_mode = #tpu.pipeline_mode<synchronous>, transform_indices = @transform_2, window_bounds = array<i64: 1, 128>}, {pipeline_mode = #tpu.pipeline_mode<synchronous>, transform_indices = @transform_3, window_bounds = array<i64: 1, 128>}, {transform_indices = @transform_4, window_bounds = array<i64: 16, 128>}]} {
    %c0 = arith.constant 0 : index
    %c0_0 = arith.constant 0 : index
    %0 = vector.load %arg2[%c0, %c0_0] : memref<16x128xbf16, #tpu.memory_space<vmem>>, vector<16x128xbf16>
    %1 = arith.extf %0 : vector<16x128xbf16> to vector<16x128xf32>
    %cst = arith.constant dense<0.000000e+00> : vector<16xf32>
    %2 = vector.multi_reduction <add>, %1, %cst [1] : vector<16x128xf32> to vector<16xf32>
    %3 = vector.shape_cast %2 : vector<16xf32> to vector<16x1xf32>
    %cst_1 = arith.constant 1.280000e+02 : f32
    %4 = vector.broadcast %cst_1 : f32 to vector<16x1xf32>
    %5 = arith.divf %3, %4 : vector<16x1xf32>
    %6 = vector.broadcast %5 : vector<16x1xf32> to vector<16x128xf32>
    %7 = arith.subf %1, %6 : vector<16x128xf32>
    %8 = arith.mulf %7, %7 : vector<16x128xf32>
    %cst_2 = arith.constant dense<0.000000e+00> : vector<16xf32>
    %9 = vector.multi_reduction <add>, %8, %cst_2 [1] : vector<16x128xf32> to vector<16xf32>
    %10 = vector.shape_cast %9 : vector<16xf32> to vector<16x1xf32>
    %cst_3 = arith.constant 1.280000e+02 : f32
    %11 = vector.broadcast %cst_3 : f32 to vector<16x1xf32>
    %12 = arith.divf %10, %11 : vector<16x1xf32>
    %cst_4 = arith.constant 9.99999974E-6 : f32
    %13 = vector.broadcast %cst_4 : f32 to vector<16x1xf32>
    %14 = arith.addf %12, %13 : vector<16x1xf32>
    %15 = math.rsqrt %14 : vector<16x1xf32>
    %16 = vector.broadcast %15 : vector<16x1xf32> to vector<16x128xf32>
    %17 = arith.mulf %7, %16 : vector<16x128xf32>
    %c0_5 = arith.constant 0 : index
    %c0_6 = arith.constant 0 : index
    %18 = vector.load %arg4[%c0_5, %c0_6] : memref<1x128xf32, #tpu.memory_space<vmem>>, vector<1x128xf32>
    %19 = vector.broadcast %18 : vector<1x128xf32> to vector<16x128xf32>
    %20 = arith.mulf %17, %19 : vector<16x128xf32>
    %c0_7 = arith.constant 0 : index
    %c0_8 = arith.constant 0 : index
    %21 = vector.load %arg5[%c0_7, %c0_8] : memref<1x128xf32, #tpu.memory_space<vmem>>, vector<1x128xf32>
    %22 = vector.broadcast %21 : vector<1x128xf32> to vector<16x128xf32>
    %23 = arith.addf %20, %22 : vector<16x128xf32>
    %24 = arith.truncf %23 : vector<16x128xf32> to vector<16x128xbf16>
    %c0_9 = arith.constant 0 : index
    %c0_10 = arith.constant 0 : index
    %25 = vector.load %arg3[%c0_9, %c0_10] : memref<128x128xbf16, #tpu.memory_space<vmem>>, vector<128x128xbf16>
    %cst_11 = arith.constant dense<0.000000e+00> : vector<16x128xf32>
    %26 = tpu.matmul %24, %25, %cst_11 {dimension_numbers = #tpu.dot_dimension_numbers<[1], [0], [0], [1], [0, 0, 1, 1], [], []>} : vector<16x128xbf16>, vector<128x128xbf16>, vector<16x128xf32> -> vector<16x128xf32>
    %c0_12 = arith.constant 0 : index
    %c0_13 = arith.constant 0 : index
    %27 = vector.load %arg6[%c0_12, %c0_13] : memref<16x128xf32, #tpu.memory_space<vmem>>, vector<16x128xf32>
    tpu.vector_store %arg6[%c0_12, %c0_13], %26 {strides = array<i32>} : memref<16x128xf32, #tpu.memory_space<vmem>>, vector<16x128xf32>,
    return
  }
  func.func @transform_0(%arg0: i32, %arg1: i32) -> (i32, i32) {
    %c0_i32 = arith.constant 0 : i32
    %c0_i32_0 = arith.constant 0 : i32
    return %arg0, %c0_i32 : i32, i32
  }
  func.func @transform_1(%arg0: i32, %arg1: i32) -> (i32, i32) {
    %c0_i32 = arith.constant 0 : i32
    %c0_i32_0 = arith.constant 0 : i32
    return %c0_i32, %arg1 : i32, i32
  }
  func.func @transform_2(%arg0: i32, %arg1: i32) -> (i32, i32) {
    %c0_i32 = arith.constant 0 : i32
    %c0_i32_0 = arith.constant 0 : i32
    %c0_i32_1 = arith.constant 0 : i32
    return %c0_i32, %c0_i32_0 : i32, i32
  }
  func.func @transform_3(%arg0: i32, %arg1: i32) -> (i32, i32) {
    %c0_i32 = arith.constant 0 : i32
    %c0_i32_0 = arith.constant 0 : i32
    %c0_i32_1 = arith.constant 0 : i32
    return %c0_i32, %c0_i32_0 : i32, i32
  }
  func.func @transform_4(%arg0: i32, %arg1: i32) -> (i32, i32) {
    %c0_i32 = arith.constant 0 : i32
    return %arg0, %arg1 : i32, i32
  }
}

</mosaic_0001>

<llo_original>
// kernel: vision_transformer_forward.18
$region0: #{vision_transformer_forward.18}
  #allocation0 [shape = 'u32[]', space=smem, size = 0x4, offset = 0x4, fixed_abs, tag = 'smem constant byte address 0x4 - core index']
  #allocation1 [shape = 'u32[144,128]{1,0:T(1,128)}', space=vmem, size = 0x12000, scoped, tag = 'internal scratch']
  %s0 = inlined_call_operand.vmem [shape: bf16[48,128], index: 0, kind: input, shape index: {}]
  %s1 = inlined_call_operand.vmem [shape: f32[1,128], index: 1, kind: input, shape index: {}]
  %s2 = inlined_call_operand.vmem [shape: f32[1,128], index: 2, kind: input, shape index: {}]
  %s3 = inlined_call_operand.vmem [shape: bf16[48,128], index: 3, kind: output, shape index: {}]
  %s4 = sld [smem:[#allocation0]]
  $region22: #{vision_transformer_forward.18} parent=0
    _
  %s6 = ssub.s32 1, %s4
  %s7 = scalar_select 0, %s6, %s4
  // Predicated region
  $region2: #{vision_transformer_forward.18} parent=0 // pred_check
    _
  $region3: #{vision_transformer_forward.18} parent=0 // pred_check_branch
    %9 = sbr.rel (0) target = $region5
  $region4: #{vision_transformer_forward.18} parent=0 // pred_region
    _
  $region5: #{vision_transformer_forward.18} parent=0 // pred_fallthru
    _
  // Predicated region
  $region6: #{vision_transformer_forward.18} parent=0 // pred_check
    _
  $region7: #{vision_transformer_forward.18} parent=0 // pred_check_branch
    %11 = sbr.rel (0) target = $region9
  $region8: #{vision_transformer_forward.18} parent=0 // pred_region
    _
  $region9: #{vision_transformer_forward.18} parent=0 // pred_fallthru
    _
  // Predicated region
  $region10: #{vision_transformer_forward.18} parent=0 // pred_check
    _
  $region11: #{vision_transformer_forward.18} parent=0 // pred_check_branch
    %13 = sbr.rel (0) target = $region13
  $region12: #{vision_transformer_forward.18} parent=0 // pred_region
    _
  $region13: #{vision_transformer_forward.18} parent=0 // pred_fallthru
    _
  %v14 = vld [vmem:[%s0] sm:$0xf]
  %v15 = vld [vmem:[%s0 + $0x4] sm:$0xf]
  %v16 = vld [vmem:[%s0 + $0x8] sm:$0xf]
  %v17 = vld [vmem:[%s0 + $0xc] sm:$0xf]
  %v18 = vld [vmem:[%s0 + $0x10] sm:$0xf]
  %v19 = vld [vmem:[%s0 + $0x14] sm:$0xf]
  %v20 = vunpack.c.l.bf16 %v14
  %v21 = vunpack.c.l.bf16 %v15
  %v22 = vunpack.c.l.bf16 %v16
  %v23 = vunpack.c.l.bf16 %v17
  %v24 = vunpack.c.l.bf16 %v18
  %v25 = vunpack.c.l.bf16 %v19
  %26 = vadd.xlane.f32.xlu0 %v20
  %v27 = vpop.xlane.xlu0 %26
  %28 = vadd.xlane.f32.xlu0 %v21
  %v29 = vpop.xlane.xlu0 %28
  %30 = vadd.xlane.f32.xlu0 %v22
  %v31 = vpop.xlane.xlu0 %30
  %32 = vadd.xlane.f32.xlu0 %v23
  %v33 = vpop.xlane.xlu0 %32
  %34 = vadd.xlane.f32.xlu0 %v24
  %v35 = vpop.xlane.xlu0 %34
  %36 = vadd.xlane.f32.xlu0 %v25
  %v37 = vpop.xlane.xlu0 %36
  %v38 = vrcp.pop 128.0
  %v39 = vmul.f32 %v27, %v38
  %v40 = vmul.f32 %v29, %v38
  %v41 = vmul.f32 %v31, %v38
  %v42 = vmul.f32 %v33, %v38
  %v43 = vmul.f32 %v35, %v38
  %v44 = vmul.f32 %v37, %v38
  %v45 = vsub.f32 %v20, %v39
  %v46 = vsub.f32 %v21, %v40
  %v47 = vsub.f32 %v22, %v41
  %v48 = vsub.f32 %v23, %v42
  %v49 = vsub.f32 %v24, %v43
  %v50 = vsub.f32 %v25, %v44
  %v51 = vmul.f32 %v45, %v45
  %v52 = vmul.f32 %v46, %v46
  %v53 = vmul.f32 %v47, %v47
  %v54 = vmul.f32 %v48, %v48
  %v55 = vmul.f32 %v49, %v49
  %v56 = vmul.f32 %v50, %v50
  %57 = vadd.xlane.f32.xlu0 %v51
  %v58 = vpop.xlane.xlu0 %57
  %59 = vadd.xlane.f32.xlu0 %v52
  %v60 = vpop.xlane.xlu0 %59
  %61 = vadd.xlane.f32.xlu0 %v53
  %v62 = vpop.xlane.xlu0 %61
  %63 = vadd.xlane.f32.xlu0 %v54
  %v64 = vpop.xlane.xlu0 %63
  %65 = vadd.xlane.f32.xlu0 %v55
  %v66 = vpop.xlane.xlu0 %65
  %67 = vadd.xlane.f32.xlu0 %v56
  %v68 = vpop.xlane.xlu0 %67
  %v69 = vmul.f32 %v58, %v38
  %v70 = vmul.f32 %v60, %v38
  %v71 = vmul.f32 %v62, %v38
  %v72 = vmul.f32 %v64, %v38
  %v73 = vmul.f32 %v66, %v38
  %v74 = vmul.f32 %v68, %v38
  %v75 = vadd.f32 %v69, 1e-05
  %v76 = vadd.f32 %v70, 1e-05
  %v77 = vadd.f32 %v71, 1e-05
  %v78 = vadd.f32 %v72, 1e-05
  %v79 = vadd.f32 %v73, 1e-05
  %v80 = vadd.f32 %v74, 1e-05
  %v81 = vrsqrt.pop %v75
  %v82 = vrsqrt.pop %v76
  %v83 = vrsqrt.pop %v77
  %v84 = vrsqrt.pop %v78
  %v85 = vrsqrt.pop %v79
  %v86 = vrsqrt.pop %v80
  %v87 = vmul.f32 %v45, %v81
  %v88 = vmul.f32 %v46, %v82
  %v89 = vmul.f32 %v47, %v83
  %v90 = vmul.f32 %v48, %v84
  %v91 = vmul.f32 %v49, %v85
  %v92 = vmul.f32 %v50, %v86
  %v93 = vld [vmem:[%s1] sm:$0x1]
  %v95 = vlaneseq
  %v96 = vshrl.u32 %v95, 7
  %v97 = vsub.s32 0, %v96
  %v98 = vrot.slane %v93, %v97
  %v100 = vmul.f32 %v87, %v98
  %v101 = vmul.f32 %v88, %v98
  %v102 = vmul.f32 %v89, %v98
  %v103 = vmul.f32 %v90, %v98
  %v104 = vmul.f32 %v91, %v98
  %v105 = vmul.f32 %v92, %v98
  %v106 = vld [vmem:[%s2] sm:$0x1]
  %v108 = vlaneseq
  %v109 = vshrl.u32 %v108, 7
  %v110 = vsub.s32 0, %v109
  %v111 = vrot.slane %v106, %v110
  %v113 = vadd.f32 %v100, %v111
  %v114 = vadd.f32 %v101, %v111
  %v115 = vadd.f32 %v102, %v111
  %v116 = vadd.f32 %v103, %v111
  %v117 = vadd.f32 %v104, %v111
  %v118 = vadd.f32 %v105, %v111
  %v119 = vpack.c.bf16 %v114, %v113
  %v120 = vpack.c.bf16 %v116, %v115
  %v121 = vpack.c.bf16 %v118, %v117
  %v125 = vunpack.c.l.b16 %v119
  %v126 = vunpack.c.h.b16 %v119
  %v127 = vunpack.c.l.b16 %v120
  %v128 = vunpack.c.h.b16 %v120
  %v129 = vunpack.c.l.b16 %v121
  %v130 = vunpack.c.h.b16 %v121
  %v131 = vpack.c.b16 %v125, %v125
  %v132 = vpack.c.b16 %v126, %v126
  %v133 = vpack.c.b16 %v127, %v127
  %v134 = vpack.c.b16 %v128, %v128
  %v135 = vpack.c.b16 %v129, %v129
  %v136 = vpack.c.b16 %v130, %v130
  %143 = vst [vmem:[%s3] sm:$0xf] %v131
  %144 = vst [vmem:[%s3 + $0x4] sm:$0xf] %v132
  %145 = vst [vmem:[%s3 + $0x8] sm:$0xf] %v133
  %146 = vst [vmem:[%s3 + $0xc] sm:$0xf] %v134
  %147 = vst [vmem:[%s3 + $0x10] sm:$0xf] %v135
  %148 = vst [vmem:[%s3 + $0x14] sm:$0xf] %v136
  // Predicated region
  $region14: #{vision_transformer_forward.18} parent=0 // pred_check
    _
  $region15: #{vision_transformer_forward.18} parent=0 // pred_check_branch
    %150 = sbr.rel (0) target = $region17
  $region16: #{vision_transformer_forward.18} parent=0 // pred_region
    _
  $region17: #{vision_transformer_forward.18} parent=0 // pred_fallthru
    _
  // Predicated region
  $region18: #{vision_transformer_forward.18} parent=0 // pred_check
    _
  $region19: #{vision_transformer_forward.18} parent=0 // pred_check_branch
    %152 = sbr.rel (0) target = $region21
  $region20: #{vision_transformer_forward.18} parent=0 // pred_region
    _
  $region21: #{vision_transformer_forward.18} parent=0 // pred_fallthru
    _

// kernel: vision_transformer_forward.17
$region0: #{vision_transformer_forward.17}
  #allocation0 [shape = 'u32[]', space=smem, size = 0x4, offset = 0x4, fixed_abs, tag = 'smem constant byte address 0x4 - core index']
  #allocation1 [shape = 'u32[144,128]{1,0:T(1,128)}', space=vmem, size = 0x12000, scoped, tag = 'internal scratch']
  %s0 = inlined_call_operand.vmem [shape: bf16[32,256], index: 0, kind: input, shape index: {}]
  %s1 = inlined_call_operand.vmem [shape: bf16[256,128], index: 1, kind: input, shape index: {}]
  %s2 = inlined_call_operand.vmem [shape: bf16[32,128], index: 2, kind: output, shape index: {}]
  %s3 = sld [smem:[#allocation0]]
  $region18: #{vision_transformer_forward.17} parent=0
    _
  %s5 = ssub.s32 1, %s3
  %s6 = scalar_select 0, %s5, %s3
  // Predicated region
  $region2: #{vision_transformer_forward.17} parent=0 // pred_check
    _
  $region3: #{vision_transformer_forward.17} parent=0 // pred_check_branch
    %8 = sbr.rel (0) target = $region5
  $region4: #{vision_transformer_forward.17} parent=0 // pred_region
    _
  $region5: #{vision_transformer_forward.17} parent=0 // pred_fallthru
    _
  // Predicated region
  $region6: #{vision_transformer_forward.17} parent=0 // pred_check
    _
  $region7: #{vision_transformer_forward.17} parent=0 // pred_check_branch
    %10 = sbr.rel (0) target = $region9
  $region8: #{vision_transformer_forward.17} parent=0 // pred_region
    _
  $region9: #{vision_transformer_forward.17} parent=0 // pred_fallthru
    _
  %v12 = vld [vmem:[%s0] sm:$0xff]
  %v13 = vld [vmem:[%s0 + $0x8] sm:$0xff]
  %v14 = vld [vmem:[%s0 + $0x10] sm:$0xff]
  %v15 = vld [vmem:[%s0 + $0x18] sm:$0xff]
  %v16 = vld [vmem:[%s1] sm:$0xf]
  %v17 = vld [vmem:[%s1 + $0x4] sm:$0xf]
  %v18 = vld [vmem:[%s1 + $0x8] sm:$0xf]
  %v19 = vld [vmem:[%s1 + $0xc] sm:$0xf]
  %v20 = vld [vmem:[%s1 + $0x10] sm:$0xf]
  %v21 = vld [vmem:[%s1 + $0x14] sm:$0xf]
  %v22 = vld [vmem:[%s1 + $0x18] sm:$0xf]
  %v23 = vld [vmem:[%s1 + $0x1c] sm:$0xf]
  %v24 = vld [vmem:[%s1 + $0x20] sm:$0xf]
  %v25 = vld [vmem:[%s1 + $0x24] sm:$0xf]
  %v26 = vld [vmem:[%s1 + $0x28] sm:$0xf]
  %v27 = vld [vmem:[%s1 + $0x2c] sm:$0xf]
  %v28 = vld [vmem:[%s1 + $0x30] sm:$0xf]
  %v29 = vld [vmem:[%s1 + $0x34] sm:$0xf]
  %v30 = vld [vmem:[%s1 + $0x38] sm:$0xf]
  %v31 = vld [vmem:[%s1 + $0x3c] sm:$0xf]
  %v32 = vld [vmem:[%s1 + $0x40] sm:$0xf]
  %v33 = vld [vmem:[%s1 + $0x44] sm:$0xf]
  %v34 = vld [vmem:[%s1 + $0x48] sm:$0xf]
  %v35 = vld [vmem:[%s1 + $0x4c] sm:$0xf]
  %v36 = vld [vmem:[%s1 + $0x50] sm:$0xf]
  %v37 = vld [vmem:[%s1 + $0x54] sm:$0xf]
  %v38 = vld [vmem:[%s1 + $0x58] sm:$0xf]
  %v39 = vld [vmem:[%s1 + $0x5c] sm:$0xf]
  %v40 = vld [vmem:[%s1 + $0x60] sm:$0xf]
  %v41 = vld [vmem:[%s1 + $0x64] sm:$0xf]
  %v42 = vld [vmem:[%s1 + $0x68] sm:$0xf]
  %v43 = vld [vmem:[%s1 + $0x6c] sm:$0xf]
  %v44 = vld [vmem:[%s1 + $0x70] sm:$0xf]
  %v45 = vld [vmem:[%s1 + $0x74] sm:$0xf]
  %v46 = vld [vmem:[%s1 + $0x78] sm:$0xf]
  %v47 = vld [vmem:[%s1 + $0x7c] sm:$0xf]
  %v52 = vunpack.c.l.b16 %v12
  %v53 = vunpack.c.h.b16 %v12
  %v54 = vunpack.c.l.b16 %v13
  %v55 = vunpack.c.h.b16 %v13
  %v56 = vunpack.c.l.b16 %v14
  %v57 = vunpack.c.h.b16 %v14
  %v58 = vunpack.c.l.b16 %v15
  %v59 = vunpack.c.h.b16 %v15
  %v60 = vpack.c.b16 %v54, %v52
  %v61 = vpack.c.b16 %v55, %v53
  %v62 = vpack.c.b16 %v58, %v56
  %v63 = vpack.c.b16 %v59, %v57
  %v100 = vunpack.c.l.b16 %v16
  %v101 = vunpack.c.l.b16 %v17
  %v102 = vunpack.c.l.b16 %v18
  %v103 = vunpack.c.l.b16 %v19
  %v104 = vunpack.c.l.b16 %v20
  %v105 = vunpack.c.l.b16 %v21
  %v106 = vunpack.c.l.b16 %v22
  %v107 = vunpack.c.l.b16 %v23
  %v108 = vunpack.c.l.b16 %v24
  %v109 = vunpack.c.l.b16 %v25
  %v110 = vunpack.c.l.b16 %v26
  %v111 = vunpack.c.l.b16 %v27
  %v112 = vunpack.c.l.b16 %v28
  %v113 = vunpack.c.l.b16 %v29
  %v114 = vunpack.c.l.b16 %v30
  %v115 = vunpack.c.l.b16 %v31
  %v116 = vunpack.c.l.b16 %v32
  %v117 = vunpack.c.l.b16 %v33
  %v118 = vunpack.c.l.b16 %v34
  %v119 = vunpack.c.l.b16 %v35
  %v120 = vunpack.c.l.b16 %v36
  %v121 = vunpack.c.l.b16 %v37
  %v122 = vunpack.c.l.b16 %v38
  %v123 = vunpack.c.l.b16 %v39
  %v124 = vunpack.c.l.b16 %v40
  %v125 = vunpack.c.l.b16 %v41
  %v126 = vunpack.c.l.b16 %v42
  %v127 = vunpack.c.l.b16 %v43
  %v128 = vunpack.c.l.b16 %v44
  %v129 = vunpack.c.l.b16 %v45
  %v130 = vunpack.c.l.b16 %v46
  %v131 = vunpack.c.l.b16 %v47
  %v132 = vpack.c.b16 %v101, %v100
  %v133 = vpack.c.b16 %v103, %v102
  %v134 = vpack.c.b16 %v105, %v104
  %v135 = vpack.c.b16 %v107, %v106
  %v136 = vpack.c.b16 %v109, %v108
  %v137 = vpack.c.b16 %v111, %v110
  %v138 = vpack.c.b16 %v113, %v112
  %v139 = vpack.c.b16 %v115, %v114
  %v140 = vpack.c.b16 %v117, %v116
  %v141 = vpack.c.b16 %v119, %v118
  %v142 = vpack.c.b16 %v121, %v120
  %v143 = vpack.c.b16 %v123, %v122
  %v144 = vpack.c.b16 %v125, %v124
  %v145 = vpack.c.b16 %v127, %v126
  %v146 = vpack.c.b16 %v129, %v128
  %v147 = vpack.c.b16 %v131, %v130
  %164 = vmatprep.subr.bf16.mxu0 0
  %165 = vmatpush1.bf16.msra.mxu0 %v139
  %166 = vmatprep.subr.bf16.mxu0 0
  %167 = vmatpush1.bf16.msra.mxu0 %v138
  %168 = vmatprep.subr.bf16.mxu0 0
  %169 = vmatpush1.bf16.msra.mxu0 %v137
  %170 = vmatprep.subr.bf16.mxu0 0
  %171 = vmatpush1.bf16.msra.mxu0 %v136
  %172 = vmatprep.subr.bf16.mxu0 0
  %173 = vmatpush1.bf16.msra.mxu0 %v135
  %174 = vmatprep.subr.bf16.mxu0 0
  %175 = vmatpush1.bf16.msra.mxu0 %v134
  %176 = vmatprep.subr.bf16.mxu0 0
  %177 = vmatpush1.bf16.msra.mxu0 %v133
  %178 = vmatprep.subr.bf16.mxu0 0
  %179 = vmatpush1.bf16.msra.mxu0 %v132
  %180 = vmatprep.subr.bf16.mxu0 0
  %181 = vmatpush2.bf16.msra.mxu0 %v147
  %182 = vmatprep.subr.bf16.mxu0 0
  %183 = vmatpush2.bf16.msra.mxu0 %v146
  %184 = vmatprep.subr.bf16.mxu0 0
  %185 = vmatpush2.bf16.msra.mxu0 %v145
  %186 = vmatprep.subr.bf16.mxu0 0
  %187 = vmatpush2.bf16.msra.mxu0 %v144
  %188 = vmatprep.subr.bf16.mxu0 0
  %189 = vmatpush2.bf16.msra.mxu0 %v143
  %190 = vmatprep.subr.bf16.mxu0 0
  %191 = vmatpush2.bf16.msra.mxu0 %v142
  %192 = vmatprep.subr.bf16.mxu0 0
  %193 = vmatpush2.bf16.msra.mxu0 %v141
  %194 = vmatprep.subr.bf16.mxu0 0
  %195 = vmatpush2.bf16.msra.mxu0 %v140
  %196 = vmatprep.mubr.bf16.mxu0 %v61
  %197 = vmatmul.mubr.bf16.gmra.mxu0 %v60
  %v198 = vpop.f32.mrf.mxu0
  %v199 = vadd.f32 0.0, %v198
  %v200 = vpop.f32.mrf.mxu0
  %v201 = vpop.f32.mrf.mxu0
  %v202 = vadd.f32 0.0, %v201
  %v203 = vpop.f32.mrf.mxu0
  %204 = vmatprep.mubr.bf16.mxu0 %v63
  %205 = vmatmul.mubr.bf16.gmra.mxu0 %v62
  %v206 = vpop.f32.mrf.mxu0
  %v207 = vadd.f32 0.0, %v206
  %v208 = vpop.f32.mrf.mxu0
  %v209 = vpop.f32.mrf.mxu0
  %v210 = vadd.f32 0.0, %v209
  %v211 = vpop.f32.mrf.mxu0
  %212 = vdwg.mxu0
  %v213 = vpack.c.bf16 %v202, %v199
  %v214 = vpack.c.bf16 %v210, %v207
  %v217 = vunpack.c.l.b16 %v213
  %v218 = vunpack.c.h.b16 %v213
  %v219 = vunpack.c.l.b16 %v214
  %v220 = vunpack.c.h.b16 %v214
  %v221 = vpack.c.b16 %v217, %v217
  %v222 = vpack.c.b16 %v218, %v218
  %v223 = vpack.c.b16 %v219, %v219
  %v224 = vpack.c.b16 %v220, %v220
  %229 = vst [vmem:[%s2] sm:$0xf] %v221
  %230 = vst [vmem:[%s2 + $0x4] sm:$0xf] %v222
  %231 = vst [vmem:[%s2 + $0x8] sm:$0xf] %v223
  %232 = vst [vmem:[%s2 + $0xc] sm:$0xf] %v224
  // Predicated region
  $region10: #{vision_transformer_forward.17} parent=0 // pred_check
    _
  $region11: #{vision_transformer_forward.17} parent=0 // pred_check_branch
    %234 = sbr.rel (0) target = $region13
  $region12: #{vision_transformer_forward.17} parent=0 // pred_region
    _
  $region13: #{vision_transformer_forward.17} parent=0 // pred_fallthru
    _
  // Predicated region
  $region14: #{vision_transformer_forward.17} parent=0 // pred_check
    _
  $region15: #{vision_transformer_forward.17} parent=0 // pred_check_branch
    %236 = sbr.rel (0) target = $region17
  $region16: #{vision_transformer_forward.17} parent=0 // pred_region
    _
  $region17: #{vision_transformer_forward.17} parent=0 // pred_fallthru
    _

// kernel: vision_transformer_forward.19
$region0: #{vision_transformer_forward.19}
  #allocation0 [shape = 'u32[]', space=smem, size = 0x4, offset = 0x4, fixed_abs, tag = 'smem constant byte address 0x4 - core index']
  #allocation1 [shape = 'u32[144,128]{1,0:T(1,128)}', space=vmem, size = 0x12000, scoped, tag = 'internal scratch']
  %s0 = inlined_call_operand.vmem [shape: bf16[48,128], index: 0, kind: input, shape index: {}]
  %s1 = inlined_call_operand.vmem [shape: bf16[128,384], index: 1, kind: input, shape index: {}]
  %s2 = inlined_call_operand.vmem [shape: f32[1,128], index: 2, kind: input, shape index: {}]
  %s3 = inlined_call_operand.vmem [shape: f32[1,128], index: 3, kind: input, shape index: {}]
  %s4 = inlined_call_operand.vmem [shape: f32[1,384], index: 4, kind: input, shape index: {}]
  %s5 = inlined_call_operand.vmem [shape: bf16[48,384], index: 5, kind: output, shape index: {}]
  %s6 = sld [smem:[#allocation0]]
  $region30: #{vision_transformer_forward.19} parent=0
    _
  %s8 = ssub.s32 1, %s6
  %s9 = scalar_select 0, %s8, %s6
  // Predicated region
  $region2: #{vision_transformer_forward.19} parent=0 // pred_check
    _
  $region3: #{vision_transformer_forward.19} parent=0 // pred_check_branch
    %11 = sbr.rel (0) target = $region5
  $region4: #{vision_transformer_forward.19} parent=0 // pred_region
    _
  $region5: #{vision_transformer_forward.19} parent=0 // pred_fallthru
    _
  // Predicated region
  $region6: #{vision_transformer_forward.19} parent=0 // pred_check
    _
  $region7: #{vision_transformer_forward.19} parent=0 // pred_check_branch
    %13 = sbr.rel (0) target = $region9
  $region8: #{vision_transformer_forward.19} parent=0 // pred_region
    _
  $region9: #{vision_transformer_forward.19} parent=0 // pred_fallthru
    _
  // Predicated region
  $region10: #{vision_transformer_forward.19} parent=0 // pred_check
    _
  $region11: #{vision_transformer_forward.19} parent=0 // pred_check_branch
    %15 = sbr.rel (0) target = $region13
  $region12: #{vision_transformer_forward.19} parent=0 // pred_region
    _
  $region13: #{vision_transformer_forward.19} parent=0 // pred_fallthru
    _
  // Predicated region
  $region14: #{vision_transformer_forward.19} parent=0 // pred_check
    _
  $region15: #{vision_transformer_forward.19} parent=0 // pred_check_branch
    %17 = sbr.rel (0) target = $region17
  $region16: #{vision_transformer_forward.19} parent=0 // pred_region
    _
  $region17: #{vision_transformer_forward.19} parent=0 // pred_fallthru
    _
  // Predicated region
  $region18: #{vision_transformer_forward.19} parent=0 // pred_check
    _
  $region19: #{vision_transformer_forward.19} parent=0 // pred_check_branch
    %19 = sbr.rel (0) target = $region21
  $region20: #{vision_transformer_forward.19} parent=0 // pred_region
    _
  $region21: #{vision_transformer_forward.19} parent=0 // pred_fallthru
    _
  %v21 = vld [vmem:[%s0] sm:$0xf]
  %v22 = vld [vmem:[%s0 + $0x4] sm:$0xf]
  %v23 = vld [vmem:[%s0 + $0x8] sm:$0xf]
  %v24 = vld [vmem:[%s0 + $0xc] sm:$0xf]
  %v25 = vld [vmem:[%s0 + $0x10] sm:$0xf]
  %v26 = vld [vmem:[%s0 + $0x14] sm:$0xf]
  %v27 = vunpack.c.l.bf16 %v21
  %v28 = vunpack.c.l.bf16 %v22
  %v29 = vunpack.c.l.bf16 %v23
  %v30 = vunpack.c.l.bf16 %v24
  %v31 = vunpack.c.l.bf16 %v25
  %v32 = vunpack.c.l.bf16 %v26
  %33 = vadd.xlane.f32.xlu0 %v27
  %v34 = vpop.xlane.xlu0 %33
  %35 = vadd.xlane.f32.xlu0 %v28
  %v36 = vpop.xlane.xlu0 %35
  %37 = vadd.xlane.f32.xlu0 %v29
  %v38 = vpop.xlane.xlu0 %37
  %39 = vadd.xlane.f32.xlu0 %v30
  %v40 = vpop.xlane.xlu0 %39
  %41 = vadd.xlane.f32.xlu0 %v31
  %v42 = vpop.xlane.xlu0 %41
  %43 = vadd.xlane.f32.xlu0 %v32
  %v44 = vpop.xlane.xlu0 %43
  %v45 = vrcp.pop 128.0
  %v46 = vmul.f32 %v34, %v45
  %v47 = vmul.f32 %v36, %v45
  %v48 = vmul.f32 %v38, %v45
  %v49 = vmul.f32 %v40, %v45
  %v50 = vmul.f32 %v42, %v45
  %v51 = vmul.f32 %v44, %v45
  %v52 = vsub.f32 %v27, %v46
  %v53 = vsub.f32 %v28, %v47
  %v54 = vsub.f32 %v29, %v48
  %v55 = vsub.f32 %v30, %v49
  %v56 = vsub.f32 %v31, %v50
  %v57 = vsub.f32 %v32, %v51
  %v58 = vmul.f32 %v52, %v52
  %v59 = vmul.f32 %v53, %v53
  %v60 = vmul.f32 %v54, %v54
  %v61 = vmul.f32 %v55, %v55
  %v62 = vmul.f32 %v56, %v56
  %v63 = vmul.f32 %v57, %v57
  %64 = vadd.xlane.f32.xlu0 %v58
  %v65 = vpop.xlane.xlu0 %64
  %66 = vadd.xlane.f32.xlu0 %v59
  %v67 = vpop.xlane.xlu0 %66
  %68 = vadd.xlane.f32.xlu0 %v60
  %v69 = vpop.xlane.xlu0 %68
  %70 = vadd.xlane.f32.xlu0 %v61
  %v71 = vpop.xlane.xlu0 %70
  %72 = vadd.xlane.f32.xlu0 %v62
  %v73 = vpop.xlane.xlu0 %72
  %74 = vadd.xlane.f32.xlu0 %v63
  %v75 = vpop.xlane.xlu0 %74
  %v76 = vmul.f32 %v65, %v45
  %v77 = vmul.f32 %v67, %v45
  %v78 = vmul.f32 %v69, %v45
  %v79 = vmul.f32 %v71, %v45
  %v80 = vmul.f32 %v73, %v45
  %v81 = vmul.f32 %v75, %v45
  %v82 = vadd.f32 %v76, 1e-05
  %v83 = vadd.f32 %v77, 1e-05
  %v84 = vadd.f32 %v78, 1e-05
  %v85 = vadd.f32 %v79, 1e-05
  %v86 = vadd.f32 %v80, 1e-05
  %v87 = vadd.f32 %v81, 1e-05
  %v88 = vrsqrt.pop %v82
  %v89 = vrsqrt.pop %v83
  %v90 = vrsqrt.pop %v84
  %v91 = vrsqrt.pop %v85
  %v92 = vrsqrt.pop %v86
  %v93 = vrsqrt.pop %v87
  %v94 = vmul.f32 %v52, %v88
  %v95 = vmul.f32 %v53, %v89
  %v96 = vmul.f32 %v54, %v90
  %v97 = vmul.f32 %v55, %v91
  %v98 = vmul.f32 %v56, %v92
  %v99 = vmul.f32 %v57, %v93
  %v100 = vld [vmem:[%s2] sm:$0x1]
  %v102 = vlaneseq
  %v103 = vshrl.u32 %v102, 7
  %v104 = vsub.s32 0, %v103
  %v105 = vrot.slane %v100, %v104
  %v107 = vmul.f32 %v94, %v105
  %v108 = vmul.f32 %v95, %v105
  %v109 = vmul.f32 %v96, %v105
  %v110 = vmul.f32 %v97, %v105
  %v111 = vmul.f32 %v98, %v105
  %v112 = vmul.f32 %v99, %v105
  %v113 = vld [vmem:[%s3] sm:$0x1]
  %v115 = vlaneseq
  %v116 = vshrl.u32 %v115, 7
  %v117 = vsub.s32 0, %v116
  %v118 = vrot.slane %v113, %v117
  %v120 = vadd.f32 %v107, %v118
  %v121 = vadd.f32 %v108, %v118
  %v122 = vadd.f32 %v109, %v118
  %v123 = vadd.f32 %v110, %v118
  %v124 = vadd.f32 %v111, %v118
  %v125 = vadd.f32 %v112, %v118
  %v126 = vpack.c.bf16 %v121, %v120
  %v127 = vpack.c.bf16 %v123, %v122
  %v128 = vpack.c.bf16 %v125, %v124
  %v129 = vld [vmem:[%s1] sm:$0xff]
  %v130 = vld [vmem:[%s1 + $0x8] sm:$0xf]
  %v131 = vld [vmem:[%s1 + $0xc] sm:$0xff]
  %v132 = vld [vmem:[%s1 + $0x14] sm:$0xf]
  %v133 = vld [vmem:[%s1 + $0x18] sm:$0xff]
  %v134 = vld [vmem:[%s1 + $0x20] sm:$0xf]
  %v135 = vld [vmem:[%s1 + $0x24] sm:$0xff]
  %v136 = vld [vmem:[%s1 + $0x2c] sm:$0xf]
  %v137 = vld [vmem:[%s1 + $0x30] sm:$0xff]
  %v138 = vld [vmem:[%s1 + $0x38] sm:$0xf]
  %v139 = vld [vmem:[%s1 + $0x3c] sm:$0xff]
  %v140 = vld [vmem:[%s1 + $0x44] sm:$0xf]
  %v141 = vld [vmem:[%s1 + $0x48] sm:$0xff]
  %v142 = vld [vmem:[%s1 + $0x50] sm:$0xf]
  %v143 = vld [vmem:[%s1 + $0x54] sm:$0xff]
  %v144 = vld [vmem:[%s1 + $0x5c] sm:$0xf]
  %v145 = vld [vmem:[%s1 + $0x60] sm:$0xff]
  %v146 = vld [vmem:[%s1 + $0x68] sm:$0xf]
  %v147 = vld [vmem:[%s1 + $0x6c] sm:$0xff]
  %v148 = vld [vmem:[%s1 + $0x74] sm:$0xf]
  %v149 = vld [vmem:[%s1 + $0x78] sm:$0xff]
  %v150 = vld [vmem:[%s1 + $0x80] sm:$0xf]
  %v151 = vld [vmem:[%s1 + $0x84] sm:$0xff]
  %v152 = vld [vmem:[%s1 + $0x8c] sm:$0xf]
  %v153 = vld [vmem:[%s1 + $0x90] sm:$0xff]
  %v154 = vld [vmem:[%s1 + $0x98] sm:$0xf]
  %v155 = vld [vmem:[%s1 + $0x9c] sm:$0xff]
  %v156 = vld [vmem:[%s1 + $0xa4] sm:$0xf]
  %v157 = vld [vmem:[%s1 + $0xa8] sm:$0xff]
  %v158 = vld [vmem:[%s1 + $0xb0] sm:$0xf]
  %v159 = vld [vmem:[%s1 + $0xb4] sm:$0xff]
  %v160 = vld [vmem:[%s1 + $0xbc] sm:$0xf]
  %v161 = vld [vmem:[%s4] sm:$0x7]
  %v163 = vlaneseq
  %v164 = vshrl.u32 %v163, 7
  %v165 = vsub.s32 0, %v164
  %v166 = vrot.slane %v161, %v165
  %v167 = vlaneseq
  %v168 = vshrl.u32 %v167, 7
  %v169 = vsub.s32 1, %v168
  %v170 = vrot.slane %v161, %v169
  %v171 = vlaneseq
  %v172 = vshrl.u32 %v171, 7
  %v173 = vsub.s32 2, %v172
  %v174 = vrot.slane %v161, %v173
  %v210 = vunpack.c.l.b16 %v129
  %v211 = vunpack.c.h.b16 %v129
  %v212 = vunpack.c.l.b16 %v130
  %v213 = vunpack.c.l.b16 %v131
  %v214 = vunpack.c.h.b16 %v131
  %v215 = vunpack.c.l.b16 %v132
  %v216 = vunpack.c.l.b16 %v133
  %v217 = vunpack.c.h.b16 %v133
  %v218 = vunpack.c.l.b16 %v134
  %v219 = vunpack.c.l.b16 %v135
  %v220 = vunpack.c.h.b16 %v135
  %v221 = vunpack.c.l.b16 %v136
  %v222 = vunpack.c.l.b16 %v137
  %v223 = vunpack.c.h.b16 %v137
  %v224 = vunpack.c.l.b16 %v138
  %v225 = vunpack.c.l.b16 %v139
  %v226 = vunpack.c.h.b16 %v139
  %v227 = vunpack.c.l.b16 %v140
  %v228 = vunpack.c.l.b16 %v141
  %v229 = vunpack.c.h.b16 %v141
  %v230 = vunpack.c.l.b16 %v142
  %v231 = vunpack.c.l.b16 %v143
  %v232 = vunpack.c.h.b16 %v143
  %v233 = vunpack.c.l.b16 %v144
  %v234 = vunpack.c.l.b16 %v145
  %v235 = vunpack.c.h.b16 %v145
  %v236 = vunpack.c.l.b16 %v146
  %v237 = vunpack.c.l.b16 %v147
  %v238 = vunpack.c.h.b16 %v147
  %v239 = vunpack.c.l.b16 %v148
  %v240 = vunpack.c.l.b16 %v149
  %v241 = vunpack.c.h.b16 %v149
  %v242 = vunpack.c.l.b16 %v150
  %v243 = vunpack.c.l.b16 %v151
  %v244 = vunpack.c.h.b16 %v151
  %v245 = vunpack.c.l.b16 %v152
  %v246 = vunpack.c.l.b16 %v153
  %v247 = vunpack.c.h.b16 %v153
  %v248 = vunpack.c.l.b16 %v154
  %v249 = vunpack.c.l.b16 %v155
  %v250 = vunpack.c.h.b16 %v155
  %v251 = vunpack.c.l.b16 %v156
  %v252 = vunpack.c.l.b16 %v157
  %v253 = vunpack.c.h.b16 %v157
  %v254 = vunpack.c.l.b16 %v158
  %v255 = vunpack.c.l.b16 %v159
  %v256 = vunpack.c.h.b16 %v159
  %v257 = vunpack.c.l.b16 %v160
  %v258 = vpack.c.b16 %v213, %v210
  %v259 = vpack.c.b16 %v214, %v211
  %v260 = vpack.c.b16 %v215, %v212
  %v261 = vpack.c.b16 %v219, %v216
  %v262 = vpack.c.b16 %v220, %v217
  %v263 = vpack.c.b16 %v221, %v218
  %v264 = vpack.c.b16 %v225, %v222
  %v265 = vpack.c.b16 %v226, %v223
  %v266 = vpack.c.b16 %v227, %v224
  %v267 = vpack.c.b16 %v231, %v228
  %v268 = vpack.c.b16 %v232, %v229
  %v269 = vpack.c.b16 %v233, %v230
  %v270 = vpack.c.b16 %v237, %v234
  %v271 = vpack.c.b16 %v238, %v235
  %v272 = vpack.c.b16 %v239, %v236
  %v273 = vpack.c.b16 %v243, %v240
  %v274 = vpack.c.b16 %v244, %v241
  %v275 = vpack.c.b16 %v245, %v242
  %v276 = vpack.c.b16 %v249, %v246
  %v277 = vpack.c.b16 %v250, %v247
  %v278 = vpack.c.b16 %v251, %v248
  %v279 = vpack.c.b16 %v255, %v252
  %v280 = vpack.c.b16 %v256, %v253
  %v281 = vpack.c.b16 %v257, %v254
  %306 = vmatprep.subr.bf16.mxu0 %v280
  %307 = vmatpush1.bf16.msra.mxu0 %v279
  %308 = vmatprep.subr.bf16.mxu0 %v277
  %309 = vmatpush1.bf16.msra.mxu0 %v276
  %310 = vmatprep.subr.bf16.mxu0 %v274
  %311 = vmatpush1.bf16.msra.mxu0 %v273
  %312 = vmatprep.subr.bf16.mxu0 %v271
  %313 = vmatpush1.bf16.msra.mxu0 %v270
  %314 = vmatprep.subr.bf16.mxu0 %v268
  %315 = vmatpush1.bf16.msra.mxu0 %v267
  %316 = vmatprep.subr.bf16.mxu0 %v265
  %317 = vmatpush1.bf16.msra.mxu0 %v264
  %318 = vmatprep.subr.bf16.mxu0 %v262
  %319 = vmatpush1.bf16.msra.mxu0 %v261
  %320 = vmatprep.subr.bf16.mxu0 %v259
  %321 = vmatpush1.bf16.msra.mxu0 %v258
  %322 = vmatprep.subr.bf16.mxu0 0
  %323 = vmatpush2.bf16.msra.mxu0 0
  %324 = vmatprep.subr.bf16.mxu0 0
  %325 = vmatpush2.bf16.msra.mxu0 0
  %326 = vmatprep.subr.bf16.mxu0 0
  %327 = vmatpush2.bf16.msra.mxu0 0
  %328 = vmatprep.subr.bf16.mxu0 0
  %329 = vmatpush2.bf16.msra.mxu0 0
  %330 = vmatprep.subr.bf16.mxu0 0
  %331 = vmatpush2.bf16.msra.mxu0 0
  %332 = vmatprep.subr.bf16.mxu0 0
  %333 = vmatpush2.bf16.msra.mxu0 0
  %334 = vmatprep.subr.bf16.mxu0 0
  %335 = vmatpush2.bf16.msra.mxu0 0
  %336 = vmatprep.subr.bf16.mxu0 0
  %337 = vmatpush2.bf16.msra.mxu0 0
  %338 = vmatprep.mubr.bf16.mxu0 0
  %339 = vmatmul.mubr.bf16.gmra.mxu0 %v126
  %v340 = vpop.f32.mrf.mxu0
  %v341 = vadd.f32 %v166, %v340
  %v342 = vpop.f32.mrf.mxu0
  %v343 = vadd.f32 %v170, %v342
  %v344 = vpop.f32.mrf.mxu0
  %v345 = vadd.f32 %v166, %v344
  %v346 = vpop.f32.mrf.mxu0
  %v347 = vadd.f32 %v170, %v346
  %348 = vmatprep.mubr.bf16.mxu0 0
  %349 = vmatmul.mubr.bf16.gmra.mxu0 %v127
  %v350 = vpop.f32.mrf.mxu0
  %v351 = vadd.f32 %v166, %v350
  %v352 = vpop.f32.mrf.mxu0
  %v353 = vadd.f32 %v170, %v352
  %v354 = vpop.f32.mrf.mxu0
  %v355 = vadd.f32 %v166, %v354
  %v356 = vpop.f32.mrf.mxu0
  %v357 = vadd.f32 %v170, %v356
  %358 = vmatprep.mubr.bf16.mxu0 0
  %359 = vmatmul.mubr.bf16.gmra.mxu0 %v128
  %v360 = vpop.f32.mrf.mxu0
  %v361 = vadd.f32 %v166, %v360
  %v362 = vpop.f32.mrf.mxu0
  %v363 = vadd.f32 %v170, %v362
  %v364 = vpop.f32.mrf.mxu0
  %v365 = vadd.f32 %v166, %v364
  %v366 = vpop.f32.mrf.mxu0
  %v367 = vadd.f32 %v170, %v366
  %368 = vdwg.mxu0
  %369 = vmatprep.subr.bf16.mxu0 0
  %370 = vmatpush1.bf16.msra.mxu0 %v281
  %371 = vmatprep.subr.bf16.mxu0 0
  %372 = vmatpush1.bf16.msra.mxu0 %v278
  %373 = vmatprep.subr.bf16.mxu0 0
  %374 = vmatpush1.bf16.msra.mxu0 %v275
  %375 = vmatprep.subr.bf16.mxu0 0
  %376 = vmatpush1.bf16.msra.mxu0 %v272
  %377 = vmatprep.subr.bf16.mxu0 0
  %378 = vmatpush1.bf16.msra.mxu0 %v269
  %379 = vmatprep.subr.bf16.mxu0 0
  %380 = vmatpush1.bf16.msra.mxu0 %v266
  %381 = vmatprep.subr.bf16.mxu0 0
  %382 = vmatpush1.bf16.msra.mxu0 %v263
  %383 = vmatprep.subr.bf16.mxu0 0
  %384 = vmatpush1.bf16.msra.mxu0 %v260
  %385 = vmatprep.subr.bf16.mxu0 0
  %386 = vmatpush2.bf16.msra.mxu0 0
  %387 = vmatprep.subr.bf16.mxu0 0
  %388 = vmatpush2.bf16.msra.mxu0 0
  %389 = vmatprep.subr.bf16.mxu0 0
  %390 = vmatpush2.bf16.msra.mxu0 0
  %391 = vmatprep.subr.bf16.mxu0 0
  %392 = vmatpush2.bf16.msra.mxu0 0
  %393 = vmatprep.subr.bf16.mxu0 0
  %394 = vmatpush2.bf16.msra.mxu0 0
  %395 = vmatprep.subr.bf16.mxu0 0
  %396 = vmatpush2.bf16.msra.mxu0 0
  %397 = vmatprep.subr.bf16.mxu0 0
  %398 = vmatpush2.bf16.msra.mxu0 0
  %399 = vmatprep.subr.bf16.mxu0 0
  %400 = vmatpush2.bf16.msra.mxu0 0
  %401 = vmatprep.mubr.bf16.mxu0 0
  %402 = vmatmul.mubr.bf16.gmra.mxu0 %v126
  %v403 = vpop.f32.mrf.mxu0
  %v404 = vadd.f32 %v174, %v403
  %v405 = vpop.f32.mrf.mxu0
  %v406 = vpop.f32.mrf.mxu0
  %v407 = vadd.f32 %v174, %v406
  %v408 = vpop.f32.mrf.mxu0
  %409 = vmatprep.mubr.bf16.mxu0 0
  %410 = vmatmul.mubr.bf16.gmra.mxu0 %v127
  %v411 = vpop.f32.mrf.mxu0
  %v412 = vadd.f32 %v174, %v411
  %v413 = vpop.f32.mrf.mxu0
  %v414 = vpop.f32.mrf.mxu0
  %v415 = vadd.f32 %v174, %v414
  %v416 = vpop.f32.mrf.mxu0
  %417 = vmatprep.mubr.bf16.mxu0 0
  %418 = vmatmul.mubr.bf16.gmra.mxu0 %v128
  %v419 = vpop.f32.mrf.mxu0
  %v420 = vadd.f32 %v174, %v419
  %v421 = vpop.f32.mrf.mxu0
  %v422 = vpop.f32.mrf.mxu0
  %v423 = vadd.f32 %v174, %v422
  %v424 = vpop.f32.mrf.mxu0
  %425 = vdwg.mxu0
  %v426 = vpack.c.bf16 %v345, %v341
  %v427 = vpack.c.bf16 %v347, %v343
  %v428 = vpack.c.bf16 %v407, %v404
  %v429 = vpack.c.bf16 %v355, %v351
  %v430 = vpack.c.bf16 %v357, %v353
  %v431 = vpack.c.bf16 %v415, %v412
  %v432 = vpack.c.bf16 %v365, %v361
  %v433 = vpack.c.bf16 %v367, %v363
  %v434 = vpack.c.bf16 %v423, %v420
  %v444 = vunpack.c.l.b16 %v426
  %v445 = vunpack.c.l.b16 %v427
  %v446 = vunpack.c.l.b16 %v428
  %v447 = vunpack.c.h.b16 %v426
  %v448 = vunpack.c.h.b16 %v427
  %v449 = vunpack.c.h.b16 %v428
  %v450 = vunpack.c.l.b16 %v429
  %v451 = vunpack.c.l.b16 %v430
  %v452 = vunpack.c.l.b16 %v431
  %v453 = vunpack.c.h.b16 %v429
  %v454 = vunpack.c.h.b16 %v430
  %v455 = vunpack.c.h.b16 %v431
  %v456 = vunpack.c.l.b16 %v432
  %v457 = vunpack.c.l.b16 %v433
  %v458 = vunpack.c.l.b16 %v434
  %v459 = vunpack.c.h.b16 %v432
  %v460 = vunpack.c.h.b16 %v433
  %v461 = vunpack.c.h.b16 %v434
  %v462 = vpack.c.b16 %v445, %v444
  %v463 = vpack.c.b16 %v446, %v446
  %v464 = vpack.c.b16 %v448, %v447
  %v465 = vpack.c.b16 %v449, %v449
  %v466 = vpack.c.b16 %v451, %v450
  %v467 = vpack.c.b16 %v452, %v452
  %v468 = vpack.c.b16 %v454, %v453
  %v469 = vpack.c.b16 %v455, %v455
  %v470 = vpack.c.b16 %v457, %v456
  %v471 = vpack.c.b16 %v458, %v458
  %v472 = vpack.c.b16 %v460, %v459
  %v473 = vpack.c.b16 %v461, %v461
  %486 = vst [vmem:[%s5] sm:$0xff] %v462
  %487 = vst [vmem:[%s5 + $0x8] sm:$0xf] %v463
  %488 = vst [vmem:[%s5 + $0xc] sm:$0xff] %v464
  %489 = vst [vmem:[%s5 + $0x14] sm:$0xf] %v465
  %490 = vst [vmem:[%s5 + $0x18] sm:$0xff] %v466
  %491 = vst [vmem:[%s5 + $0x20] sm:$0xf] %v467
  %492 = vst [vmem:[%s5 + $0x24] sm:$0xff] %v468
  %493 = vst [vmem:[%s5 + $0x2c] sm:$0xf] %v469
  %494 = vst [vmem:[%s5 + $0x30] sm:$0xff] %v470
  %495 = vst [vmem:[%s5 + $0x38] sm:$0xf] %v471
  %496 = vst [vmem:[%s5 + $0x3c] sm:$0xff] %v472
  %497 = vst [vmem:[%s5 + $0x44] sm:$0xf] %v473
  // Predicated region
  $region22: #{vision_transformer_forward.19} parent=0 // pred_check
    _
  $region23: #{vision_transformer_forward.19} parent=0 // pred_check_branch
    %499 = sbr.rel (0) target = $region25
  $region24: #{vision_transformer_forward.19} parent=0 // pred_region
    _
  $region25: #{vision_transformer_forward.19} parent=0 // pred_fallthru
    _
  // Predicated region
  $region26: #{vision_transformer_forward.19} parent=0 // pred_check
    _
  $region27: #{vision_transformer_forward.19} parent=0 // pred_check_branch
    %501 = sbr.rel (0) target = $region29
  $region28: #{vision_transformer_forward.19} parent=0 // pred_region
    _
  $region29: #{vision_transformer_forward.19} parent=0 // pred_fallthru
    _

// kernel: vision_transformer_forward.20
$region0: #{vision_transformer_forward.20}
  #allocation0 [shape = 'u32[]', space=smem, size = 0x4, offset = 0x4, fixed_abs, tag = 'smem constant byte address 0x4 - core index']
  #allocation1 [shape = 'u32[144,128]{1,0:T(1,128)}', space=vmem, size = 0x12000, scoped, tag = 'internal scratch']
  %s0 = inlined_call_operand.vmem [shape: bf16[2,17,384], index: 0, kind: input, shape index: {}]
  %s1 = inlined_call_operand.vmem [shape: bf16[2,17,128], index: 1, kind: output, shape index: {}]
  %s2 = sld [smem:[#allocation0]]
  $region37: #{vision_transformer_forward.20} parent=0
    _
  %s4 = ssub.s32 1, %s2
  %s5 = scalar_select 0, %s4, %s2
  loop: start=0, step=1, limit=4
  $region2: #{vision_transformer_forward.20} parent=0 // loop_pre_header
    _
  $region3: #{vision_transformer_forward.20} parent=0 // loop_header
    %s7 = sphi 0, %s11
    %p8 = scmp.ge.s32.totalorder %s7, 4
    %s17 = sphi 0, %s19
    %s20 = sphi 0, %s17
    %s21 = sphi 0, %s20
    %s37 = sphi 0, %s21
    %s43 = sphi 0, %s45
    %s46 = sphi 0, %s43
    %s47 = sphi 0, %s46
    %s63 = sphi 0, %s47
  $region4: #{vision_transformer_forward.20} parent=0 // loop_header_branch
    %10 = sbr.rel (%p8) target = $region8
  $region5: #{vision_transformer_forward.20} parent=0 // loop_body
    %s12 = ssub.s32 %s7, 1
    %s13 = ssub.s32 %s7, 2
    %s14 = sadd.s32 %s7, 1
    %s15 = ssub.s32 %s7, %s14
    %p16 = scmp.eq.s32.totalorder %s15, 0
    %s18 = sadd.s32 %s17, 1
    %s19 = scalar_select %p16, %s17, %s18
    %p22 = pneg %p16
    %p23 = scmp.eq.s32.totalorder %s7, 1
    %p24 = por %p22, %p23
    %p25 = scmp.ne.s32.totalorder %s17, %s20
    %p26 = scmp.eq.s32.totalorder %s7, 0
    %p27 = por %p25, %p26
    %p28 = scmp.ne.s32.totalorder %s17, %s20
    %p29 = scmp.eq.s32.totalorder %s12, 1
    %p30 = por %p28, %p29
    %p31 = scmp.ne.s32.totalorder %s20, %s21
    %p32 = scmp.eq.s32.totalorder %s12, 0
    %p33 = por %p31, %p32
    %p34 = scmp.ne.s32.totalorder %s20, %s21
    %p35 = scmp.eq.s32.totalorder %s13, 1
    %p36 = por %p34, %p35
    %p38 = scmp.ne.s32.totalorder %s21, %s37
    %p39 = scmp.eq.s32.totalorder %s13, 0
    %p40 = por %p38, %p39
    %s41 = ssub.s32 %s7, %s14
    %p42 = scmp.eq.s32.totalorder %s41, 0
    %s44 = sadd.s32 %s43, 1
    %s45 = scalar_select %p42, %s43, %s44
    %p48 = pneg %p42
    %p49 = scmp.eq.s32.totalorder %s7, 1
    %p50 = por %p48, %p49
    %p51 = scmp.ne.s32.totalorder %s43, %s46
    %p52 = scmp.eq.s32.totalorder %s7, 0
    %p53 = por %p51, %p52
    %p54 = scmp.ne.s32.totalorder %s43, %s46
    %p55 = scmp.eq.s32.totalorder %s12, 1
    %p56 = por %p54, %p55
    %p57 = scmp.ne.s32.totalorder %s46, %s47
    %p58 = scmp.eq.s32.totalorder %s12, 0
    %p59 = por %p57, %p58
    %p60 = scmp.ne.s32.totalorder %s46, %s47
    %p61 = scmp.eq.s32.totalorder %s13, 1
    %p62 = por %p60, %p61
    %p64 = scmp.ne.s32.totalorder %s47, %s63
    %p65 = scmp.eq.s32.totalorder %s13, 0
    %p66 = por %p64, %p65
    %p67 = scmp.le.s32.totalorder 1, %s7
    %p68 = scmp.lt.s32.totalorder %s7, 3
    %p69 = pnand %p67, %p68
    %p70 = pneg %p69
    // Predicated region
    $region9: #{vision_transformer_forward.20} parent=5 // pred_check
      _
    $region10: #{vision_transformer_forward.20} parent=5 // pred_check_branch
      %72 = sbr.rel (%p69) target = $region12
    $region11: #{vision_transformer_forward.20} parent=5 // pred_region
      %s73 = ssub.s32 %s7, 1
    $region12: #{vision_transformer_forward.20} parent=5 // pred_fallthru
      _
    %p74 = scmp.lt.s32.totalorder %s7, 2
    // Predicated region
    $region13: #{vision_transformer_forward.20} parent=5 // pred_check
      %p75 = pneg %p74
    $region14: #{vision_transformer_forward.20} parent=5 // pred_check_branch
      %77 = sbr.rel (%p75) target = $region16
    $region15: #{vision_transformer_forward.20} parent=5 // pred_region
      // Predicated region
      $region17: #{vision_transformer_forward.20} parent=15 // pred_check
        %p78 = pneg %p27
      $region18: #{vision_transformer_forward.20} parent=15 // pred_check_branch
        %80 = sbr.rel (%p78) target = $region20
      $region19: #{vision_transformer_forward.20} parent=15 // pred_region
        %p81 = scmp.lt.s32.totalorder %s7, 1
        %s82 = scalar_select %p81, %s7, 1
        %s83 = smul.addr %s82, 9
        %s84 = smul.addr %s83, 4
        %s85 = scalar_lea.vmem %s0, %s84
      $region20: #{vision_transformer_forward.20} parent=15 // pred_fallthru
        _
    $region16: #{vision_transformer_forward.20} parent=5 // pred_fallthru
      _
    %p86 = scmp.le.s32.totalorder 1, %s7
    %p87 = scmp.lt.s32.totalorder %s7, 3
    %p88 = pnand %p86, %p87
    %p89 = pneg %p88
    // Predicated region
    $region21: #{vision_transformer_forward.20} parent=5 // pred_check
      _
    $region22: #{vision_transformer_forward.20} parent=5 // pred_check_branch
      %91 = sbr.rel (%p88) target = $region24
    $region23: #{vision_transformer_forward.20} parent=5 // pred_region
      %s92 = ssub.s32 %s7, 1
      %p93 = scmp.lt.s32.totalorder %s12, 1
      %s94 = scalar_select %p93, %s12, 1
      %s95 = smul.addr %s94, 9
      %s96 = smul.addr %s95, 4
      %s97 = scalar_lea.vmem %s0, %s96
      %p98 = pneg %p33
      %p99 = pneg %p30
      %p100 = pneg %p59
      %p101 = pneg %p56
      %p102 = scmp.lt.s32.totalorder %s12, 1
      %s103 = scalar_select %p102, %s12, 1
      %s104 = smul.addr %s103, 3
      %s105 = smul.addr %s104, 4
      %s106 = scalar_lea.vmem %s1, %s105
      %p107 = scmp.lt.s32.totalorder %s12, 1
      %s108 = scalar_select %p107, %s12, 1
      %s109 = smul.addr %s108, 9
      %s110 = smul.addr %s109, 4
      %s111 = scalar_lea.vmem %s0, %s110
      %p112 = scmp.lt.s32.totalorder %s12, 1
      %s113 = scalar_select %p112, %s12, 1
      %s114 = smul.addr %s113, 3
      %s115 = smul.addr %s114, 4
      %s116 = scalar_lea.vmem %s1, %s115
      %v118 = vld [vmem:[%s111] sm:$0xff]
      %v119 = vld [vmem:[%s111 + $0x8] sm:$0xf]
      %v120 = vld [vmem:[%s111 + $0xc] sm:$0xff]
      %v121 = vld [vmem:[%s111 + $0x14] sm:$0xf]
      %v122 = vld [vmem:[%s111 + $0x18] sm:$0x11]
      %v123 = vld [vmem:[%s111 + $0x20] sm:$0x1]
      %v127 = vunpack.c.l.b16 %v118
      %v128 = vunpack.c.l.b16 %v120
      %v129 = vunpack.c.l.b16 %v122
      %v130 = vpack.c.b16 %v128, %v127
      %v131 = vpack.c.b16 %v129, %v129
      %v132 = vunpack.c.h.b16 %v118
      %v133 = vunpack.c.h.b16 %v120
      %v134 = vunpack.c.h.b16 %v122
      %v135 = vpack.c.b16 %v133, %v132
      %v136 = vpack.c.b16 %v134, %v134
      %vm137 = vcmask 261120
      %v139 = vsel %vm137, %v130, 0
      %v142 = vsel %vm137, %v131, 0
      %v145 = vsel %vm137, %v135, 0
      %v148 = vsel %vm137, %v136, 0
      %150 = vmatprep.subr.bf16.mxu0 0
      %151 = vmatpush1.bf16.xpose.msra.mxu0 0
      %152 = vmatprep.subr.bf16.mxu0 0
      %153 = vmatpush1.bf16.xpose.msra.mxu0 0
      %154 = vmatprep.subr.bf16.mxu0 0
      %155 = vmatpush1.bf16.xpose.msra.mxu0 0
      %156 = vmatprep.subr.bf16.mxu0 0
      %157 = vmatpush1.bf16.xpose.msra.mxu0 0
      %158 = vmatprep.subr.bf16.mxu0 0
      %159 = vmatpush1.bf16.xpose.msra.mxu0 0
      %160 = vmatprep.subr.bf16.mxu0 0
      %161 = vmatpush1.bf16.xpose.msra.mxu0 0
      %162 = vmatprep.subr.bf16.mxu0 0
      %163 = vmatpush1.bf16.xpose.msra.mxu0 %v148
      %164 = vmatprep.subr.bf16.mxu0 0
      %165 = vmatpush1.bf16.xpose.msra.mxu0 %v145
      %166 = vmatprep.subr.bf16.mxu0 0
      %167 = vmatpush2.bf16.xpose.msra.mxu0 0
      %168 = vmatprep.subr.bf16.mxu0 0
      %169 = vmatpush2.bf16.xpose.msra.mxu0 0
      %170 = vmatprep.subr.bf16.mxu0 0
      %171 = vmatpush2.bf16.xpose.msra.mxu0 0
      %172 = vmatprep.subr.bf16.mxu0 0
      %173 = vmatpush2.bf16.xpose.msra.mxu0 0
      %174 = vmatprep.subr.bf16.mxu0 0
      %175 = vmatpush2.bf16.xpose.msra.mxu0 0
      %176 = vmatprep.subr.bf16.mxu0 0
      %177 = vmatpush2.bf16.xpose.msra.mxu0 0
      %178 = vmatprep.subr.bf16.mxu0 0
      %179 = vmatpush2.bf16.xpose.msra.mxu0 0
      %180 = vmatprep.subr.bf16.mxu0 0
      %181 = vmatpush2.bf16.xpose.msra.mxu0 0
      %182 = vmatprep.mubr.bf16.mxu0 0
      %183 = vmatmul.mubr.bf16.gmra.mxu0 %v139
      %v184 = vpop.f32.mrf.mxu0
      %v185 = vadd.f32 0.0, %v184
      %v186 = vpop.f32.mrf.mxu0
      %v187 = vpop.f32.mrf.mxu0
      %v188 = vadd.f32 0.0, %v187
      %v189 = vpop.f32.mrf.mxu0
      %190 = vmatprep.mubr.bf16.mxu0 0
      %191 = vmatmul.mubr.bf16.gmra.mxu0 %v142
      %v192 = vpop.f32.mrf.mxu0
      %v193 = vadd.f32 0.0, %v192
      %v194 = vpop.f32.mrf.mxu0
      %v195 = vpop.f32.mrf.mxu0
      %v196 = vpop.f32.mrf.mxu0
      %197 = vdwg.mxu0
      %v198 = vmul.f32 %v185, 0.17677669
      %v199 = vmul.f32 %v188, 0.17677669
      %v200 = vmul.f32 %v193, 0.17677669
      %vm201 = vcmask 138240
      %v202 = vsel %vm201, %v198, -inf
      %203 = vmax.xlane.f32.xlu0 %v202
      %v204 = vpop.xlane.xlu0 %203
      %v205 = vsel %vm201, %v199, -inf
      %206 = vmax.xlane.f32.xlu0 %v205
      %v207 = vpop.xlane.xlu0 %206
      %vm208 = vcmask 131072
      %v209 = vsel %vm208, %v200, -inf
      %210 = vmax.xlane.f32.xlu0 %v209
      %v211 = vpop.xlane.xlu0 %210
      %v212 = vsub.f32 %v198, %v204
      %v213 = vsub.f32 %v199, %v207
      %v214 = vsub.f32 %v200, %v211
      %v215 = vmul.f32 %v212, 1.442695
      %v216 = vpow.pop %v215
      %v217 = vmul.f32 %v213, 1.442695
      %v218 = vpow.pop %v217
      %v219 = vmul.f32 %v214, 1.442695
      %v220 = vpow.pop %v219
      %v221 = vsel %vm201, %v216, 0.0
      %222 = vadd.xlane.f32.xlu0 %v221
      %v223 = vpop.xlane.xlu0 %222
      %v224 = vsel %vm201, %v218, 0.0
      %225 = vadd.xlane.f32.xlu0 %v224
      %v226 = vpop.xlane.xlu0 %225
      %v227 = vsel %vm208, %v220, 0.0
      %228 = vadd.xlane.f32.xlu0 %v227
      %v229 = vpop.xlane.xlu0 %228
      %v230 = vrcp.pop %v223
      %v231 = vrcp.pop %v226
      %v232 = vrcp.pop %v229
      %v233 = vmul.f32 %v216, %v230
      %v234 = vmul.f32 %v218, %v231
      %v235 = vmul.f32 %v220, %v232
      %v236 = vpack.c.bf16 %v234, %v233
      %v237 = vpack.c.bf16 %v235, %v235
      %v241 = vunpack.c.l.b16 %v119
      %v242 = vunpack.c.l.b16 %v121
      %v243 = vunpack.c.l.b16 %v123
      %v244 = vpack.c.b16 %v242, %v241
      %v245 = vpack.c.b16 %v243, %v243
      %v248 = vsel %vm201, %v236, 0
      %v251 = vsel %vm201, %v237, 0
      %vm253 = vcmask 1040384
      %v254 = vsel 0, 4294967295, 65535
      %v255 = vsel %vm253, %v254, 0
      %v257 = vand.u32 %v245, %v255
      %259 = vmatprep.subr.bf16.mxu0 0
      %260 = vmatpush1.bf16.msra.mxu0 0
      %261 = vmatprep.subr.bf16.mxu0 0
      %262 = vmatpush1.bf16.msra.mxu0 0
      %263 = vmatprep.subr.bf16.mxu0 0
      %264 = vmatpush1.bf16.msra.mxu0 0
      %265 = vmatprep.subr.bf16.mxu0 0
      %266 = vmatpush1.bf16.msra.mxu0 0
      %267 = vmatprep.subr.bf16.mxu0 0
      %268 = vmatpush1.bf16.msra.mxu0 0
      %269 = vmatprep.subr.bf16.mxu0 0
      %270 = vmatpush1.bf16.msra.mxu0 0
      %271 = vmatprep.subr.bf16.mxu0 0
      %272 = vmatpush1.bf16.msra.mxu0 %v257
      %273 = vmatprep.subr.bf16.mxu0 0
      %274 = vmatpush1.bf16.msra.mxu0 %v244
      %275 = vmatprep.subr.bf16.mxu0 0
      %276 = vmatpush2.bf16.msra.mxu0 0
      %277 = vmatprep.subr.bf16.mxu0 0
      %278 = vmatpush2.bf16.msra.mxu0 0
      %279 = vmatprep.subr.bf16.mxu0 0
      %280 = vmatpush2.bf16.msra.mxu0 0
      %281 = vmatprep.subr.bf16.mxu0 0
      %282 = vmatpush2.bf16.msra.mxu0 0
      %283 = vmatprep.subr.bf16.mxu0 0
      %284 = vmatpush2.bf16.msra.mxu0 0
      %285 = vmatprep.subr.bf16.mxu0 0
      %286 = vmatpush2.bf16.msra.mxu0 0
      %287 = vmatprep.subr.bf16.mxu0 0
      %288 = vmatpush2.bf16.msra.mxu0 0
      %289 = vmatprep.subr.bf16.mxu0 0
      %290 = vmatpush2.bf16.msra.mxu0 0
      %291 = vmatprep.mubr.bf16.mxu0 0
      %292 = vmatmul.mubr.bf16.gmra.mxu0 %v248
      %v293 = vpop.f32.mrf.mxu0
      %v294 = vadd.f32 0.0, %v293
      %v295 = vpop.f32.mrf.mxu0
      %v296 = vpop.f32.mrf.mxu0
      %v297 = vadd.f32 0.0, %v296
      %v298 = vpop.f32.mrf.mxu0
      %299 = vmatprep.mubr.bf16.mxu0 0
      %300 = vmatmul.mubr.bf16.gmra.mxu0 %v251
      %v301 = vpop.f32.mrf.mxu0
      %v302 = vadd.f32 0.0, %v301
      %v303 = vpop.f32.mrf.mxu0
      %v304 = vpop.f32.mrf.mxu0
      %v305 = vpop.f32.mrf.mxu0
      %306 = vdwg.mxu0
      %307 = vrot.lane.b32.xlu0 %v130, 96
      %v308 = vpop.permute.xlu0 %307
      %309 = vrot.lane.b32.xlu0 %v131, 96
      %v310 = vpop.permute.xlu0 %309
      %311 = vrot.lane.b32.xlu0 %v135, 96
      %v312 = vpop.permute.xlu0 %311
      %313 = vrot.lane.b32.xlu0 %v136, 96
      %v314 = vpop.permute.xlu0 %313
      %v316 = vsel %vm137, %v308, 0
      %v319 = vsel %vm137, %v310, 0
      %v322 = vsel %vm137, %v312, 0
      %v325 = vsel %vm137, %v314, 0
      %327 = vmatprep.subr.bf16.mxu0 0
      %328 = vmatpush1.bf16.xpose.msra.mxu0 0
      %329 = vmatprep.subr.bf16.mxu0 0
      %330 = vmatpush1.bf16.xpose.msra.mxu0 0
      %331 = vmatprep.subr.bf16.mxu0 0
      %332 = vmatpush1.bf16.xpose.msra.mxu0 0
      %333 = vmatprep.subr.bf16.mxu0 0
      %334 = vmatpush1.bf16.xpose.msra.mxu0 0
      %335 = vmatprep.subr.bf16.mxu0 0
      %336 = vmatpush1.bf16.xpose.msra.mxu0 0
      %337 = vmatprep.subr.bf16.mxu0 0
      %338 = vmatpush1.bf16.xpose.msra.mxu0 0
      %339 = vmatprep.subr.bf16.mxu0 0
      %340 = vmatpush1.bf16.xpose.msra.mxu0 %v325
      %341 = vmatprep.subr.bf16.mxu0 0
      %342 = vmatpush1.bf16.xpose.msra.mxu0 %v322
      %343 = vmatprep.subr.bf16.mxu0 0
      %344 = vmatpush2.bf16.xpose.msra.mxu0 0
      %345 = vmatprep.subr.bf16.mxu0 0
      %346 = vmatpush2.bf16.xpose.msra.mxu0 0
      %347 = vmatprep.subr.bf16.mxu0 0
      %348 = vmatpush2.bf16.xpose.msra.mxu0 0
      %349 = vmatprep.subr.bf16.mxu0 0
      %350 = vmatpush2.bf16.xpose.msra.mxu0 0
      %351 = vmatprep.subr.bf16.mxu0 0
      %352 = vmatpush2.bf16.xpose.msra.mxu0 0
      %353 = vmatprep.subr.bf16.mxu0 0
      %354 = vmatpush2.bf16.xpose.msra.mxu0 0
      %355 = vmatprep.subr.bf16.mxu0 0
      %356 = vmatpush2.bf16.xpose.msra.mxu0 0
      %357 = vmatprep.subr.bf16.mxu0 0
      %358 = vmatpush2.bf16.xpose.msra.mxu0 0
      %359 = vmatprep.mubr.bf16.mxu0 0
      %360 = vmatmul.mubr.bf16.gmra.mxu0 %v316
      %v361 = vpop.f32.mrf.mxu0
      %v362 = vadd.f32 0.0, %v361
      %v363 = vpop.f32.mrf.mxu0
      %v364 = vpop.f32.mrf.mxu0
      %v365 = vadd.f32 0.0, %v364
      %v366 = vpop.f32.mrf.mxu0
      %367 = vmatprep.mubr.bf16.mxu0 0
      %368 = vmatmul.mubr.bf16.gmra.mxu0 %v319
      %v369 = vpop.f32.mrf.mxu0
      %v370 = vadd.f32 0.0, %v369
      %v371 = vpop.f32.mrf.mxu0
      %v372 = vpop.f32.mrf.mxu0
      %v373 = vpop.f32.mrf.mxu0
      %374 = vdwg.mxu0
      %v375 = vmul.f32 %v362, 0.17677669
      %v376 = vmul.f32 %v365, 0.17677669
      %v377 = vmul.f32 %v370, 0.17677669
      %v378 = vsel %vm201, %v375, -inf
      %379 = vmax.xlane.f32.xlu0 %v378
      %v380 = vpop.xlane.xlu0 %379
      %v381 = vsel %vm201, %v376, -inf
      %382 = vmax.xlane.f32.xlu0 %v381
      %v383 = vpop.xlane.xlu0 %382
      %v384 = vsel %vm208, %v377, -inf
      %385 = vmax.xlane.f32.xlu0 %v384
      %v386 = vpop.xlane.xlu0 %385
      %v387 = vsub.f32 %v375, %v380
      %v388 = vsub.f32 %v376, %v383
      %v389 = vsub.f32 %v377, %v386
      %v390 = vmul.f32 %v387, 1.442695
      %v391 = vpow.pop %v390
      %v392 = vmul.f32 %v388, 1.442695
      %v393 = vpow.pop %v392
      %v394 = vmul.f32 %v389, 1.442695
      %v395 = vpow.pop %v394
      %v396 = vsel %vm201, %v391, 0.0
      %397 = vadd.xlane.f32.xlu0 %v396
      %v398 = vpop.xlane.xlu0 %397
      %v399 = vsel %vm201, %v393, 0.0
      %400 = vadd.xlane.f32.xlu0 %v399
      %v401 = vpop.xlane.xlu0 %400
      %v402 = vsel %vm208, %v395, 0.0
      %403 = vadd.xlane.f32.xlu0 %v402
      %v404 = vpop.xlane.xlu0 %403
      %v405 = vrcp.pop %v398
      %v406 = vrcp.pop %v401
      %v407 = vrcp.pop %v404
      %v408 = vmul.f32 %v391, %v405
      %v409 = vmul.f32 %v393, %v406
      %v410 = vmul.f32 %v395, %v407
      %v411 = vpack.c.bf16 %v409, %v408
      %v412 = vpack.c.bf16 %v410, %v410
      %413 = vrot.lane.b32.xlu0 %v244, 96
      %v414 = vpop.permute.xlu0 %413
      %415 = vrot.lane.b32.xlu0 %v245, 96
      %v416 = vpop.permute.xlu0 %415
      %v419 = vsel %vm201, %v411, 0
      %v422 = vsel %vm201, %v412, 0
      %v425 = vand.u32 %v416, %v255
      %427 = vmatprep.subr.bf16.mxu0 0
      %428 = vmatpush1.bf16.msra.mxu0 0
      %429 = vmatprep.subr.bf16.mxu0 0
      %430 = vmatpush1.bf16.msra.mxu0 0
      %431 = vmatprep.subr.bf16.mxu0 0
      %432 = vmatpush1.bf16.msra.mxu0 0
      %433 = vmatprep.subr.bf16.mxu0 0
      %434 = vmatpush1.bf16.msra.mxu0 0
      %435 = vmatprep.subr.bf16.mxu0 0
      %436 = vmatpush1.bf16.msra.mxu0 0
      %437 = vmatprep.subr.bf16.mxu0 0
      %438 = vmatpush1.bf16.msra.mxu0 0
      %439 = vmatprep.subr.bf16.mxu0 0
      %440 = vmatpush1.bf16.msra.mxu0 %v425
      %441 = vmatprep.subr.bf16.mxu0 0
      %442 = vmatpush1.bf16.msra.mxu0 %v414
      %443 = vmatprep.subr.bf16.mxu0 0
      %444 = vmatpush2.bf16.msra.mxu0 0
      %445 = vmatprep.subr.bf16.mxu0 0
      %446 = vmatpush2.bf16.msra.mxu0 0
      %447 = vmatprep.subr.bf16.mxu0 0
      %448 = vmatpush2.bf16.msra.mxu0 0
      %449 = vmatprep.subr.bf16.mxu0 0
      %450 = vmatpush2.bf16.msra.mxu0 0
      %451 = vmatprep.subr.bf16.mxu0 0
      %452 = vmatpush2.bf16.msra.mxu0 0
      %453 = vmatprep.subr.bf16.mxu0 0
      %454 = vmatpush2.bf16.msra.mxu0 0
      %455 = vmatprep.subr.bf16.mxu0 0
      %456 = vmatpush2.bf16.msra.mxu0 0
      %457 = vmatprep.subr.bf16.mxu0 0
      %458 = vmatpush2.bf16.msra.mxu0 0
      %459 = vmatprep.mubr.bf16.mxu0 0
      %460 = vmatmul.mubr.bf16.gmra.mxu0 %v419
      %v461 = vpop.f32.mrf.mxu0
      %v462 = vadd.f32 0.0, %v461
      %v463 = vpop.f32.mrf.mxu0
      %v464 = vpop.f32.mrf.mxu0
      %v465 = vadd.f32 0.0, %v464
      %v466 = vpop.f32.mrf.mxu0
      %467 = vmatprep.mubr.bf16.mxu0 0
      %468 = vmatmul.mubr.bf16.gmra.mxu0 %v422
      %v469 = vpop.f32.mrf.mxu0
      %v470 = vadd.f32 0.0, %v469
      %v471 = vpop.f32.mrf.mxu0
      %v472 = vpop.f32.mrf.mxu0
      %v473 = vpop.f32.mrf.mxu0
      %474 = vdwg.mxu0
      %475 = vrot.lane.b32.xlu0 %v130, 64
      %v476 = vpop.permute.xlu0 %475
      %477 = vrot.lane.b32.xlu0 %v131, 64
      %v478 = vpop.permute.xlu0 %477
      %479 = vrot.lane.b32.xlu0 %v135, 64
      %v480 = vpop.permute.xlu0 %479
      %481 = vrot.lane.b32.xlu0 %v136, 64
      %v482 = vpop.permute.xlu0 %481
      %v484 = vsel %vm137, %v476, 0
      %v487 = vsel %vm137, %v478, 0
      %v490 = vsel %vm137, %v480, 0
      %v493 = vsel %vm137, %v482, 0
      %495 = vmatprep.subr.bf16.mxu0 0
      %496 = vmatpush1.bf16.xpose.msra.mxu0 0
      %497 = vmatprep.subr.bf16.mxu0 0
      %498 = vmatpush1.bf16.xpose.msra.mxu0 0
      %499 = vmatprep.subr.bf16.mxu0 0
      %500 = vmatpush1.bf16.xpose.msra.mxu0 0
      %501 = vmatprep.subr.bf16.mxu0 0
      %502 = vmatpush1.bf16.xpose.msra.mxu0 0
      %503 = vmatprep.subr.bf16.mxu0 0
      %504 = vmatpush1.bf16.xpose.msra.mxu0 0
      %505 = vmatprep.subr.bf16.mxu0 0
      %506 = vmatpush1.bf16.xpose.msra.mxu0 0
      %507 = vmatprep.subr.bf16.mxu0 0
      %508 = vmatpush1.bf16.xpose.msra.mxu0 %v493
      %509 = vmatprep.subr.bf16.mxu0 0
      %510 = vmatpush1.bf16.xpose.msra.mxu0 %v490
      %511 = vmatprep.subr.bf16.mxu0 0
      %512 = vmatpush2.bf16.xpose.msra.mxu0 0
      %513 = vmatprep.subr.bf16.mxu0 0
      %514 = vmatpush2.bf16.xpose.msra.mxu0 0
      %515 = vmatprep.subr.bf16.mxu0 0
      %516 = vmatpush2.bf16.xpose.msra.mxu0 0
      %517 = vmatprep.subr.bf16.mxu0 0
      %518 = vmatpush2.bf16.xpose.msra.mxu0 0
      %519 = vmatprep.subr.bf16.mxu0 0
      %520 = vmatpush2.bf16.xpose.msra.mxu0 0
      %521 = vmatprep.subr.bf16.mxu0 0
      %522 = vmatpush2.bf16.xpose.msra.mxu0 0
      %523 = vmatprep.subr.bf16.mxu0 0
      %524 = vmatpush2.bf16.xpose.msra.mxu0 0
      %525 = vmatprep.subr.bf16.mxu0 0
      %526 = vmatpush2.bf16.xpose.msra.mxu0 0
      %527 = vmatprep.mubr.bf16.mxu0 0
      %528 = vmatmul.mubr.bf16.gmra.mxu0 %v484
      %v529 = vpop.f32.mrf.mxu0
      %v530 = vadd.f32 0.0, %v529
      %v531 = vpop.f32.mrf.mxu0
      %v532 = vpop.f32.mrf.mxu0
      %v533 = vadd.f32 0.0, %v532
      %v534 = vpop.f32.mrf.mxu0
      %535 = vmatprep.mubr.bf16.mxu0 0
      %536 = vmatmul.mubr.bf16.gmra.mxu0 %v487
      %v537 = vpop.f32.mrf.mxu0
      %v538 = vadd.f32 0.0, %v537
      %v539 = vpop.f32.mrf.mxu0
      %v540 = vpop.f32.mrf.mxu0
      %v541 = vpop.f32.mrf.mxu0
      %542 = vdwg.mxu0
      %v543 = vmul.f32 %v530, 0.17677669
      %v544 = vmul.f32 %v533, 0.17677669
      %v545 = vmul.f32 %v538, 0.17677669
      %v546 = vsel %vm201, %v543, -inf
      %547 = vmax.xlane.f32.xlu0 %v546
      %v548 = vpop.xlane.xlu0 %547
      %v549 = vsel %vm201, %v544, -inf
      %550 = vmax.xlane.f32.xlu0 %v549
      %v551 = vpop.xlane.xlu0 %550
      %v552 = vsel %vm208, %v545, -inf
      %553 = vmax.xlane.f32.xlu0 %v552
      %v554 = vpop.xlane.xlu0 %553
      %v555 = vsub.f32 %v543, %v548
      %v556 = vsub.f32 %v544, %v551
      %v557 = vsub.f32 %v545, %v554
      %v558 = vmul.f32 %v555, 1.442695
      %v559 = vpow.pop %v558
      %v560 = vmul.f32 %v556, 1.442695
      %v561 = vpow.pop %v560
      %v562 = vmul.f32 %v557, 1.442695
      %v563 = vpow.pop %v562
      %v564 = vsel %vm201, %v559, 0.0
      %565 = vadd.xlane.f32.xlu0 %v564
      %v566 = vpop.xlane.xlu0 %565
      %v567 = vsel %vm201, %v561, 0.0
      %568 = vadd.xlane.f32.xlu0 %v567
      %v569 = vpop.xlane.xlu0 %568
      %v570 = vsel %vm208, %v563, 0.0
      %571 = vadd.xlane.f32.xlu0 %v570
      %v572 = vpop.xlane.xlu0 %571
      %v573 = vrcp.pop %v566
      %v574 = vrcp.pop %v569
      %v575 = vrcp.pop %v572
      %v576 = vmul.f32 %v559, %v573
      %v577 = vmul.f32 %v561, %v574
      %v578 = vmul.f32 %v563, %v575
      %v579 = vpack.c.bf16 %v577, %v576
      %v580 = vpack.c.bf16 %v578, %v578
      %581 = vrot.lane.b32.xlu0 %v244, 64
      %v582 = vpop.permute.xlu0 %581
      %583 = vrot.lane.b32.xlu0 %v245, 64
      %v584 = vpop.permute.xlu0 %583
      %v587 = vsel %vm201, %v579, 0
      %v590 = vsel %vm201, %v580, 0
      %v593 = vand.u32 %v584, %v255
      %595 = vmatprep.subr.bf16.mxu0 0
      %596 = vmatpush1.bf16.msra.mxu0 0
      %597 = vmatprep.subr.bf16.mxu0 0
      %598 = vmatpush1.bf16.msra.mxu0 0
      %599 = vmatprep.subr.bf16.mxu0 0
      %600 = vmatpush1.bf16.msra.mxu0 0
      %601 = vmatprep.subr.bf16.mxu0 0
      %602 = vmatpush1.bf16.msra.mxu0 0
      %603 = vmatprep.subr.bf16.mxu0 0
      %604 = vmatpush1.bf16.msra.mxu0 0
      %605 = vmatprep.subr.bf16.mxu0 0
      %606 = vmatpush1.bf16.msra.mxu0 0
      %607 = vmatprep.subr.bf16.mxu0 0
      %608 = vmatpush1.bf16.msra.mxu0 %v593
      %609 = vmatprep.subr.bf16.mxu0 0
      %610 = vmatpush1.bf16.msra.mxu0 %v582
      %611 = vmatprep.subr.bf16.mxu0 0
      %612 = vmatpush2.bf16.msra.mxu0 0
      %613 = vmatprep.subr.bf16.mxu0 0
      %614 = vmatpush2.bf16.msra.mxu0 0
      %615 = vmatprep.subr.bf16.mxu0 0
      %616 = vmatpush2.bf16.msra.mxu0 0
      %617 = vmatprep.subr.bf16.mxu0 0
      %618 = vmatpush2.bf16.msra.mxu0 0
      %619 = vmatprep.subr.bf16.mxu0 0
      %620 = vmatpush2.bf16.msra.mxu0 0
      %621 = vmatprep.subr.bf16.mxu0 0
      %622 = vmatpush2.bf16.msra.mxu0 0
      %623 = vmatprep.subr.bf16.mxu0 0
      %624 = vmatpush2.bf16.msra.mxu0 0
      %625 = vmatprep.subr.bf16.mxu0 0
      %626 = vmatpush2.bf16.msra.mxu0 0
      %627 = vmatprep.mubr.bf16.mxu0 0
      %628 = vmatmul.mubr.bf16.gmra.mxu0 %v587
      %v629 = vpop.f32.mrf.mxu0
      %v630 = vadd.f32 0.0, %v629
      %v631 = vpop.f32.mrf.mxu0
      %v632 = vpop.f32.mrf.mxu0
      %v633 = vadd.f32 0.0, %v632
      %v634 = vpop.f32.mrf.mxu0
      %635 = vmatprep.mubr.bf16.mxu0 0
      %636 = vmatmul.mubr.bf16.gmra.mxu0 %v590
      %v637 = vpop.f32.mrf.mxu0
      %v638 = vadd.f32 0.0, %v637
      %v639 = vpop.f32.mrf.mxu0
      %v640 = vpop.f32.mrf.mxu0
      %v641 = vpop.f32.mrf.mxu0
      %642 = vdwg.mxu0
      %643 = vrot.lane.b32.xlu0 %v130, 32
      %v644 = vpop.permute.xlu0 %643
      %645 = vrot.lane.b32.xlu0 %v131, 32
      %v646 = vpop.permute.xlu0 %645
      %647 = vrot.lane.b32.xlu0 %v135, 32
      %v648 = vpop.permute.xlu0 %647
      %649 = vrot.lane.b32.xlu0 %v136, 32
      %v650 = vpop.permute.xlu0 %649
      %v652 = vsel %vm137, %v644, 0
      %v655 = vsel %vm137, %v646, 0
      %v658 = vsel %vm137, %v648, 0
      %v661 = vsel %vm137, %v650, 0
      %663 = vmatprep.subr.bf16.mxu0 0
      %664 = vmatpush1.bf16.xpose.msra.mxu0 0
      %665 = vmatprep.subr.bf16.mxu0 0
      %666 = vmatpush1.bf16.xpose.msra.mxu0 0
      %667 = vmatprep.subr.bf16.mxu0 0
      %668 = vmatpush1.bf16.xpose.msra.mxu0 0
      %669 = vmatprep.subr.bf16.mxu0 0
      %670 = vmatpush1.bf16.xpose.msra.mxu0 0
      %671 = vmatprep.subr.bf16.mxu0 0
      %672 = vmatpush1.bf16.xpose.msra.mxu0 0
      %673 = vmatprep.subr.bf16.mxu0 0
      %674 = vmatpush1.bf16.xpose.msra.mxu0 0
      %675 = vmatprep.subr.bf16.mxu0 0
      %676 = vmatpush1.bf16.xpose.msra.mxu0 %v661
      %677 = vmatprep.subr.bf16.mxu0 0
      %678 = vmatpush1.bf16.xpose.msra.mxu0 %v658
      %679 = vmatprep.subr.bf16.mxu0 0
      %680 = vmatpush2.bf16.xpose.msra.mxu0 0
      %681 = vmatprep.subr.bf16.mxu0 0
      %682 = vmatpush2.bf16.xpose.msra.mxu0 0
      %683 = vmatprep.subr.bf16.mxu0 0
      %684 = vmatpush2.bf16.xpose.msra.mxu0 0
      %685 = vmatprep.subr.bf16.mxu0 0
      %686 = vmatpush2.bf16.xpose.msra.mxu0 0
      %687 = vmatprep.subr.bf16.mxu0 0
      %688 = vmatpush2.bf16.xpose.msra.mxu0 0
      %689 = vmatprep.subr.bf16.mxu0 0
      %690 = vmatpush2.bf16.xpose.msra.mxu0 0
      %691 = vmatprep.subr.bf16.mxu0 0
      %692 = vmatpush2.bf16.xpose.msra.mxu0 0
      %693 = vmatprep.subr.bf16.mxu0 0
      %694 = vmatpush2.bf16.xpose.msra.mxu0 0
      %695 = vmatprep.mubr.bf16.mxu0 0
      %696 = vmatmul.mubr.bf16.gmra.mxu0 %v652
      %v697 = vpop.f32.mrf.mxu0
      %v698 = vadd.f32 0.0, %v697
      %v699 = vpop.f32.mrf.mxu0
      %v700 = vpop.f32.mrf.mxu0
      %v701 = vadd.f32 0.0, %v700
      %v702 = vpop.f32.mrf.mxu0
      %703 = vmatprep.mubr.bf16.mxu0 0
      %704 = vmatmul.mubr.bf16.gmra.mxu0 %v655
      %v705 = vpop.f32.mrf.mxu0
      %v706 = vadd.f32 0.0, %v705
      %v707 = vpop.f32.mrf.mxu0
      %v708 = vpop.f32.mrf.mxu0
      %v709 = vpop.f32.mrf.mxu0
      %710 = vdwg.mxu0
      %v711 = vmul.f32 %v698, 0.17677669
      %v712 = vmul.f32 %v701, 0.17677669
      %v713 = vmul.f32 %v706, 0.17677669
      %v714 = vsel %vm201, %v711, -inf
      %715 = vmax.xlane.f32.xlu0 %v714
      %v716 = vpop.xlane.xlu0 %715
      %v717 = vsel %vm201, %v712, -inf
      %718 = vmax.xlane.f32.xlu0 %v717
      %v719 = vpop.xlane.xlu0 %718
      %v720 = vsel %vm208, %v713, -inf
      %721 = vmax.xlane.f32.xlu0 %v720
      %v722 = vpop.xlane.xlu0 %721
      %v723 = vsub.f32 %v711, %v716
      %v724 = vsub.f32 %v712, %v719
      %v725 = vsub.f32 %v713, %v722
      %v726 = vmul.f32 %v723, 1.442695
      %v727 = vpow.pop %v726
      %v728 = vmul.f32 %v724, 1.442695
      %v729 = vpow.pop %v728
      %v730 = vmul.f32 %v725, 1.442695
      %v731 = vpow.pop %v730
      %v732 = vsel %vm201, %v727, 0.0
      %733 = vadd.xlane.f32.xlu0 %v732
      %v734 = vpop.xlane.xlu0 %733
      %v735 = vsel %vm201, %v729, 0.0
      %736 = vadd.xlane.f32.xlu0 %v735
      %v737 = vpop.xlane.xlu0 %736
      %v738 = vsel %vm208, %v731, 0.0
      %739 = vadd.xlane.f32.xlu0 %v738
      %v740 = vpop.xlane.xlu0 %739
      %v741 = vrcp.pop %v734
      %v742 = vrcp.pop %v737
      %v743 = vrcp.pop %v740
      %v744 = vmul.f32 %v727, %v741
      %v745 = vmul.f32 %v729, %v742
      %v746 = vmul.f32 %v731, %v743
      %v747 = vpack.c.bf16 %v745, %v744
      %v748 = vpack.c.bf16 %v746, %v746
      %749 = vrot.lane.b32.xlu0 %v244, 32
      %v750 = vpop.permute.xlu0 %749
      %751 = vrot.lane.b32.xlu0 %v245, 32
      %v752 = vpop.permute.xlu0 %751
      %v755 = vsel %vm201, %v747, 0
      %v758 = vsel %vm201, %v748, 0
      %v761 = vand.u32 %v752, %v255
      %763 = vmatprep.subr.bf16.mxu0 0
      %764 = vmatpush1.bf16.msra.mxu0 0
      %765 = vmatprep.subr.bf16.mxu0 0
      %766 = vmatpush1.bf16.msra.mxu0 0
      %767 = vmatprep.subr.bf16.mxu0 0
      %768 = vmatpush1.bf16.msra.mxu0 0
      %769 = vmatprep.subr.bf16.mxu0 0
      %770 = vmatpush1.bf16.msra.mxu0 0
      %771 = vmatprep.subr.bf16.mxu0 0
      %772 = vmatpush1.bf16.msra.mxu0 0
      %773 = vmatprep.subr.bf16.mxu0 0
      %774 = vmatpush1.bf16.msra.mxu0 0
      %775 = vmatprep.subr.bf16.mxu0 0
      %776 = vmatpush1.bf16.msra.mxu0 %v761
      %777 = vmatprep.subr.bf16.mxu0 0
      %778 = vmatpush1.bf16.msra.mxu0 %v750
      %779 = vmatprep.subr.bf16.mxu0 0
      %780 = vmatpush2.bf16.msra.mxu0 0
      %781 = vmatprep.subr.bf16.mxu0 0
      %782 = vmatpush2.bf16.msra.mxu0 0
      %783 = vmatprep.subr.bf16.mxu0 0
      %784 = vmatpush2.bf16.msra.mxu0 0
      %785 = vmatprep.subr.bf16.mxu0 0
      %786 = vmatpush2.bf16.msra.mxu0 0
      %787 = vmatprep.subr.bf16.mxu0 0
      %788 = vmatpush2.bf16.msra.mxu0 0
      %789 = vmatprep.subr.bf16.mxu0 0
      %790 = vmatpush2.bf16.msra.mxu0 0
      %791 = vmatprep.subr.bf16.mxu0 0
      %792 = vmatpush2.bf16.msra.mxu0 0
      %793 = vmatprep.subr.bf16.mxu0 0
      %794 = vmatpush2.bf16.msra.mxu0 0
      %795 = vmatprep.mubr.bf16.mxu0 0
      %796 = vmatmul.mubr.bf16.gmra.mxu0 %v755
      %v797 = vpop.f32.mrf.mxu0
      %v798 = vadd.f32 0.0, %v797
      %v799 = vpop.f32.mrf.mxu0
      %v800 = vpop.f32.mrf.mxu0
      %v801 = vadd.f32 0.0, %v800
      %v802 = vpop.f32.mrf.mxu0
      %803 = vmatprep.mubr.bf16.mxu0 0
      %804 = vmatmul.mubr.bf16.gmra.mxu0 %v758
      %v805 = vpop.f32.mrf.mxu0
      %v806 = vadd.f32 0.0, %v805
      %v807 = vpop.f32.mrf.mxu0
      %v808 = vpop.f32.mrf.mxu0
      %v809 = vpop.f32.mrf.mxu0
      %810 = vdwg.mxu0
      %814 = vrot.lane.b32.xlu0 %v462, 32
      %v815 = vpop.permute.xlu0 %814
      %816 = vrot.lane.b32.xlu0 %v465, 32
      %v817 = vpop.permute.xlu0 %816
      %818 = vrot.lane.b32.xlu0 %v470, 32
      %v819 = vpop.permute.xlu0 %818
      %826 = vrot.lane.b32.xlu0 %v630, 64
      %v827 = vpop.permute.xlu0 %826
      %828 = vrot.lane.b32.xlu0 %v633, 64
      %v829 = vpop.permute.xlu0 %828
      %830 = vrot.lane.b32.xlu0 %v638, 64
      %v831 = vpop.permute.xlu0 %830
      %838 = vrot.lane.b32.xlu0 %v798, 96
      %v839 = vpop.permute.xlu0 %838
      %840 = vrot.lane.b32.xlu0 %v801, 96
      %v841 = vpop.permute.xlu0 %840
      %842 = vrot.lane.b32.xlu0 %v806, 96
      %v843 = vpop.permute.xlu0 %842
      %v847 = vsel %vm137, %v294, %v815
      %v848 = vsel %vm137, %v297, %v817
      %v849 = vsel %vm137, %v302, %v819
      %vm850 = vcmask 523264
      %v851 = vsel %vm850, %v847, %v827
      %v852 = vsel %vm850, %v848, %v829
      %v853 = vsel %vm850, %v849, %v831
      %vm854 = vcmask 785408
      %v855 = vsel %vm854, %v851, %v839
      %v856 = vsel %vm854, %v852, %v841
      %v857 = vsel %vm854, %v853, %v843
      %v858 = vpack.c.bf16 %v856, %v855
      %v859 = vpack.c.bf16 %v857, %v857
      %v862 = vunpack.c.l.b16 %v858
      %v863 = vunpack.c.h.b16 %v858
      %v864 = vunpack.c.l.b16 %v859
      %v865 = vpack.c.b16 %v862, %v862
      %v866 = vpack.c.b16 %v863, %v863
      %v867 = vpack.c.b16 %v864, %v864
      %871 = vst [vmem:[%s116] sm:$0xf] %v865
      %872 = vst [vmem:[%s116 + $0x4] sm:$0xf] %v866
      %vm873 = vcmask 1040384
      %vm874 = vsmask.f32 256
      %vm875 = vmand %vm873, %vm874
      %v876 = vld [vmem:[%s116 + $0x8] sm:$0x1]
      %v877 = vsel %vm875, %v867, %v876
      %878 = vst [vmem:[%s116 + $0x8] sm:$0x1] %v877
      %p879 = scmp.lt.s32.totalorder %s12, 1
      %s880 = scalar_select %p879, %s12, 1
      %s881 = smul.addr %s880, 3
      %s882 = smul.addr %s881, 4
      %s883 = scalar_lea.vmem %s1, %s882
      // Predicated region
      $region25: #{vision_transformer_forward.20} parent=23 // pred_check
        %p884 = pneg %p56
      $region26: #{vision_transformer_forward.20} parent=23 // pred_check_branch
        %886 = sbr.rel (%p884) target = $region28
      $region27: #{vision_transformer_forward.20} parent=23 // pred_region
        _
      $region28: #{vision_transformer_forward.20} parent=23 // pred_fallthru
        _
    $region24: #{vision_transformer_forward.20} parent=5 // pred_fallthru
      _
    %p887 = scmp.le.s32.totalorder 2, %s7
    // Predicated region
    $region29: #{vision_transformer_forward.20} parent=5 // pred_check
      %p888 = pneg %p887
    $region30: #{vision_transformer_forward.20} parent=5 // pred_check_branch
      %890 = sbr.rel (%p888) target = $region32
    $region31: #{vision_transformer_forward.20} parent=5 // pred_region
      %s891 = ssub.s32 %s7, 2
      // Predicated region
      $region33: #{vision_transformer_forward.20} parent=31 // pred_check
        %p892 = pneg %p62
      $region34: #{vision_transformer_forward.20} parent=31 // pred_check_branch
        %894 = sbr.rel (%p892) target = $region36
      $region35: #{vision_transformer_forward.20} parent=31 // pred_region
        %p895 = scmp.lt.s32.totalorder %s13, 1
        %s896 = scalar_select %p895, %s13, 1
        %s897 = smul.addr %s896, 3
        %s898 = smul.addr %s897, 4
        %s899 = scalar_lea.vmem %s1, %s898
      $region36: #{vision_transformer_forward.20} parent=31 // pred_fallthru
        _
    $region32: #{vision_transformer_forward.20} parent=5 // pred_fallthru
      _
  $region6: #{vision_transformer_forward.20} parent=0 // loop_footer
    %s11 = sadd.s32 1, %s7
  $region7: #{vision_transformer_forward.20} parent=0 // loop_footer_branch
    %6 = sbr.rel target = $region3
  $region8: #{vision_transformer_forward.20} parent=0 // loop_exit
    _

// kernel: vision_transformer_forward.21
$region0: #{vision_transformer_forward.21}
  #allocation0 [shape = 'u32[]', space=smem, size = 0x4, offset = 0x4, fixed_abs, tag = 'smem constant byte address 0x4 - core index']
  #allocation1 [shape = 'u32[144,128]{1,0:T(1,128)}', space=vmem, size = 0x12000, scoped, tag = 'internal scratch']
  %s0 = inlined_call_operand.vmem [shape: bf16[48,128], index: 0, kind: input, shape index: {}]
  %s1 = inlined_call_operand.vmem [shape: bf16[128,128], index: 1, kind: input, shape index: {}]
  %s2 = inlined_call_operand.vmem [shape: f32[1,128], index: 2, kind: input, shape index: {}]
  %s3 = inlined_call_operand.vmem [shape: bf16[48,128], index: 3, kind: input, shape index: {}]
  %s4 = inlined_call_operand.vmem [shape: bf16[48,128], index: 4, kind: output, shape index: {}]
  %s5 = sld [smem:[#allocation0]]
  $region26: #{vision_transformer_forward.21} parent=0
    _
  %s7 = ssub.s32 1, %s5
  %s8 = scalar_select 0, %s7, %s5
  // Predicated region
  $region2: #{vision_transformer_forward.21} parent=0 // pred_check
    _
  $region3: #{vision_transformer_forward.21} parent=0 // pred_check_branch
    %10 = sbr.rel (0) target = $region5
  $region4: #{vision_transformer_forward.21} parent=0 // pred_region
    _
  $region5: #{vision_transformer_forward.21} parent=0 // pred_fallthru
    _
  // Predicated region
  $region6: #{vision_transformer_forward.21} parent=0 // pred_check
    _
  $region7: #{vision_transformer_forward.21} parent=0 // pred_check_branch
    %12 = sbr.rel (0) target = $region9
  $region8: #{vision_transformer_forward.21} parent=0 // pred_region
    _
  $region9: #{vision_transformer_forward.21} parent=0 // pred_fallthru
    _
  // Predicated region
  $region10: #{vision_transformer_forward.21} parent=0 // pred_check
    _
  $region11: #{vision_transformer_forward.21} parent=0 // pred_check_branch
    %14 = sbr.rel (0) target = $region13
  $region12: #{vision_transformer_forward.21} parent=0 // pred_region
    _
  $region13: #{vision_transformer_forward.21} parent=0 // pred_fallthru
    _
  // Predicated region
  $region14: #{vision_transformer_forward.21} parent=0 // pred_check
    _
  $region15: #{vision_transformer_forward.21} parent=0 // pred_check_branch
    %16 = sbr.rel (0) target = $region17
  $region16: #{vision_transformer_forward.21} parent=0 // pred_region
    _
  $region17: #{vision_transformer_forward.21} parent=0 // pred_fallthru
    _
  %v18 = vld [vmem:[%s0] sm:$0xf]
  %v19 = vld [vmem:[%s0 + $0x4] sm:$0xf]
  %v20 = vld [vmem:[%s0 + $0x8] sm:$0xf]
  %v21 = vld [vmem:[%s0 + $0xc] sm:$0xf]
  %v22 = vld [vmem:[%s0 + $0x10] sm:$0xf]
  %v23 = vld [vmem:[%s0 + $0x14] sm:$0xf]
  %v24 = vld [vmem:[%s1] sm:$0xf]
  %v25 = vld [vmem:[%s1 + $0x4] sm:$0xf]
  %v26 = vld [vmem:[%s1 + $0x8] sm:$0xf]
  %v27 = vld [vmem:[%s1 + $0xc] sm:$0xf]
  %v28 = vld [vmem:[%s1 + $0x10] sm:$0xf]
  %v29 = vld [vmem:[%s1 + $0x14] sm:$0xf]
  %v30 = vld [vmem:[%s1 + $0x18] sm:$0xf]
  %v31 = vld [vmem:[%s1 + $0x1c] sm:$0xf]
  %v32 = vld [vmem:[%s1 + $0x20] sm:$0xf]
  %v33 = vld [vmem:[%s1 + $0x24] sm:$0xf]
  %v34 = vld [vmem:[%s1 + $0x28] sm:$0xf]
  %v35 = vld [vmem:[%s1 + $0x2c] sm:$0xf]
  %v36 = vld [vmem:[%s1 + $0x30] sm:$0xf]
  %v37 = vld [vmem:[%s1 + $0x34] sm:$0xf]
  %v38 = vld [vmem:[%s1 + $0x38] sm:$0xf]
  %v39 = vld [vmem:[%s1 + $0x3c] sm:$0xf]
  %v40 = vld [vmem:[%s2] sm:$0x1]
  %v42 = vlaneseq
  %v43 = vshrl.u32 %v42, 7
  %v44 = vsub.s32 0, %v43
  %v45 = vrot.slane %v40, %v44
  %v53 = vunpack.c.l.b16 %v18
  %v54 = vunpack.c.l.b16 %v19
  %v55 = vunpack.c.l.b16 %v20
  %v56 = vunpack.c.l.b16 %v21
  %v57 = vunpack.c.l.b16 %v22
  %v58 = vunpack.c.l.b16 %v23
  %v59 = vpack.c.b16 %v54, %v53
  %v60 = vpack.c.b16 %v56, %v55
  %v61 = vpack.c.b16 %v58, %v57
  %v81 = vunpack.c.l.b16 %v24
  %v82 = vunpack.c.l.b16 %v25
  %v83 = vunpack.c.l.b16 %v26
  %v84 = vunpack.c.l.b16 %v27
  %v85 = vunpack.c.l.b16 %v28
  %v86 = vunpack.c.l.b16 %v29
  %v87 = vunpack.c.l.b16 %v30
  %v88 = vunpack.c.l.b16 %v31
  %v89 = vunpack.c.l.b16 %v32
  %v90 = vunpack.c.l.b16 %v33
  %v91 = vunpack.c.l.b16 %v34
  %v92 = vunpack.c.l.b16 %v35
  %v93 = vunpack.c.l.b16 %v36
  %v94 = vunpack.c.l.b16 %v37
  %v95 = vunpack.c.l.b16 %v38
  %v96 = vunpack.c.l.b16 %v39
  %v97 = vpack.c.b16 %v82, %v81
  %v98 = vpack.c.b16 %v84, %v83
  %v99 = vpack.c.b16 %v86, %v85
  %v100 = vpack.c.b16 %v88, %v87
  %v101 = vpack.c.b16 %v90, %v89
  %v102 = vpack.c.b16 %v92, %v91
  %v103 = vpack.c.b16 %v94, %v93
  %v104 = vpack.c.b16 %v96, %v95
  %113 = vmatprep.subr.bf16.mxu0 0
  %114 = vmatpush1.bf16.msra.mxu0 %v104
  %115 = vmatprep.subr.bf16.mxu0 0
  %116 = vmatpush1.bf16.msra.mxu0 %v103
  %117 = vmatprep.subr.bf16.mxu0 0
  %118 = vmatpush1.bf16.msra.mxu0 %v102
  %119 = vmatprep.subr.bf16.mxu0 0
  %120 = vmatpush1.bf16.msra.mxu0 %v101
  %121 = vmatprep.subr.bf16.mxu0 0
  %122 = vmatpush1.bf16.msra.mxu0 %v100
  %123 = vmatprep.subr.bf16.mxu0 0
  %124 = vmatpush1.bf16.msra.mxu0 %v99
  %125 = vmatprep.subr.bf16.mxu0 0
  %126 = vmatpush1.bf16.msra.mxu0 %v98
  %127 = vmatprep.subr.bf16.mxu0 0
  %128 = vmatpush1.bf16.msra.mxu0 %v97
  %129 = vmatprep.subr.bf16.mxu0 0
  %130 = vmatpush2.bf16.msra.mxu0 0
  %131 = vmatprep.subr.bf16.mxu0 0
  %132 = vmatpush2.bf16.msra.mxu0 0
  %133 = vmatprep.subr.bf16.mxu0 0
  %134 = vmatpush2.bf16.msra.mxu0 0
  %135 = vmatprep.subr.bf16.mxu0 0
  %136 = vmatpush2.bf16.msra.mxu0 0
  %137 = vmatprep.subr.bf16.mxu0 0
  %138 = vmatpush2.bf16.msra.mxu0 0
  %139 = vmatprep.subr.bf16.mxu0 0
  %140 = vmatpush2.bf16.msra.mxu0 0
  %141 = vmatprep.subr.bf16.mxu0 0
  %142 = vmatpush2.bf16.msra.mxu0 0
  %143 = vmatprep.subr.bf16.mxu0 0
  %144 = vmatpush2.bf16.msra.mxu0 0
  %145 = vmatprep.mubr.bf16.mxu0 0
  %146 = vmatmul.mubr.bf16.gmra.mxu0 %v59
  %v147 = vpop.f32.mrf.mxu0
  %v148 = vadd.f32 %v45, %v147
  %v149 = vpop.f32.mrf.mxu0
  %v150 = vpop.f32.mrf.mxu0
  %v151 = vadd.f32 %v45, %v150
  %v152 = vpop.f32.mrf.mxu0
  %153 = vmatprep.mubr.bf16.mxu0 0
  %154 = vmatmul.mubr.bf16.gmra.mxu0 %v60
  %v155 = vpop.f32.mrf.mxu0
  %v156 = vadd.f32 %v45, %v155
  %v157 = vpop.f32.mrf.mxu0
  %v158 = vpop.f32.mrf.mxu0
  %v159 = vadd.f32 %v45, %v158
  %v160 = vpop.f32.mrf.mxu0
  %161 = vmatprep.mubr.bf16.mxu0 0
  %162 = vmatmul.mubr.bf16.gmra.mxu0 %v61
  %v163 = vpop.f32.mrf.mxu0
  %v164 = vadd.f32 %v45, %v163
  %v165 = vpop.f32.mrf.mxu0
  %v166 = vpop.f32.mrf.mxu0
  %v167 = vadd.f32 %v45, %v166
  %v168 = vpop.f32.mrf.mxu0
  %169 = vdwg.mxu0
  %v170 = vld [vmem:[%s3] sm:$0xf]
  %v171 = vld [vmem:[%s3 + $0x4] sm:$0xf]
  %v172 = vld [vmem:[%s3 + $0x8] sm:$0xf]
  %v173 = vld [vmem:[%s3 + $0xc] sm:$0xf]
  %v174 = vld [vmem:[%s3 + $0x10] sm:$0xf]
  %v175 = vld [vmem:[%s3 + $0x14] sm:$0xf]
  %v176 = vunpack.c.l.bf16 %v170
  %v177 = vunpack.c.l.bf16 %v171
  %v178 = vunpack.c.l.bf16 %v172
  %v179 = vunpack.c.l.bf16 %v173
  %v180 = vunpack.c.l.bf16 %v174
  %v181 = vunpack.c.l.bf16 %v175
  %v182 = vadd.f32 %v148, %v176
  %v183 = vadd.f32 %v151, %v177
  %v184 = vadd.f32 %v156, %v178
  %v185 = vadd.f32 %v159, %v179
  %v186 = vadd.f32 %v164, %v180
  %v187 = vadd.f32 %v167, %v181
  %v188 = vpack.c.bf16 %v183, %v182
  %v189 = vpack.c.bf16 %v185, %v184
  %v190 = vpack.c.bf16 %v187, %v186
  %v194 = vunpack.c.l.b16 %v188
  %v195 = vunpack.c.h.b16 %v188
  %v196 = vunpack.c.l.b16 %v189
  %v197 = vunpack.c.h.b16 %v189
  %v198 = vunpack.c.l.b16 %v190
  %v199 = vunpack.c.h.b16 %v190
  %v200 = vpack.c.b16 %v194, %v194
  %v201 = vpack.c.b16 %v195, %v195
  %v202 = vpack.c.b16 %v196, %v196
  %v203 = vpack.c.b16 %v197, %v197
  %v204 = vpack.c.b16 %v198, %v198
  %v205 = vpack.c.b16 %v199, %v199
  %212 = vst [vmem:[%s4] sm:$0xf] %v200
  %213 = vst [vmem:[%s4 + $0x4] sm:$0xf] %v201
  %214 = vst [vmem:[%s4 + $0x8] sm:$0xf] %v202
  %215 = vst [vmem:[%s4 + $0xc] sm:$0xf] %v203
  %216 = vst [vmem:[%s4 + $0x10] sm:$0xf] %v204
  %217 = vst [vmem:[%s4 + $0x14] sm:$0xf] %v205
  // Predicated region
  $region18: #{vision_transformer_forward.21} parent=0 // pred_check
    _
  $region19: #{vision_transformer_forward.21} parent=0 // pred_check_branch
    %219 = sbr.rel (0) target = $region21
  $region20: #{vision_transformer_forward.21} parent=0 // pred_region
    _
  $region21: #{vision_transformer_forward.21} parent=0 // pred_fallthru
    _
  // Predicated region
  $region22: #{vision_transformer_forward.21} parent=0 // pred_check
    _
  $region23: #{vision_transformer_forward.21} parent=0 // pred_check_branch
    %221 = sbr.rel (0) target = $region25
  $region24: #{vision_transformer_forward.21} parent=0 // pred_region
    _
  $region25: #{vision_transformer_forward.21} parent=0 // pred_fallthru
    _

// kernel: vision_transformer_forward.22
$region0: #{vision_transformer_forward.22}
  #allocation0 [shape = 'u32[]', space=smem, size = 0x4, offset = 0x4, fixed_abs, tag = 'smem constant byte address 0x4 - core index']
  #allocation1 [shape = 'u32[144,128]{1,0:T(1,128)}', space=vmem, size = 0x12000, scoped, tag = 'internal scratch']
  %s0 = inlined_call_operand.vmem [shape: bf16[48,128], index: 0, kind: input, shape index: {}]
  %s1 = inlined_call_operand.vmem [shape: bf16[128,512], index: 1, kind: input, shape index: {}]
  %s2 = inlined_call_operand.vmem [shape: f32[1,128], index: 2, kind: input, shape index: {}]
  %s3 = inlined_call_operand.vmem [shape: f32[1,128], index: 3, kind: input, shape index: {}]
  %s4 = inlined_call_operand.vmem [shape: f32[1,512], index: 4, kind: input, shape index: {}]
  %s5 = inlined_call_operand.vmem [shape: bf16[48,512], index: 5, kind: output, shape index: {}]
  %s6 = sld [smem:[#allocation0]]
  $region30: #{vision_transformer_forward.22} parent=0
    _
  %s8 = ssub.s32 1, %s6
  %s9 = scalar_select 0, %s8, %s6
  // Predicated region
  $region2: #{vision_transformer_forward.22} parent=0 // pred_check
    _
  $region3: #{vision_transformer_forward.22} parent=0 // pred_check_branch
    %11 = sbr.rel (0) target = $region5
  $region4: #{vision_transformer_forward.22} parent=0 // pred_region
    _
  $region5: #{vision_transformer_forward.22} parent=0 // pred_fallthru
    _
  // Predicated region
  $region6: #{vision_transformer_forward.22} parent=0 // pred_check
    _
  $region7: #{vision_transformer_forward.22} parent=0 // pred_check_branch
    %13 = sbr.rel (0) target = $region9
  $region8: #{vision_transformer_forward.22} parent=0 // pred_region
    _
  $region9: #{vision_transformer_forward.22} parent=0 // pred_fallthru
    _
  // Predicated region
  $region10: #{vision_transformer_forward.22} parent=0 // pred_check
    _
  $region11: #{vision_transformer_forward.22} parent=0 // pred_check_branch
    %15 = sbr.rel (0) target = $region13
  $region12: #{vision_transformer_forward.22} parent=0 // pred_region
    _
  $region13: #{vision_transformer_forward.22} parent=0 // pred_fallthru
    _
  // Predicated region
  $region14: #{vision_transformer_forward.22} parent=0 // pred_check
    _
  $region15: #{vision_transformer_forward.22} parent=0 // pred_check_branch
    %17 = sbr.rel (0) target = $region17
  $region16: #{vision_transformer_forward.22} parent=0 // pred_region
    _
  $region17: #{vision_transformer_forward.22} parent=0 // pred_fallthru
    _
  // Predicated region
  $region18: #{vision_transformer_forward.22} parent=0 // pred_check
    _
  $region19: #{vision_transformer_forward.22} parent=0 // pred_check_branch
    %19 = sbr.rel (0) target = $region21
  $region20: #{vision_transformer_forward.22} parent=0 // pred_region
    _
  $region21: #{vision_transformer_forward.22} parent=0 // pred_fallthru
    _
  %v21 = vld [vmem:[%s0] sm:$0xf]
  %v22 = vld [vmem:[%s0 + $0x4] sm:$0xf]
  %v23 = vld [vmem:[%s0 + $0x8] sm:$0xf]
  %v24 = vld [vmem:[%s0 + $0xc] sm:$0xf]
  %v25 = vld [vmem:[%s0 + $0x10] sm:$0xf]
  %v26 = vld [vmem:[%s0 + $0x14] sm:$0xf]
  %v27 = vunpack.c.l.bf16 %v21
  %v28 = vunpack.c.l.bf16 %v22
  %v29 = vunpack.c.l.bf16 %v23
  %v30 = vunpack.c.l.bf16 %v24
  %v31 = vunpack.c.l.bf16 %v25
  %v32 = vunpack.c.l.bf16 %v26
  %33 = vadd.xlane.f32.xlu0 %v27
  %v34 = vpop.xlane.xlu0 %33
  %35 = vadd.xlane.f32.xlu0 %v28
  %v36 = vpop.xlane.xlu0 %35
  %37 = vadd.xlane.f32.xlu0 %v29
  %v38 = vpop.xlane.xlu0 %37
  %39 = vadd.xlane.f32.xlu0 %v30
  %v40 = vpop.xlane.xlu0 %39
  %41 = vadd.xlane.f32.xlu0 %v31
  %v42 = vpop.xlane.xlu0 %41
  %43 = vadd.xlane.f32.xlu0 %v32
  %v44 = vpop.xlane.xlu0 %43
  %v45 = vrcp.pop 128.0
  %v46 = vmul.f32 %v34, %v45
  %v47 = vmul.f32 %v36, %v45
  %v48 = vmul.f32 %v38, %v45
  %v49 = vmul.f32 %v40, %v45
  %v50 = vmul.f32 %v42, %v45
  %v51 = vmul.f32 %v44, %v45
  %v52 = vsub.f32 %v27, %v46
  %v53 = vsub.f32 %v28, %v47
  %v54 = vsub.f32 %v29, %v48
  %v55 = vsub.f32 %v30, %v49
  %v56 = vsub.f32 %v31, %v50
  %v57 = vsub.f32 %v32, %v51
  %v58 = vmul.f32 %v52, %v52
  %v59 = vmul.f32 %v53, %v53
  %v60 = vmul.f32 %v54, %v54
  %v61 = vmul.f32 %v55, %v55
  %v62 = vmul.f32 %v56, %v56
  %v63 = vmul.f32 %v57, %v57
  %64 = vadd.xlane.f32.xlu0 %v58
  %v65 = vpop.xlane.xlu0 %64
  %66 = vadd.xlane.f32.xlu0 %v59
  %v67 = vpop.xlane.xlu0 %66
  %68 = vadd.xlane.f32.xlu0 %v60
  %v69 = vpop.xlane.xlu0 %68
  %70 = vadd.xlane.f32.xlu0 %v61
  %v71 = vpop.xlane.xlu0 %70
  %72 = vadd.xlane.f32.xlu0 %v62
  %v73 = vpop.xlane.xlu0 %72
  %74 = vadd.xlane.f32.xlu0 %v63
  %v75 = vpop.xlane.xlu0 %74
  %v76 = vmul.f32 %v65, %v45
  %v77 = vmul.f32 %v67, %v45
  %v78 = vmul.f32 %v69, %v45
  %v79 = vmul.f32 %v71, %v45
  %v80 = vmul.f32 %v73, %v45
  %v81 = vmul.f32 %v75, %v45
  %v82 = vadd.f32 %v76, 1e-05
  %v83 = vadd.f32 %v77, 1e-05
  %v84 = vadd.f32 %v78, 1e-05
  %v85 = vadd.f32 %v79, 1e-05
  %v86 = vadd.f32 %v80, 1e-05
  %v87 = vadd.f32 %v81, 1e-05
  %v88 = vrsqrt.pop %v82
  %v89 = vrsqrt.pop %v83
  %v90 = vrsqrt.pop %v84
  %v91 = vrsqrt.pop %v85
  %v92 = vrsqrt.pop %v86
  %v93 = vrsqrt.pop %v87
  %v94 = vmul.f32 %v52, %v88
  %v95 = vmul.f32 %v53, %v89
  %v96 = vmul.f32 %v54, %v90
  %v97 = vmul.f32 %v55, %v91
  %v98 = vmul.f32 %v56, %v92
  %v99 = vmul.f32 %v57, %v93
  %v100 = vld [vmem:[%s2] sm:$0x1]
  %v102 = vlaneseq
  %v103 = vshrl.u32 %v102, 7
  %v104 = vsub.s32 0, %v103
  %v105 = vrot.slane %v100, %v104
  %v107 = vmul.f32 %v94, %v105
  %v108 = vmul.f32 %v95, %v105
  %v109 = vmul.f32 %v96, %v105
  %v110 = vmul.f32 %v97, %v105
  %v111 = vmul.f32 %v98, %v105
  %v112 = vmul.f32 %v99, %v105
  %v113 = vld [vmem:[%s3] sm:$0x1]
  %v115 = vlaneseq
  %v116 = vshrl.u32 %v115, 7
  %v117 = vsub.s32 0, %v116
  %v118 = vrot.slane %v113, %v117
  %v120 = vadd.f32 %v107, %v118
  %v121 = vadd.f32 %v108, %v118
  %v122 = vadd.f32 %v109, %v118
  %v123 = vadd.f32 %v110, %v118
  %v124 = vadd.f32 %v111, %v118
  %v125 = vadd.f32 %v112, %v118
  %v126 = vpack.c.bf16 %v121, %v120
  %v127 = vpack.c.bf16 %v123, %v122
  %v128 = vpack.c.bf16 %v125, %v124
  %v129 = vld [vmem:[%s1] sm:$0xff]
  %v130 = vld [vmem:[%s1 + $0x8] sm:$0xff]
  %v131 = vld [vmem:[%s1 + $0x10] sm:$0xff]
  %v132 = vld [vmem:[%s1 + $0x18] sm:$0xff]
  %v133 = vld [vmem:[%s1 + $0x20] sm:$0xff]
  %v134 = vld [vmem:[%s1 + $0x28] sm:$0xff]
  %v135 = vld [vmem:[%s1 + $0x30] sm:$0xff]
  %v136 = vld [vmem:[%s1 + $0x38] sm:$0xff]
  %v137 = vld [vmem:[%s1 + $0x40] sm:$0xff]
  %v138 = vld [vmem:[%s1 + $0x48] sm:$0xff]
  %v139 = vld [vmem:[%s1 + $0x50] sm:$0xff]
  %v140 = vld [vmem:[%s1 + $0x58] sm:$0xff]
  %v141 = vld [vmem:[%s1 + $0x60] sm:$0xff]
  %v142 = vld [vmem:[%s1 + $0x68] sm:$0xff]
  %v143 = vld [vmem:[%s1 + $0x70] sm:$0xff]
  %v144 = vld [vmem:[%s1 + $0x78] sm:$0xff]
  %v145 = vld [vmem:[%s1 + $0x80] sm:$0xff]
  %v146 = vld [vmem:[%s1 + $0x88] sm:$0xff]
  %v147 = vld [vmem:[%s1 + $0x90] sm:$0xff]
  %v148 = vld [vmem:[%s1 + $0x98] sm:$0xff]
  %v149 = vld [vmem:[%s1 + $0xa0] sm:$0xff]
  %v150 = vld [vmem:[%s1 + $0xa8] sm:$0xff]
  %v151 = vld [vmem:[%s1 + $0xb0] sm:$0xff]
  %v152 = vld [vmem:[%s1 + $0xb8] sm:$0xff]
  %v153 = vld [vmem:[%s1 + $0xc0] sm:$0xff]
  %v154 = vld [vmem:[%s1 + $0xc8] sm:$0xff]
  %v155 = vld [vmem:[%s1 + $0xd0] sm:$0xff]
  %v156 = vld [vmem:[%s1 + $0xd8] sm:$0xff]
  %v157 = vld [vmem:[%s1 + $0xe0] sm:$0xff]
  %v158 = vld [vmem:[%s1 + $0xe8] sm:$0xff]
  %v159 = vld [vmem:[%s1 + $0xf0] sm:$0xff]
  %v160 = vld [vmem:[%s1 + $0xf8] sm:$0xff]
  %v161 = vld [vmem:[%s4] sm:$0xf]
  %v163 = vlaneseq
  %v164 = vshrl.u32 %v163, 7
  %v165 = vsub.s32 0, %v164
  %v166 = vrot.slane %v161, %v165
  %v167 = vlaneseq
  %v168 = vshrl.u32 %v167, 7
  %v169 = vsub.s32 1, %v168
  %v170 = vrot.slane %v161, %v169
  %v171 = vlaneseq
  %v172 = vshrl.u32 %v171, 7
  %v173 = vsub.s32 2, %v172
  %v174 = vrot.slane %v161, %v173
  %v175 = vlaneseq
  %v176 = vshrl.u32 %v175, 7
  %v177 = vsub.s32 3, %v176
  %v178 = vrot.slane %v161, %v177
  %v215 = vunpack.c.l.b16 %v129
  %v216 = vunpack.c.h.b16 %v129
  %v217 = vunpack.c.l.b16 %v130
  %v218 = vunpack.c.h.b16 %v130
  %v219 = vunpack.c.l.b16 %v131
  %v220 = vunpack.c.h.b16 %v131
  %v221 = vunpack.c.l.b16 %v132
  %v222 = vunpack.c.h.b16 %v132
  %v223 = vunpack.c.l.b16 %v133
  %v224 = vunpack.c.h.b16 %v133
  %v225 = vunpack.c.l.b16 %v134
  %v226 = vunpack.c.h.b16 %v134
  %v227 = vunpack.c.l.b16 %v135
  %v228 = vunpack.c.h.b16 %v135
  %v229 = vunpack.c.l.b16 %v136
  %v230 = vunpack.c.h.b16 %v136
  %v231 = vunpack.c.l.b16 %v137
  %v232 = vunpack.c.h.b16 %v137
  %v233 = vunpack.c.l.b16 %v138
  %v234 = vunpack.c.h.b16 %v138
  %v235 = vunpack.c.l.b16 %v139
  %v236 = vunpack.c.h.b16 %v139
  %v237 = vunpack.c.l.b16 %v140
  %v238 = vunpack.c.h.b16 %v140
  %v239 = vunpack.c.l.b16 %v141
  %v240 = vunpack.c.h.b16 %v141
  %v241 = vunpack.c.l.b16 %v142
  %v242 = vunpack.c.h.b16 %v142
  %v243 = vunpack.c.l.b16 %v143
  %v244 = vunpack.c.h.b16 %v143
  %v245 = vunpack.c.l.b16 %v144
  %v246 = vunpack.c.h.b16 %v144
  %v247 = vunpack.c.l.b16 %v145
  %v248 = vunpack.c.h.b16 %v145
  %v249 = vunpack.c.l.b16 %v146
  %v250 = vunpack.c.h.b16 %v146
  %v251 = vunpack.c.l.b16 %v147
  %v252 = vunpack.c.h.b16 %v147
  %v253 = vunpack.c.l.b16 %v148
  %v254 = vunpack.c.h.b16 %v148
  %v255 = vunpack.c.l.b16 %v149
  %v256 = vunpack.c.h.b16 %v149
  %v257 = vunpack.c.l.b16 %v150
  %v258 = vunpack.c.h.b16 %v150
  %v259 = vunpack.c.l.b16 %v151
  %v260 = vunpack.c.h.b16 %v151
  %v261 = vunpack.c.l.b16 %v152
  %v262 = vunpack.c.h.b16 %v152
  %v263 = vunpack.c.l.b16 %v153
  %v264 = vunpack.c.h.b16 %v153
  %v265 = vunpack.c.l.b16 %v154
  %v266 = vunpack.c.h.b16 %v154
  %v267 = vunpack.c.l.b16 %v155
  %v268 = vunpack.c.h.b16 %v155
  %v269 = vunpack.c.l.b16 %v156
  %v270 = vunpack.c.h.b16 %v156
  %v271 = vunpack.c.l.b16 %v157
  %v272 = vunpack.c.h.b16 %v157
  %v273 = vunpack.c.l.b16 %v158
  %v274 = vunpack.c.h.b16 %v158
  %v275 = vunpack.c.l.b16 %v159
  %v276 = vunpack.c.h.b16 %v159
  %v277 = vunpack.c.l.b16 %v160
  %v278 = vunpack.c.h.b16 %v160
  %v279 = vpack.c.b16 %v219, %v215
  %v280 = vpack.c.b16 %v220, %v216
  %v281 = vpack.c.b16 %v221, %v217
  %v282 = vpack.c.b16 %v222, %v218
  %v283 = vpack.c.b16 %v227, %v223
  %v284 = vpack.c.b16 %v228, %v224
  %v285 = vpack.c.b16 %v229, %v225
  %v286 = vpack.c.b16 %v230, %v226
  %v287 = vpack.c.b16 %v235, %v231
  %v288 = vpack.c.b16 %v236, %v232
  %v289 = vpack.c.b16 %v237, %v233
  %v290 = vpack.c.b16 %v238, %v234
  %v291 = vpack.c.b16 %v243, %v239
  %v292 = vpack.c.b16 %v244, %v240
  %v293 = vpack.c.b16 %v245, %v241
  %v294 = vpack.c.b16 %v246, %v242
  %v295 = vpack.c.b16 %v251, %v247
  %v296 = vpack.c.b16 %v252, %v248
  %v297 = vpack.c.b16 %v253, %v249
  %v298 = vpack.c.b16 %v254, %v250
  %v299 = vpack.c.b16 %v259, %v255
  %v300 = vpack.c.b16 %v260, %v256
  %v301 = vpack.c.b16 %v261, %v257
  %v302 = vpack.c.b16 %v262, %v258
  %v303 = vpack.c.b16 %v267, %v263
  %v304 = vpack.c.b16 %v268, %v264
  %v305 = vpack.c.b16 %v269, %v265
  %v306 = vpack.c.b16 %v270, %v266
  %v307 = vpack.c.b16 %v275, %v271
  %v308 = vpack.c.b16 %v276, %v272
  %v309 = vpack.c.b16 %v277, %v273
  %v310 = vpack.c.b16 %v278, %v274
  %343 = vmatprep.subr.bf16.mxu0 %v308
  %344 = vmatpush1.bf16.msra.mxu0 %v307
  %345 = vmatprep.subr.bf16.mxu0 %v304
  %346 = vmatpush1.bf16.msra.mxu0 %v303
  %347 = vmatprep.subr.bf16.mxu0 %v300
  %348 = vmatpush1.bf16.msra.mxu0 %v299
  %349 = vmatprep.subr.bf16.mxu0 %v296
  %350 = vmatpush1.bf16.msra.mxu0 %v295
  %351 = vmatprep.subr.bf16.mxu0 %v292
  %352 = vmatpush1.bf16.msra.mxu0 %v291
  %353 = vmatprep.subr.bf16.mxu0 %v288
  %354 = vmatpush1.bf16.msra.mxu0 %v287
  %355 = vmatprep.subr.bf16.mxu0 %v284
  %356 = vmatpush1.bf16.msra.mxu0 %v283
  %357 = vmatprep.subr.bf16.mxu0 %v280
  %358 = vmatpush1.bf16.msra.mxu0 %v279
  %359 = vmatprep.subr.bf16.mxu0 0
  %360 = vmatpush2.bf16.msra.mxu0 0
  %361 = vmatprep.subr.bf16.mxu0 0
  %362 = vmatpush2.bf16.msra.mxu0 0
  %363 = vmatprep.subr.bf16.mxu0 0
  %364 = vmatpush2.bf16.msra.mxu0 0
  %365 = vmatprep.subr.bf16.mxu0 0
  %366 = vmatpush2.bf16.msra.mxu0 0
  %367 = vmatprep.subr.bf16.mxu0 0
  %368 = vmatpush2.bf16.msra.mxu0 0
  %369 = vmatprep.subr.bf16.mxu0 0
  %370 = vmatpush2.bf16.msra.mxu0 0
  %371 = vmatprep.subr.bf16.mxu0 0
  %372 = vmatpush2.bf16.msra.mxu0 0
  %373 = vmatprep.subr.bf16.mxu0 0
  %374 = vmatpush2.bf16.msra.mxu0 0
  %375 = vmatprep.mubr.bf16.mxu0 0
  %376 = vmatmul.mubr.bf16.gmra.mxu0 %v126
  %v377 = vpop.f32.mrf.mxu0
  %v378 = vadd.f32 %v166, %v377
  %v379 = vpop.f32.mrf.mxu0
  %v380 = vadd.f32 %v170, %v379
  %v381 = vpop.f32.mrf.mxu0
  %v382 = vadd.f32 %v166, %v381
  %v383 = vpop.f32.mrf.mxu0
  %v384 = vadd.f32 %v170, %v383
  %385 = vmatprep.mubr.bf16.mxu0 0
  %386 = vmatmul.mubr.bf16.gmra.mxu0 %v127
  %v387 = vpop.f32.mrf.mxu0
  %v388 = vadd.f32 %v166, %v387
  %v389 = vpop.f32.mrf.mxu0
  %v390 = vadd.f32 %v170, %v389
  %v391 = vpop.f32.mrf.mxu0
  %v392 = vadd.f32 %v166, %v391
  %v393 = vpop.f32.mrf.mxu0
  %v394 = vadd.f32 %v170, %v393
  %395 = vmatprep.mubr.bf16.mxu0 0
  %396 = vmatmul.mubr.bf16.gmra.mxu0 %v128
  %v397 = vpop.f32.mrf.mxu0
  %v398 = vadd.f32 %v166, %v397
  %v399 = vpop.f32.mrf.mxu0
  %v400 = vadd.f32 %v170, %v399
  %v401 = vpop.f32.mrf.mxu0
  %v402 = vadd.f32 %v166, %v401
  %v403 = vpop.f32.mrf.mxu0
  %v404 = vadd.f32 %v170, %v403
  %405 = vdwg.mxu0
  %406 = vmatprep.subr.bf16.mxu0 %v310
  %407 = vmatpush1.bf16.msra.mxu0 %v309
  %408 = vmatprep.subr.bf16.mxu0 %v306
  %409 = vmatpush1.bf16.msra.mxu0 %v305
  %410 = vmatprep.subr.bf16.mxu0 %v302
  %411 = vmatpush1.bf16.msra.mxu0 %v301
  %412 = vmatprep.subr.bf16.mxu0 %v298
  %413 = vmatpush1.bf16.msra.mxu0 %v297
  %414 = vmatprep.subr.bf16.mxu0 %v294
  %415 = vmatpush1.bf16.msra.mxu0 %v293
  %416 = vmatprep.subr.bf16.mxu0 %v290
  %417 = vmatpush1.bf16.msra.mxu0 %v289
  %418 = vmatprep.subr.bf16.mxu0 %v286
  %419 = vmatpush1.bf16.msra.mxu0 %v285
  %420 = vmatprep.subr.bf16.mxu0 %v282
  %421 = vmatpush1.bf16.msra.mxu0 %v281
  %422 = vmatprep.subr.bf16.mxu0 0
  %423 = vmatpush2.bf16.msra.mxu0 0
  %424 = vmatprep.subr.bf16.mxu0 0
  %425 = vmatpush2.bf16.msra.mxu0 0
  %426 = vmatprep.subr.bf16.mxu0 0
  %427 = vmatpush2.bf16.msra.mxu0 0
  %428 = vmatprep.subr.bf16.mxu0 0
  %429 = vmatpush2.bf16.msra.mxu0 0
  %430 = vmatprep.subr.bf16.mxu0 0
  %431 = vmatpush2.bf16.msra.mxu0 0
  %432 = vmatprep.subr.bf16.mxu0 0
  %433 = vmatpush2.bf16.msra.mxu0 0
  %434 = vmatprep.subr.bf16.mxu0 0
  %435 = vmatpush2.bf16.msra.mxu0 0
  %436 = vmatprep.subr.bf16.mxu0 0
  %437 = vmatpush2.bf16.msra.mxu0 0
  %438 = vmatprep.mubr.bf16.mxu0 0
  %439 = vmatmul.mubr.bf16.gmra.mxu0 %v126
  %v440 = vpop.f32.mrf.mxu0
  %v441 = vadd.f32 %v174, %v440
  %v442 = vpop.f32.mrf.mxu0
  %v443 = vadd.f32 %v178, %v442
  %v444 = vpop.f32.mrf.mxu0
  %v445 = vadd.f32 %v174, %v444
  %v446 = vpop.f32.mrf.mxu0
  %v447 = vadd.f32 %v178, %v446
  %448 = vmatprep.mubr.bf16.mxu0 0
  %449 = vmatmul.mubr.bf16.gmra.mxu0 %v127
  %v450 = vpop.f32.mrf.mxu0
  %v451 = vadd.f32 %v174, %v450
  %v452 = vpop.f32.mrf.mxu0
  %v453 = vadd.f32 %v178, %v452
  %v454 = vpop.f32.mrf.mxu0
  %v455 = vadd.f32 %v174, %v454
  %v456 = vpop.f32.mrf.mxu0
  %v457 = vadd.f32 %v178, %v456
  %458 = vmatprep.mubr.bf16.mxu0 0
  %459 = vmatmul.mubr.bf16.gmra.mxu0 %v128
  %v460 = vpop.f32.mrf.mxu0
  %v461 = vadd.f32 %v174, %v460
  %v462 = vpop.f32.mrf.mxu0
  %v463 = vadd.f32 %v178, %v462
  %v464 = vpop.f32.mrf.mxu0
  %v465 = vadd.f32 %v174, %v464
  %v466 = vpop.f32.mrf.mxu0
  %v467 = vadd.f32 %v178, %v466
  %468 = vdwg.mxu0
  %v469 = vmul.f32 %v378, -1.702
  %v470 = vmul.f32 %v380, -1.702
  %v471 = vmul.f32 %v441, -1.702
  %v472 = vmul.f32 %v443, -1.702
  %v473 = vmul.f32 %v382, -1.702
  %v474 = vmul.f32 %v384, -1.702
  %v475 = vmul.f32 %v445, -1.702
  %v476 = vmul.f32 %v447, -1.702
  %v477 = vmul.f32 %v388, -1.702
  %v478 = vmul.f32 %v390, -1.702
  %v479 = vmul.f32 %v451, -1.702
  %v480 = vmul.f32 %v453, -1.702
  %v481 = vmul.f32 %v392, -1.702
  %v482 = vmul.f32 %v394, -1.702
  %v483 = vmul.f32 %v455, -1.702
  %v484 = vmul.f32 %v457, -1.702
  %v485 = vmul.f32 %v398, -1.702
  %v486 = vmul.f32 %v400, -1.702
  %v487 = vmul.f32 %v461, -1.702
  %v488 = vmul.f32 %v463, -1.702
  %v489 = vmul.f32 %v402, -1.702
  %v490 = vmul.f32 %v404, -1.702
  %v491 = vmul.f32 %v465, -1.702
  %v492 = vmul.f32 %v467, -1.702
  %v493 = vmul.f32 %v469, 1.442695
  %v494 = vpow.pop %v493
  %v495 = vmul.f32 %v470, 1.442695
  %v496 = vpow.pop %v495
  %v497 = vmul.f32 %v471, 1.442695
  %v498 = vpow.pop %v497
  %v499 = vmul.f32 %v472, 1.442695
  %v500 = vpow.pop %v499
  %v501 = vmul.f32 %v473, 1.442695
  %v502 = vpow.pop %v501
  %v503 = vmul.f32 %v474, 1.442695
  %v504 = vpow.pop %v503
  %v505 = vmul.f32 %v475, 1.442695
  %v506 = vpow.pop %v505
  %v507 = vmul.f32 %v476, 1.442695
  %v508 = vpow.pop %v507
  %v509 = vmul.f32 %v477, 1.442695
  %v510 = vpow.pop %v509
  %v511 = vmul.f32 %v478, 1.442695
  %v512 = vpow.pop %v511
  %v513 = vmul.f32 %v479, 1.442695
  %v514 = vpow.pop %v513
  %v515 = vmul.f32 %v480, 1.442695
  %v516 = vpow.pop %v515
  %v517 = vmul.f32 %v481, 1.442695
  %v518 = vpow.pop %v517
  %v519 = vmul.f32 %v482, 1.442695
  %v520 = vpow.pop %v519
  %v521 = vmul.f32 %v483, 1.442695
  %v522 = vpow.pop %v521
  %v523 = vmul.f32 %v484, 1.442695
  %v524 = vpow.pop %v523
  %v525 = vmul.f32 %v485, 1.442695
  %v526 = vpow.pop %v525
  %v527 = vmul.f32 %v486, 1.442695
  %v528 = vpow.pop %v527
  %v529 = vmul.f32 %v487, 1.442695
  %v530 = vpow.pop %v529
  %v531 = vmul.f32 %v488, 1.442695
  %v532 = vpow.pop %v531
  %v533 = vmul.f32 %v489, 1.442695
  %v534 = vpow.pop %v533
  %v535 = vmul.f32 %v490, 1.442695
  %v536 = vpow.pop %v535
  %v537 = vmul.f32 %v491, 1.442695
  %v538 = vpow.pop %v537
  %v539 = vmul.f32 %v492, 1.442695
  %v540 = vpow.pop %v539
  %v541 = vadd.f32 %v494, 1.0
  %v542 = vadd.f32 %v496, 1.0
  %v543 = vadd.f32 %v498, 1.0
  %v544 = vadd.f32 %v500, 1.0
  %v545 = vadd.f32 %v502, 1.0
  %v546 = vadd.f32 %v504, 1.0
  %v547 = vadd.f32 %v506, 1.0
  %v548 = vadd.f32 %v508, 1.0
  %v549 = vadd.f32 %v510, 1.0
  %v550 = vadd.f32 %v512, 1.0
  %v551 = vadd.f32 %v514, 1.0
  %v552 = vadd.f32 %v516, 1.0
  %v553 = vadd.f32 %v518, 1.0
  %v554 = vadd.f32 %v520, 1.0
  %v555 = vadd.f32 %v522, 1.0
  %v556 = vadd.f32 %v524, 1.0
  %v557 = vadd.f32 %v526, 1.0
  %v558 = vadd.f32 %v528, 1.0
  %v559 = vadd.f32 %v530, 1.0
  %v560 = vadd.f32 %v532, 1.0
  %v561 = vadd.f32 %v534, 1.0
  %v562 = vadd.f32 %v536, 1.0
  %v563 = vadd.f32 %v538, 1.0
  %v564 = vadd.f32 %v540, 1.0
  %v565 = vrcp.pop %v541
  %v566 = vmul.f32 1.0, %v565
  %v567 = vrcp.pop %v542
  %v568 = vmul.f32 1.0, %v567
  %v569 = vrcp.pop %v543
  %v570 = vmul.f32 1.0, %v569
  %v571 = vrcp.pop %v544
  %v572 = vmul.f32 1.0, %v571
  %v573 = vrcp.pop %v545
  %v574 = vmul.f32 1.0, %v573
  %v575 = vrcp.pop %v546
  %v576 = vmul.f32 1.0, %v575
  %v577 = vrcp.pop %v547
  %v578 = vmul.f32 1.0, %v577
  %v579 = vrcp.pop %v548
  %v580 = vmul.f32 1.0, %v579
  %v581 = vrcp.pop %v549
  %v582 = vmul.f32 1.0, %v581
  %v583 = vrcp.pop %v550
  %v584 = vmul.f32 1.0, %v583
  %v585 = vrcp.pop %v551
  %v586 = vmul.f32 1.0, %v585
  %v587 = vrcp.pop %v552
  %v588 = vmul.f32 1.0, %v587
  %v589 = vrcp.pop %v553
  %v590 = vmul.f32 1.0, %v589
  %v591 = vrcp.pop %v554
  %v592 = vmul.f32 1.0, %v591
  %v593 = vrcp.pop %v555
  %v594 = vmul.f32 1.0, %v593
  %v595 = vrcp.pop %v556
  %v596 = vmul.f32 1.0, %v595
  %v597 = vrcp.pop %v557
  %v598 = vmul.f32 1.0, %v597
  %v599 = vrcp.pop %v558
  %v600 = vmul.f32 1.0, %v599
  %v601 = vrcp.pop %v559
  %v602 = vmul.f32 1.0, %v601
  %v603 = vrcp.pop %v560
  %v604 = vmul.f32 1.0, %v603
  %v605 = vrcp.pop %v561
  %v606 = vmul.f32 1.0, %v605
  %v607 = vrcp.pop %v562
  %v608 = vmul.f32 1.0, %v607
  %v609 = vrcp.pop %v563
  %v610 = vmul.f32 1.0, %v609
  %v611 = vrcp.pop %v564
  %v612 = vmul.f32 1.0, %v611
  %v613 = vmul.f32 %v378, %v566
  %v614 = vmul.f32 %v380, %v568
  %v615 = vmul.f32 %v441, %v570
  %v616 = vmul.f32 %v443, %v572
  %v617 = vmul.f32 %v382, %v574
  %v618 = vmul.f32 %v384, %v576
  %v619 = vmul.f32 %v445, %v578
  %v620 = vmul.f32 %v447, %v580
  %v621 = vmul.f32 %v388, %v582
  %v622 = vmul.f32 %v390, %v584
  %v623 = vmul.f32 %v451, %v586
  %v624 = vmul.f32 %v453, %v588
  %v625 = vmul.f32 %v392, %v590
  %v626 = vmul.f32 %v394, %v592
  %v627 = vmul.f32 %v455, %v594
  %v628 = vmul.f32 %v457, %v596
  %v629 = vmul.f32 %v398, %v598
  %v630 = vmul.f32 %v400, %v600
  %v631 = vmul.f32 %v461, %v602
  %v632 = vmul.f32 %v463, %v604
  %v633 = vmul.f32 %v402, %v606
  %v634 = vmul.f32 %v404, %v608
  %v635 = vmul.f32 %v465, %v610
  %v636 = vmul.f32 %v467, %v612
  %v637 = vpack.c.bf16 %v617, %v613
  %v638 = vpack.c.bf16 %v618, %v614
  %v639 = vpack.c.bf16 %v619, %v615
  %v640 = vpack.c.bf16 %v620, %v616
  %v641 = vpack.c.bf16 %v625, %v621
  %v642 = vpack.c.bf16 %v626, %v622
  %v643 = vpack.c.bf16 %v627, %v623
  %v644 = vpack.c.bf16 %v628, %v624
  %v645 = vpack.c.bf16 %v633, %v629
  %v646 = vpack.c.bf16 %v634, %v630
  %v647 = vpack.c.bf16 %v635, %v631
  %v648 = vpack.c.bf16 %v636, %v632
  %v661 = vunpack.c.l.b16 %v637
  %v662 = vunpack.c.l.b16 %v638
  %v663 = vunpack.c.l.b16 %v639
  %v664 = vunpack.c.l.b16 %v640
  %v665 = vunpack.c.h.b16 %v637
  %v666 = vunpack.c.h.b16 %v638
  %v667 = vunpack.c.h.b16 %v639
  %v668 = vunpack.c.h.b16 %v640
  %v669 = vunpack.c.l.b16 %v641
  %v670 = vunpack.c.l.b16 %v642
  %v671 = vunpack.c.l.b16 %v643
  %v672 = vunpack.c.l.b16 %v644
  %v673 = vunpack.c.h.b16 %v641
  %v674 = vunpack.c.h.b16 %v642
  %v675 = vunpack.c.h.b16 %v643
  %v676 = vunpack.c.h.b16 %v644
  %v677 = vunpack.c.l.b16 %v645
  %v678 = vunpack.c.l.b16 %v646
  %v679 = vunpack.c.l.b16 %v647
  %v680 = vunpack.c.l.b16 %v648
  %v681 = vunpack.c.h.b16 %v645
  %v682 = vunpack.c.h.b16 %v646
  %v683 = vunpack.c.h.b16 %v647
  %v684 = vunpack.c.h.b16 %v648
  %v685 = vpack.c.b16 %v662, %v661
  %v686 = vpack.c.b16 %v664, %v663
  %v687 = vpack.c.b16 %v666, %v665
  %v688 = vpack.c.b16 %v668, %v667
  %v689 = vpack.c.b16 %v670, %v669
  %v690 = vpack.c.b16 %v672, %v671
  %v691 = vpack.c.b16 %v674, %v673
  %v692 = vpack.c.b16 %v676, %v675
  %v693 = vpack.c.b16 %v678, %v677
  %v694 = vpack.c.b16 %v680, %v679
  %v695 = vpack.c.b16 %v682, %v681
  %v696 = vpack.c.b16 %v684, %v683
  %709 = vst [vmem:[%s5] sm:$0xff] %v685
  %710 = vst [vmem:[%s5 + $0x8] sm:$0xff] %v686
  %711 = vst [vmem:[%s5 + $0x10] sm:$0xff] %v687
  %712 = vst [vmem:[%s5 + $0x18] sm:$0xff] %v688
  %713 = vst [vmem:[%s5 + $0x20] sm:$0xff] %v689
  %714 = vst [vmem:[%s5 + $0x28] sm:$0xff] %v690
  %715 = vst [vmem:[%s5 + $0x30] sm:$0xff] %v691
  %716 = vst [vmem:[%s5 + $0x38] sm:$0xff] %v692
  %717 = vst [vmem:[%s5 + $0x40] sm:$0xff] %v693
  %718 = vst [vmem:[%s5 + $0x48] sm:$0xff] %v694
  %719 = vst [vmem:[%s5 + $0x50] sm:$0xff] %v695
  %720 = vst [vmem:[%s5 + $0x58] sm:$0xff] %v696
  // Predicated region
  $region22: #{vision_transformer_forward.22} parent=0 // pred_check
    _
  $region23: #{vision_transformer_forward.22} parent=0 // pred_check_branch
    %722 = sbr.rel (0) target = $region25
  $region24: #{vision_transformer_forward.22} parent=0 // pred_region
    _
  $region25: #{vision_transformer_forward.22} parent=0 // pred_fallthru
    _
  // Predicated region
  $region26: #{vision_transformer_forward.22} parent=0 // pred_check
    _
  $region27: #{vision_transformer_forward.22} parent=0 // pred_check_branch
    %724 = sbr.rel (0) target = $region29
  $region28: #{vision_transformer_forward.22} parent=0 // pred_region
    _
  $region29: #{vision_transformer_forward.22} parent=0 // pred_fallthru
    _

// kernel: vision_transformer_forward.29
$region0: #{vision_transformer_forward.29}
  #allocation0 [shape = 'u32[]', space=smem, size = 0x4, offset = 0x4, fixed_abs, tag = 'smem constant byte address 0x4 - core index']
  #allocation1 [shape = 'u32[144,128]{1,0:T(1,128)}', space=vmem, size = 0x12000, scoped, tag = 'internal scratch']
  %s0 = inlined_call_operand.vmem [shape: bf16[48,128], index: 0, kind: input, shape index: {}]
  %s1 = inlined_call_operand.vmem [shape: bf16[128,128], index: 1, kind: input, shape index: {}]
  %s2 = inlined_call_operand.vmem [shape: f32[1,128], index: 2, kind: input, shape index: {}]
  %s3 = inlined_call_operand.vmem [shape: bf16[48,128], index: 3, kind: output, shape index: {}]
  %s4 = sld [smem:[#allocation0]]
  $region22: #{vision_transformer_forward.29} parent=0
    _
  %s6 = ssub.s32 1, %s4
  %s7 = scalar_select 0, %s6, %s4
  // Predicated region
  $region2: #{vision_transformer_forward.29} parent=0 // pred_check
    _
  $region3: #{vision_transformer_forward.29} parent=0 // pred_check_branch
    %9 = sbr.rel (0) target = $region5
  $region4: #{vision_transformer_forward.29} parent=0 // pred_region
    _
  $region5: #{vision_transformer_forward.29} parent=0 // pred_fallthru
    _
  // Predicated region
  $region6: #{vision_transformer_forward.29} parent=0 // pred_check
    _
  $region7: #{vision_transformer_forward.29} parent=0 // pred_check_branch
    %11 = sbr.rel (0) target = $region9
  $region8: #{vision_transformer_forward.29} parent=0 // pred_region
    _
  $region9: #{vision_transformer_forward.29} parent=0 // pred_fallthru
    _
  // Predicated region
  $region10: #{vision_transformer_forward.29} parent=0 // pred_check
    _
  $region11: #{vision_transformer_forward.29} parent=0 // pred_check_branch
    %13 = sbr.rel (0) target = $region13
  $region12: #{vision_transformer_forward.29} parent=0 // pred_region
    _
  $region13: #{vision_transformer_forward.29} parent=0 // pred_fallthru
    _
  %v15 = vld [vmem:[%s0] sm:$0xf]
  %v16 = vld [vmem:[%s0 + $0x4] sm:$0xf]
  %v17 = vld [vmem:[%s0 + $0x8] sm:$0xf]
  %v18 = vld [vmem:[%s0 + $0xc] sm:$0xf]
  %v19 = vld [vmem:[%s0 + $0x10] sm:$0xf]
  %v20 = vld [vmem:[%s0 + $0x14] sm:$0xf]
  %v21 = vld [vmem:[%s1] sm:$0xf]
  %v22 = vld [vmem:[%s1 + $0x4] sm:$0xf]
  %v23 = vld [vmem:[%s1 + $0x8] sm:$0xf]
  %v24 = vld [vmem:[%s1 + $0xc] sm:$0xf]
  %v25 = vld [vmem:[%s1 + $0x10] sm:$0xf]
  %v26 = vld [vmem:[%s1 + $0x14] sm:$0xf]
  %v27 = vld [vmem:[%s1 + $0x18] sm:$0xf]
  %v28 = vld [vmem:[%s1 + $0x1c] sm:$0xf]
  %v29 = vld [vmem:[%s1 + $0x20] sm:$0xf]
  %v30 = vld [vmem:[%s1 + $0x24] sm:$0xf]
  %v31 = vld [vmem:[%s1 + $0x28] sm:$0xf]
  %v32 = vld [vmem:[%s1 + $0x2c] sm:$0xf]
  %v33 = vld [vmem:[%s1 + $0x30] sm:$0xf]
  %v34 = vld [vmem:[%s1 + $0x34] sm:$0xf]
  %v35 = vld [vmem:[%s1 + $0x38] sm:$0xf]
  %v36 = vld [vmem:[%s1 + $0x3c] sm:$0xf]
  %v37 = vld [vmem:[%s2] sm:$0x1]
  %v39 = vlaneseq
  %v40 = vshrl.u32 %v39, 7
  %v41 = vsub.s32 0, %v40
  %v42 = vrot.slane %v37, %v41
  %v50 = vunpack.c.l.b16 %v15
  %v51 = vunpack.c.l.b16 %v16
  %v52 = vunpack.c.l.b16 %v17
  %v53 = vunpack.c.l.b16 %v18
  %v54 = vunpack.c.l.b16 %v19
  %v55 = vunpack.c.l.b16 %v20
  %v56 = vpack.c.b16 %v51, %v50
  %v57 = vpack.c.b16 %v53, %v52
  %v58 = vpack.c.b16 %v55, %v54
  %v78 = vunpack.c.l.b16 %v21
  %v79 = vunpack.c.l.b16 %v22
  %v80 = vunpack.c.l.b16 %v23
  %v81 = vunpack.c.l.b16 %v24
  %v82 = vunpack.c.l.b16 %v25
  %v83 = vunpack.c.l.b16 %v26
  %v84 = vunpack.c.l.b16 %v27
  %v85 = vunpack.c.l.b16 %v28
  %v86 = vunpack.c.l.b16 %v29
  %v87 = vunpack.c.l.b16 %v30
  %v88 = vunpack.c.l.b16 %v31
  %v89 = vunpack.c.l.b16 %v32
  %v90 = vunpack.c.l.b16 %v33
  %v91 = vunpack.c.l.b16 %v34
  %v92 = vunpack.c.l.b16 %v35
  %v93 = vunpack.c.l.b16 %v36
  %v94 = vpack.c.b16 %v79, %v78
  %v95 = vpack.c.b16 %v81, %v80
  %v96 = vpack.c.b16 %v83, %v82
  %v97 = vpack.c.b16 %v85, %v84
  %v98 = vpack.c.b16 %v87, %v86
  %v99 = vpack.c.b16 %v89, %v88
  %v100 = vpack.c.b16 %v91, %v90
  %v101 = vpack.c.b16 %v93, %v92
  %110 = vmatprep.subr.bf16.mxu0 0
  %111 = vmatpush1.bf16.msra.mxu0 %v101
  %112 = vmatprep.subr.bf16.mxu0 0
  %113 = vmatpush1.bf16.msra.mxu0 %v100
  %114 = vmatprep.subr.bf16.mxu0 0
  %115 = vmatpush1.bf16.msra.mxu0 %v99
  %116 = vmatprep.subr.bf16.mxu0 0
  %117 = vmatpush1.bf16.msra.mxu0 %v98
  %118 = vmatprep.subr.bf16.mxu0 0
  %119 = vmatpush1.bf16.msra.mxu0 %v97
  %120 = vmatprep.subr.bf16.mxu0 0
  %121 = vmatpush1.bf16.msra.mxu0 %v96
  %122 = vmatprep.subr.bf16.mxu0 0
  %123 = vmatpush1.bf16.msra.mxu0 %v95
  %124 = vmatprep.subr.bf16.mxu0 0
  %125 = vmatpush1.bf16.msra.mxu0 %v94
  %126 = vmatprep.subr.bf16.mxu0 0
  %127 = vmatpush2.bf16.msra.mxu0 0
  %128 = vmatprep.subr.bf16.mxu0 0
  %129 = vmatpush2.bf16.msra.mxu0 0
  %130 = vmatprep.subr.bf16.mxu0 0
  %131 = vmatpush2.bf16.msra.mxu0 0
  %132 = vmatprep.subr.bf16.mxu0 0
  %133 = vmatpush2.bf16.msra.mxu0 0
  %134 = vmatprep.subr.bf16.mxu0 0
  %135 = vmatpush2.bf16.msra.mxu0 0
  %136 = vmatprep.subr.bf16.mxu0 0
  %137 = vmatpush2.bf16.msra.mxu0 0
  %138 = vmatprep.subr.bf16.mxu0 0
  %139 = vmatpush2.bf16.msra.mxu0 0
  %140 = vmatprep.subr.bf16.mxu0 0
  %141 = vmatpush2.bf16.msra.mxu0 0
  %142 = vmatprep.mubr.bf16.mxu0 0
  %143 = vmatmul.mubr.bf16.gmra.mxu0 %v56
  %v144 = vpop.f32.mrf.mxu0
  %v145 = vadd.f32 %v42, %v144
  %v146 = vpop.f32.mrf.mxu0
  %v147 = vpop.f32.mrf.mxu0
  %v148 = vadd.f32 %v42, %v147
  %v149 = vpop.f32.mrf.mxu0
  %150 = vmatprep.mubr.bf16.mxu0 0
  %151 = vmatmul.mubr.bf16.gmra.mxu0 %v57
  %v152 = vpop.f32.mrf.mxu0
  %v153 = vadd.f32 %v42, %v152
  %v154 = vpop.f32.mrf.mxu0
  %v155 = vpop.f32.mrf.mxu0
  %v156 = vadd.f32 %v42, %v155
  %v157 = vpop.f32.mrf.mxu0
  %158 = vmatprep.mubr.bf16.mxu0 0
  %159 = vmatmul.mubr.bf16.gmra.mxu0 %v58
  %v160 = vpop.f32.mrf.mxu0
  %v161 = vadd.f32 %v42, %v160
  %v162 = vpop.f32.mrf.mxu0
  %v163 = vpop.f32.mrf.mxu0
  %v164 = vadd.f32 %v42, %v163
  %v165 = vpop.f32.mrf.mxu0
  %166 = vdwg.mxu0
  %v167 = vpack.c.bf16 %v148, %v145
  %v168 = vpack.c.bf16 %v156, %v153
  %v169 = vpack.c.bf16 %v164, %v161
  %v173 = vunpack.c.l.b16 %v167
  %v174 = vunpack.c.h.b16 %v167
  %v175 = vunpack.c.l.b16 %v168
  %v176 = vunpack.c.h.b16 %v168
  %v177 = vunpack.c.l.b16 %v169
  %v178 = vunpack.c.h.b16 %v169
  %v179 = vpack.c.b16 %v173, %v173
  %v180 = vpack.c.b16 %v174, %v174
  %v181 = vpack.c.b16 %v175, %v175
  %v182 = vpack.c.b16 %v176, %v176
  %v183 = vpack.c.b16 %v177, %v177
  %v184 = vpack.c.b16 %v178, %v178
  %191 = vst [vmem:[%s3] sm:$0xf] %v179
  %192 = vst [vmem:[%s3 + $0x4] sm:$0xf] %v180
  %193 = vst [vmem:[%s3 + $0x8] sm:$0xf] %v181
  %194 = vst [vmem:[%s3 + $0xc] sm:$0xf] %v182
  %195 = vst [vmem:[%s3 + $0x10] sm:$0xf] %v183
  %196 = vst [vmem:[%s3 + $0x14] sm:$0xf] %v184
  // Predicated region
  $region14: #{vision_transformer_forward.29} parent=0 // pred_check
    _
  $region15: #{vision_transformer_forward.29} parent=0 // pred_check_branch
    %198 = sbr.rel (0) target = $region17
  $region16: #{vision_transformer_forward.29} parent=0 // pred_region
    _
  $region17: #{vision_transformer_forward.29} parent=0 // pred_fallthru
    _
  // Predicated region
  $region18: #{vision_transformer_forward.29} parent=0 // pred_check
    _
  $region19: #{vision_transformer_forward.29} parent=0 // pred_check_branch
    %200 = sbr.rel (0) target = $region21
  $region20: #{vision_transformer_forward.29} parent=0 // pred_region
    _
  $region21: #{vision_transformer_forward.29} parent=0 // pred_fallthru
    _

// kernel: vision_transformer_forward.23
$region0: #{vision_transformer_forward.23}
  #allocation0 [shape = 'u32[]', space=smem, size = 0x4, offset = 0x4, fixed_abs, tag = 'smem constant byte address 0x4 - core index']
  #allocation1 [shape = 'u32[144,128]{1,0:T(1,128)}', space=vmem, size = 0x12000, scoped, tag = 'internal scratch']
  %s0 = inlined_call_operand.vmem [shape: bf16[48,512], index: 0, kind: input, shape index: {}]
  %s1 = inlined_call_operand.vmem [shape: bf16[512,128], index: 1, kind: input, shape index: {}]
  %s2 = inlined_call_operand.vmem [shape: f32[1,128], index: 2, kind: input, shape index: {}]
  %s3 = inlined_call_operand.vmem [shape: bf16[48,128], index: 3, kind: input, shape index: {}]
  %s4 = inlined_call_operand.vmem [shape: bf16[48,128], index: 4, kind: output, shape index: {}]
  %s5 = sld [smem:[#allocation0]]
  $region26: #{vision_transformer_forward.23} parent=0
    _
  %s7 = ssub.s32 1, %s5
  %s8 = scalar_select 0, %s7, %s5
  // Predicated region
  $region2: #{vision_transformer_forward.23} parent=0 // pred_check
    _
  $region3: #{vision_transformer_forward.23} parent=0 // pred_check_branch
    %10 = sbr.rel (0) target = $region5
  $region4: #{vision_transformer_forward.23} parent=0 // pred_region
    _
  $region5: #{vision_transformer_forward.23} parent=0 // pred_fallthru
    _
  // Predicated region
  $region6: #{vision_transformer_forward.23} parent=0 // pred_check
    _
  $region7: #{vision_transformer_forward.23} parent=0 // pred_check_branch
    %12 = sbr.rel (0) target = $region9
  $region8: #{vision_transformer_forward.23} parent=0 // pred_region
    _
  $region9: #{vision_transformer_forward.23} parent=0 // pred_fallthru
    _
  // Predicated region
  $region10: #{vision_transformer_forward.23} parent=0 // pred_check
    _
  $region11: #{vision_transformer_forward.23} parent=0 // pred_check_branch
    %14 = sbr.rel (0) target = $region13
  $region12: #{vision_transformer_forward.23} parent=0 // pred_region
    _
  $region13: #{vision_transformer_forward.23} parent=0 // pred_fallthru
    _
  // Predicated region
  $region14: #{vision_transformer_forward.23} parent=0 // pred_check
    _
  $region15: #{vision_transformer_forward.23} parent=0 // pred_check_branch
    %16 = sbr.rel (0) target = $region17
  $region16: #{vision_transformer_forward.23} parent=0 // pred_region
    _
  $region17: #{vision_transformer_forward.23} parent=0 // pred_fallthru
    _
  %v18 = vld [vmem:[%s0] sm:$0xff]
  %v19 = vld [vmem:[%s0 + $0x8] sm:$0xff]
  %v20 = vld [vmem:[%s0 + $0x10] sm:$0xff]
  %v21 = vld [vmem:[%s0 + $0x18] sm:$0xff]
  %v22 = vld [vmem:[%s0 + $0x20] sm:$0xff]
  %v23 = vld [vmem:[%s0 + $0x28] sm:$0xff]
  %v24 = vld [vmem:[%s0 + $0x30] sm:$0xff]
  %v25 = vld [vmem:[%s0 + $0x38] sm:$0xff]
  %v26 = vld [vmem:[%s0 + $0x40] sm:$0xff]
  %v27 = vld [vmem:[%s0 + $0x48] sm:$0xff]
  %v28 = vld [vmem:[%s0 + $0x50] sm:$0xff]
  %v29 = vld [vmem:[%s0 + $0x58] sm:$0xff]
  %v30 = vld [vmem:[%s1] sm:$0xf]
  %v31 = vld [vmem:[%s1 + $0x4] sm:$0xf]
  %v32 = vld [vmem:[%s1 + $0x8] sm:$0xf]
  %v33 = vld [vmem:[%s1 + $0xc] sm:$0xf]
  %v34 = vld [vmem:[%s1 + $0x10] sm:$0xf]
  %v35 = vld [vmem:[%s1 + $0x14] sm:$0xf]
  %v36 = vld [vmem:[%s1 + $0x18] sm:$0xf]
  %v37 = vld [vmem:[%s1 + $0x1c] sm:$0xf]
  %v38 = vld [vmem:[%s1 + $0x20] sm:$0xf]
  %v39 = vld [vmem:[%s1 + $0x24] sm:$0xf]
  %v40 = vld [vmem:[%s1 + $0x28] sm:$0xf]
  %v41 = vld [vmem:[%s1 + $0x2c] sm:$0xf]
  %v42 = vld [vmem:[%s1 + $0x30] sm:$0xf]
  %v43 = vld [vmem:[%s1 + $0x34] sm:$0xf]
  %v44 = vld [vmem:[%s1 + $0x38] sm:$0xf]
  %v45 = vld [vmem:[%s1 + $0x3c] sm:$0xf]
  %v46 = vld [vmem:[%s1 + $0x40] sm:$0xf]
  %v47 = vld [vmem:[%s1 + $0x44] sm:$0xf]
  %v48 = vld [vmem:[%s1 + $0x48] sm:$0xf]
  %v49 = vld [vmem:[%s1 + $0x4c] sm:$0xf]
  %v50 = vld [vmem:[%s1 + $0x50] sm:$0xf]
  %v51 = vld [vmem:[%s1 + $0x54] sm:$0xf]
  %v52 = vld [vmem:[%s1 + $0x58] sm:$0xf]
  %v53 = vld [vmem:[%s1 + $0x5c] sm:$0xf]
  %v54 = vld [vmem:[%s1 + $0x60] sm:$0xf]
  %v55 = vld [vmem:[%s1 + $0x64] sm:$0xf]
  %v56 = vld [vmem:[%s1 + $0x68] sm:$0xf]
  %v57 = vld [vmem:[%s1 + $0x6c] sm:$0xf]
  %v58 = vld [vmem:[%s1 + $0x70] sm:$0xf]
  %v59 = vld [vmem:[%s1 + $0x74] sm:$0xf]
  %v60 = vld [vmem:[%s1 + $0x78] sm:$0xf]
  %v61 = vld [vmem:[%s1 + $0x7c] sm:$0xf]
  %v62 = vld [vmem:[%s1 + $0x80] sm:$0xf]
  %v63 = vld [vmem:[%s1 + $0x84] sm:$0xf]
  %v64 = vld [vmem:[%s1 + $0x88] sm:$0xf]
  %v65 = vld [vmem:[%s1 + $0x8c] sm:$0xf]
  %v66 = vld [vmem:[%s1 + $0x90] sm:$0xf]
  %v67 = vld [vmem:[%s1 + $0x94] sm:$0xf]
  %v68 = vld [vmem:[%s1 + $0x98] sm:$0xf]
  %v69 = vld [vmem:[%s1 + $0x9c] sm:$0xf]
  %v70 = vld [vmem:[%s1 + $0xa0] sm:$0xf]
  %v71 = vld [vmem:[%s1 + $0xa4] sm:$0xf]
  %v72 = vld [vmem:[%s1 + $0xa8] sm:$0xf]
  %v73 = vld [vmem:[%s1 + $0xac] sm:$0xf]
  %v74 = vld [vmem:[%s1 + $0xb0] sm:$0xf]
  %v75 = vld [vmem:[%s1 + $0xb4] sm:$0xf]
  %v76 = vld [vmem:[%s1 + $0xb8] sm:$0xf]
  %v77 = vld [vmem:[%s1 + $0xbc] sm:$0xf]
  %v78 = vld [vmem:[%s1 + $0xc0] sm:$0xf]
  %v79 = vld [vmem:[%s1 + $0xc4] sm:$0xf]
  %v80 = vld [vmem:[%s1 + $0xc8] sm:$0xf]
  %v81 = vld [vmem:[%s1 + $0xcc] sm:$0xf]
  %v82 = vld [vmem:[%s1 + $0xd0] sm:$0xf]
  %v83 = vld [vmem:[%s1 + $0xd4] sm:$0xf]
  %v84 = vld [vmem:[%s1 + $0xd8] sm:$0xf]
  %v85 = vld [vmem:[%s1 + $0xdc] sm:$0xf]
  %v86 = vld [vmem:[%s1 + $0xe0] sm:$0xf]
  %v87 = vld [vmem:[%s1 + $0xe4] sm:$0xf]
  %v88 = vld [vmem:[%s1 + $0xe8] sm:$0xf]
  %v89 = vld [vmem:[%s1 + $0xec] sm:$0xf]
  %v90 = vld [vmem:[%s1 + $0xf0] sm:$0xf]
  %v91 = vld [vmem:[%s1 + $0xf4] sm:$0xf]
  %v92 = vld [vmem:[%s1 + $0xf8] sm:$0xf]
  %v93 = vld [vmem:[%s1 + $0xfc] sm:$0xf]
  %v94 = vld [vmem:[%s2] sm:$0x1]
  %v96 = vlaneseq
  %v97 = vshrl.u32 %v96, 7
  %v98 = vsub.s32 0, %v97
  %v99 = vrot.slane %v94, %v98
  %v113 = vunpack.c.l.b16 %v18
  %v114 = vunpack.c.h.b16 %v18
  %v115 = vunpack.c.l.b16 %v19
  %v116 = vunpack.c.h.b16 %v19
  %v117 = vunpack.c.l.b16 %v20
  %v118 = vunpack.c.h.b16 %v20
  %v119 = vunpack.c.l.b16 %v21
  %v120 = vunpack.c.h.b16 %v21
  %v121 = vunpack.c.l.b16 %v22
  %v122 = vunpack.c.h.b16 %v22
  %v123 = vunpack.c.l.b16 %v23
  %v124 = vunpack.c.h.b16 %v23
  %v125 = vunpack.c.l.b16 %v24
  %v126 = vunpack.c.h.b16 %v24
  %v127 = vunpack.c.l.b16 %v25
  %v128 = vunpack.c.h.b16 %v25
  %v129 = vunpack.c.l.b16 %v26
  %v130 = vunpack.c.h.b16 %v26
  %v131 = vunpack.c.l.b16 %v27
  %v132 = vunpack.c.h.b16 %v27
  %v133 = vunpack.c.l.b16 %v28
  %v134 = vunpack.c.h.b16 %v28
  %v135 = vunpack.c.l.b16 %v29
  %v136 = vunpack.c.h.b16 %v29
  %v137 = vpack.c.b16 %v117, %v113
  %v138 = vpack.c.b16 %v118, %v114
  %v139 = vpack.c.b16 %v119, %v115
  %v140 = vpack.c.b16 %v120, %v116
  %v141 = vpack.c.b16 %v125, %v121
  %v142 = vpack.c.b16 %v126, %v122
  %v143 = vpack.c.b16 %v127, %v123
  %v144 = vpack.c.b16 %v128, %v124
  %v145 = vpack.c.b16 %v133, %v129
  %v146 = vpack.c.b16 %v134, %v130
  %v147 = vpack.c.b16 %v135, %v131
  %v148 = vpack.c.b16 %v136, %v132
  %v225 = vunpack.c.l.b16 %v30
  %v226 = vunpack.c.l.b16 %v31
  %v227 = vunpack.c.l.b16 %v32
  %v228 = vunpack.c.l.b16 %v33
  %v229 = vunpack.c.l.b16 %v34
  %v230 = vunpack.c.l.b16 %v35
  %v231 = vunpack.c.l.b16 %v36
  %v232 = vunpack.c.l.b16 %v37
  %v233 = vunpack.c.l.b16 %v38
  %v234 = vunpack.c.l.b16 %v39
  %v235 = vunpack.c.l.b16 %v40
  %v236 = vunpack.c.l.b16 %v41
  %v237 = vunpack.c.l.b16 %v42
  %v238 = vunpack.c.l.b16 %v43
  %v239 = vunpack.c.l.b16 %v44
  %v240 = vunpack.c.l.b16 %v45
  %v241 = vunpack.c.l.b16 %v46
  %v242 = vunpack.c.l.b16 %v47
  %v243 = vunpack.c.l.b16 %v48
  %v244 = vunpack.c.l.b16 %v49
  %v245 = vunpack.c.l.b16 %v50
  %v246 = vunpack.c.l.b16 %v51
  %v247 = vunpack.c.l.b16 %v52
  %v248 = vunpack.c.l.b16 %v53
  %v249 = vunpack.c.l.b16 %v54
  %v250 = vunpack.c.l.b16 %v55
  %v251 = vunpack.c.l.b16 %v56
  %v252 = vunpack.c.l.b16 %v57
  %v253 = vunpack.c.l.b16 %v58
  %v254 = vunpack.c.l.b16 %v59
  %v255 = vunpack.c.l.b16 %v60
  %v256 = vunpack.c.l.b16 %v61
  %v257 = vunpack.c.l.b16 %v62
  %v258 = vunpack.c.l.b16 %v63
  %v259 = vunpack.c.l.b16 %v64
  %v260 = vunpack.c.l.b16 %v65
  %v261 = vunpack.c.l.b16 %v66
  %v262 = vunpack.c.l.b16 %v67
  %v263 = vunpack.c.l.b16 %v68
  %v264 = vunpack.c.l.b16 %v69
  %v265 = vunpack.c.l.b16 %v70
  %v266 = vunpack.c.l.b16 %v71
  %v267 = vunpack.c.l.b16 %v72
  %v268 = vunpack.c.l.b16 %v73
  %v269 = vunpack.c.l.b16 %v74
  %v270 = vunpack.c.l.b16 %v75
  %v271 = vunpack.c.l.b16 %v76
  %v272 = vunpack.c.l.b16 %v77
  %v273 = vunpack.c.l.b16 %v78
  %v274 = vunpack.c.l.b16 %v79
  %v275 = vunpack.c.l.b16 %v80
  %v276 = vunpack.c.l.b16 %v81
  %v277 = vunpack.c.l.b16 %v82
  %v278 = vunpack.c.l.b16 %v83
  %v279 = vunpack.c.l.b16 %v84
  %v280 = vunpack.c.l.b16 %v85
  %v281 = vunpack.c.l.b16 %v86
  %v282 = vunpack.c.l.b16 %v87
  %v283 = vunpack.c.l.b16 %v88
  %v284 = vunpack.c.l.b16 %v89
  %v285 = vunpack.c.l.b16 %v90
  %v286 = vunpack.c.l.b16 %v91
  %v287 = vunpack.c.l.b16 %v92
  %v288 = vunpack.c.l.b16 %v93
  %v289 = vpack.c.b16 %v226, %v225
  %v290 = vpack.c.b16 %v228, %v227
  %v291 = vpack.c.b16 %v230, %v229
  %v292 = vpack.c.b16 %v232, %v231
  %v293 = vpack.c.b16 %v234, %v233
  %v294 = vpack.c.b16 %v236, %v235
  %v295 = vpack.c.b16 %v238, %v237
  %v296 = vpack.c.b16 %v240, %v239
  %v297 = vpack.c.b16 %v242, %v241
  %v298 = vpack.c.b16 %v244, %v243
  %v299 = vpack.c.b16 %v246, %v245
  %v300 = vpack.c.b16 %v248, %v247
  %v301 = vpack.c.b16 %v250, %v249
  %v302 = vpack.c.b16 %v252, %v251
  %v303 = vpack.c.b16 %v254, %v253
  %v304 = vpack.c.b16 %v256, %v255
  %v305 = vpack.c.b16 %v258, %v257
  %v306 = vpack.c.b16 %v260, %v259
  %v307 = vpack.c.b16 %v262, %v261
  %v308 = vpack.c.b16 %v264, %v263
  %v309 = vpack.c.b16 %v266, %v265
  %v310 = vpack.c.b16 %v268, %v267
  %v311 = vpack.c.b16 %v270, %v269
  %v312 = vpack.c.b16 %v272, %v271
  %v313 = vpack.c.b16 %v274, %v273
  %v314 = vpack.c.b16 %v276, %v275
  %v315 = vpack.c.b16 %v278, %v277
  %v316 = vpack.c.b16 %v280, %v279
  %v317 = vpack.c.b16 %v282, %v281
  %v318 = vpack.c.b16 %v284, %v283
  %v319 = vpack.c.b16 %v286, %v285
  %v320 = vpack.c.b16 %v288, %v287
  %353 = vmatprep.subr.bf16.mxu0 0
  %354 = vmatpush1.bf16.msra.mxu0 %v296
  %355 = vmatprep.subr.bf16.mxu0 0
  %356 = vmatpush1.bf16.msra.mxu0 %v295
  %357 = vmatprep.subr.bf16.mxu0 0
  %358 = vmatpush1.bf16.msra.mxu0 %v294
  %359 = vmatprep.subr.bf16.mxu0 0
  %360 = vmatpush1.bf16.msra.mxu0 %v293
  %361 = vmatprep.subr.bf16.mxu0 0
  %362 = vmatpush1.bf16.msra.mxu0 %v292
  %363 = vmatprep.subr.bf16.mxu0 0
  %364 = vmatpush1.bf16.msra.mxu0 %v291
  %365 = vmatprep.subr.bf16.mxu0 0
  %366 = vmatpush1.bf16.msra.mxu0 %v290
  %367 = vmatprep.subr.bf16.mxu0 0
  %368 = vmatpush1.bf16.msra.mxu0 %v289
  %369 = vmatprep.subr.bf16.mxu0 0
  %370 = vmatpush2.bf16.msra.mxu0 %v304
  %371 = vmatprep.subr.bf16.mxu0 0
  %372 = vmatpush2.bf16.msra.mxu0 %v303
  %373 = vmatprep.subr.bf16.mxu0 0
  %374 = vmatpush2.bf16.msra.mxu0 %v302
  %375 = vmatprep.subr.bf16.mxu0 0
  %376 = vmatpush2.bf16.msra.mxu0 %v301
  %377 = vmatprep.subr.bf16.mxu0 0
  %378 = vmatpush2.bf16.msra.mxu0 %v300
  %379 = vmatprep.subr.bf16.mxu0 0
  %380 = vmatpush2.bf16.msra.mxu0 %v299
  %381 = vmatprep.subr.bf16.mxu0 0
  %382 = vmatpush2.bf16.msra.mxu0 %v298
  %383 = vmatprep.subr.bf16.mxu0 0
  %384 = vmatpush2.bf16.msra.mxu0 %v297
  %385 = vmatprep.mubr.bf16.mxu0 %v138
  %386 = vmatmul.mubr.bf16.gmra.mxu0 %v137
  %v387 = vpop.f32.mrf.mxu0
  %v388 = vadd.f32 %v99, %v387
  %v389 = vpop.f32.mrf.mxu0
  %v390 = vpop.f32.mrf.mxu0
  %v391 = vadd.f32 %v99, %v390
  %v392 = vpop.f32.mrf.mxu0
  %393 = vmatprep.mubr.bf16.mxu0 %v142
  %394 = vmatmul.mubr.bf16.gmra.mxu0 %v141
  %v395 = vpop.f32.mrf.mxu0
  %v396 = vadd.f32 %v99, %v395
  %v397 = vpop.f32.mrf.mxu0
  %v398 = vpop.f32.mrf.mxu0
  %v399 = vadd.f32 %v99, %v398
  %v400 = vpop.f32.mrf.mxu0
  %401 = vmatprep.mubr.bf16.mxu0 %v146
  %402 = vmatmul.mubr.bf16.gmra.mxu0 %v145
  %v403 = vpop.f32.mrf.mxu0
  %v404 = vadd.f32 %v99, %v403
  %v405 = vpop.f32.mrf.mxu0
  %v406 = vpop.f32.mrf.mxu0
  %v407 = vadd.f32 %v99, %v406
  %v408 = vpop.f32.mrf.mxu0
  %409 = vdwg.mxu0
  %410 = vmatprep.subr.bf16.mxu0 0
  %411 = vmatpush1.bf16.msra.mxu0 %v312
  %412 = vmatprep.subr.bf16.mxu0 0
  %413 = vmatpush1.bf16.msra.mxu0 %v311
  %414 = vmatprep.subr.bf16.mxu0 0
  %415 = vmatpush1.bf16.msra.mxu0 %v310
  %416 = vmatprep.subr.bf16.mxu0 0
  %417 = vmatpush1.bf16.msra.mxu0 %v309
  %418 = vmatprep.subr.bf16.mxu0 0
  %419 = vmatpush1.bf16.msra.mxu0 %v308
  %420 = vmatprep.subr.bf16.mxu0 0
  %421 = vmatpush1.bf16.msra.mxu0 %v307
  %422 = vmatprep.subr.bf16.mxu0 0
  %423 = vmatpush1.bf16.msra.mxu0 %v306
  %424 = vmatprep.subr.bf16.mxu0 0
  %425 = vmatpush1.bf16.msra.mxu0 %v305
  %426 = vmatprep.subr.bf16.mxu0 0
  %427 = vmatpush2.bf16.msra.mxu0 %v320
  %428 = vmatprep.subr.bf16.mxu0 0
  %429 = vmatpush2.bf16.msra.mxu0 %v319
  %430 = vmatprep.subr.bf16.mxu0 0
  %431 = vmatpush2.bf16.msra.mxu0 %v318
  %432 = vmatprep.subr.bf16.mxu0 0
  %433 = vmatpush2.bf16.msra.mxu0 %v317
  %434 = vmatprep.subr.bf16.mxu0 0
  %435 = vmatpush2.bf16.msra.mxu0 %v316
  %436 = vmatprep.subr.bf16.mxu0 0
  %437 = vmatpush2.bf16.msra.mxu0 %v315
  %438 = vmatprep.subr.bf16.mxu0 0
  %439 = vmatpush2.bf16.msra.mxu0 %v314
  %440 = vmatprep.subr.bf16.mxu0 0
  %441 = vmatpush2.bf16.msra.mxu0 %v313
  %442 = vmatprep.mubr.bf16.mxu0 %v140
  %443 = vmatmul.mubr.bf16.gmra.mxu0 %v139
  %v444 = vpop.f32.mrf.mxu0
  %v445 = vadd.f32 %v388, %v444
  %v446 = vpop.f32.mrf.mxu0
  %v447 = vpop.f32.mrf.mxu0
  %v448 = vadd.f32 %v391, %v447
  %v449 = vpop.f32.mrf.mxu0
  %450 = vmatprep.mubr.bf16.mxu0 %v144
  %451 = vmatmul.mubr.bf16.gmra.mxu0 %v143
  %v452 = vpop.f32.mrf.mxu0
  %v453 = vadd.f32 %v396, %v452
  %v454 = vpop.f32.mrf.mxu0
  %v455 = vpop.f32.mrf.mxu0
  %v456 = vadd.f32 %v399, %v455
  %v457 = vpop.f32.mrf.mxu0
  %458 = vmatprep.mubr.bf16.mxu0 %v148
  %459 = vmatmul.mubr.bf16.gmra.mxu0 %v147
  %v460 = vpop.f32.mrf.mxu0
  %v461 = vadd.f32 %v404, %v460
  %v462 = vpop.f32.mrf.mxu0
  %v463 = vpop.f32.mrf.mxu0
  %v464 = vadd.f32 %v407, %v463
  %v465 = vpop.f32.mrf.mxu0
  %466 = vdwg.mxu0
  %v467 = vld [vmem:[%s3] sm:$0xf]
  %v468 = vld [vmem:[%s3 + $0x4] sm:$0xf]
  %v469 = vld [vmem:[%s3 + $0x8] sm:$0xf]
  %v470 = vld [vmem:[%s3 + $0xc] sm:$0xf]
  %v471 = vld [vmem:[%s3 + $0x10] sm:$0xf]
  %v472 = vld [vmem:[%s3 + $0x14] sm:$0xf]
  %v473 = vunpack.c.l.bf16 %v467
  %v474 = vunpack.c.l.bf16 %v468
  %v475 = vunpack.c.l.bf16 %v469
  %v476 = vunpack.c.l.bf16 %v470
  %v477 = vunpack.c.l.bf16 %v471
  %v478 = vunpack.c.l.bf16 %v472
  %v479 = vadd.f32 %v445, %v473
  %v480 = vadd.f32 %v448, %v474
  %v481 = vadd.f32 %v453, %v475
  %v482 = vadd.f32 %v456, %v476
  %v483 = vadd.f32 %v461, %v477
  %v484 = vadd.f32 %v464, %v478
  %v485 = vpack.c.bf16 %v480, %v479
  %v486 = vpack.c.bf16 %v482, %v481
  %v487 = vpack.c.bf16 %v484, %v483
  %v491 = vunpack.c.l.b16 %v485
  %v492 = vunpack.c.h.b16 %v485
  %v493 = vunpack.c.l.b16 %v486
  %v494 = vunpack.c.h.b16 %v486
  %v495 = vunpack.c.l.b16 %v487
  %v496 = vunpack.c.h.b16 %v487
  %v497 = vpack.c.b16 %v491, %v491
  %v498 = vpack.c.b16 %v492, %v492
  %v499 = vpack.c.b16 %v493, %v493
  %v500 = vpack.c.b16 %v494, %v494
  %v501 = vpack.c.b16 %v495, %v495
  %v502 = vpack.c.b16 %v496, %v496
  %509 = vst [vmem:[%s4] sm:$0xf] %v497
  %510 = vst [vmem:[%s4 + $0x4] sm:$0xf] %v498
  %511 = vst [vmem:[%s4 + $0x8] sm:$0xf] %v499
  %512 = vst [vmem:[%s4 + $0xc] sm:$0xf] %v500
  %513 = vst [vmem:[%s4 + $0x10] sm:$0xf] %v501
  %514 = vst [vmem:[%s4 + $0x14] sm:$0xf] %v502
  // Predicated region
  $region18: #{vision_transformer_forward.23} parent=0 // pred_check
    _
  $region19: #{vision_transformer_forward.23} parent=0 // pred_check_branch
    %516 = sbr.rel (0) target = $region21
  $region20: #{vision_transformer_forward.23} parent=0 // pred_region
    _
  $region21: #{vision_transformer_forward.23} parent=0 // pred_fallthru
    _
  // Predicated region
  $region22: #{vision_transformer_forward.23} parent=0 // pred_check
    _
  $region23: #{vision_transformer_forward.23} parent=0 // pred_check_branch
    %518 = sbr.rel (0) target = $region25
  $region24: #{vision_transformer_forward.23} parent=0 // pred_region
    _
  $region25: #{vision_transformer_forward.23} parent=0 // pred_fallthru
    _

// kernel: vision_transformer_forward.33
$region0: #{vision_transformer_forward.33}
  #allocation0 [shape = 'u32[]', space=smem, size = 0x4, offset = 0x4, fixed_abs, tag = 'smem constant byte address 0x4 - core index']
  #allocation1 [shape = 'u32[144,128]{1,0:T(1,128)}', space=vmem, size = 0x12000, scoped, tag = 'internal scratch']
  %s0 = inlined_call_operand.vmem [shape: bf16[48,128], index: 0, kind: input, shape index: {}]
  %s1 = inlined_call_operand.vmem [shape: bf16[128,128], index: 1, kind: input, shape index: {}]
  %s2 = inlined_call_operand.vmem [shape: f32[1,128], index: 2, kind: input, shape index: {}]
  %s3 = inlined_call_operand.vmem [shape: f32[1,128], index: 3, kind: input, shape index: {}]
  %s4 = inlined_call_operand.vmem [shape: f32[48,128], index: 4, kind: output, shape index: {}]
  %s5 = sld [smem:[#allocation0]]
  $region26: #{vision_transformer_forward.33} parent=0
    _
  %s7 = ssub.s32 1, %s5
  %s8 = scalar_select 0, %s7, %s5
  // Predicated region
  $region2: #{vision_transformer_forward.33} parent=0 // pred_check
    _
  $region3: #{vision_transformer_forward.33} parent=0 // pred_check_branch
    %10 = sbr.rel (0) target = $region5
  $region4: #{vision_transformer_forward.33} parent=0 // pred_region
    _
  $region5: #{vision_transformer_forward.33} parent=0 // pred_fallthru
    _
  // Predicated region
  $region6: #{vision_transformer_forward.33} parent=0 // pred_check
    _
  $region7: #{vision_transformer_forward.33} parent=0 // pred_check_branch
    %12 = sbr.rel (0) target = $region9
  $region8: #{vision_transformer_forward.33} parent=0 // pred_region
    _
  $region9: #{vision_transformer_forward.33} parent=0 // pred_fallthru
    _
  // Predicated region
  $region10: #{vision_transformer_forward.33} parent=0 // pred_check
    _
  $region11: #{vision_transformer_forward.33} parent=0 // pred_check_branch
    %14 = sbr.rel (0) target = $region13
  $region12: #{vision_transformer_forward.33} parent=0 // pred_region
    _
  $region13: #{vision_transformer_forward.33} parent=0 // pred_fallthru
    _
  // Predicated region
  $region14: #{vision_transformer_forward.33} parent=0 // pred_check
    _
  $region15: #{vision_transformer_forward.33} parent=0 // pred_check_branch
    %16 = sbr.rel (0) target = $region17
  $region16: #{vision_transformer_forward.33} parent=0 // pred_region
    _
  $region17: #{vision_transformer_forward.33} parent=0 // pred_fallthru
    _
  %v18 = vld [vmem:[%s0] sm:$0xf]
  %v19 = vld [vmem:[%s0 + $0x4] sm:$0xf]
  %v20 = vld [vmem:[%s0 + $0x8] sm:$0xf]
  %v21 = vld [vmem:[%s0 + $0xc] sm:$0xf]
  %v22 = vld [vmem:[%s0 + $0x10] sm:$0xf]
  %v23 = vld [vmem:[%s0 + $0x14] sm:$0xf]
  %v24 = vunpack.c.l.bf16 %v18
  %v25 = vunpack.c.l.bf16 %v19
  %v26 = vunpack.c.l.bf16 %v20
  %v27 = vunpack.c.l.bf16 %v21
  %v28 = vunpack.c.l.bf16 %v22
  %v29 = vunpack.c.l.bf16 %v23
  %30 = vadd.xlane.f32.xlu0 %v24
  %v31 = vpop.xlane.xlu0 %30
  %32 = vadd.xlane.f32.xlu0 %v25
  %v33 = vpop.xlane.xlu0 %32
  %34 = vadd.xlane.f32.xlu0 %v26
  %v35 = vpop.xlane.xlu0 %34
  %36 = vadd.xlane.f32.xlu0 %v27
  %v37 = vpop.xlane.xlu0 %36
  %38 = vadd.xlane.f32.xlu0 %v28
  %v39 = vpop.xlane.xlu0 %38
  %40 = vadd.xlane.f32.xlu0 %v29
  %v41 = vpop.xlane.xlu0 %40
  %v42 = vrcp.pop 128.0
  %v43 = vmul.f32 %v31, %v42
  %v44 = vmul.f32 %v33, %v42
  %v45 = vmul.f32 %v35, %v42
  %v46 = vmul.f32 %v37, %v42
  %v47 = vmul.f32 %v39, %v42
  %v48 = vmul.f32 %v41, %v42
  %v49 = vsub.f32 %v24, %v43
  %v50 = vsub.f32 %v25, %v44
  %v51 = vsub.f32 %v26, %v45
  %v52 = vsub.f32 %v27, %v46
  %v53 = vsub.f32 %v28, %v47
  %v54 = vsub.f32 %v29, %v48
  %v55 = vmul.f32 %v49, %v49
  %v56 = vmul.f32 %v50, %v50
  %v57 = vmul.f32 %v51, %v51
  %v58 = vmul.f32 %v52, %v52
  %v59 = vmul.f32 %v53, %v53
  %v60 = vmul.f32 %v54, %v54
  %61 = vadd.xlane.f32.xlu0 %v55
  %v62 = vpop.xlane.xlu0 %61
  %63 = vadd.xlane.f32.xlu0 %v56
  %v64 = vpop.xlane.xlu0 %63
  %65 = vadd.xlane.f32.xlu0 %v57
  %v66 = vpop.xlane.xlu0 %65
  %67 = vadd.xlane.f32.xlu0 %v58
  %v68 = vpop.xlane.xlu0 %67
  %69 = vadd.xlane.f32.xlu0 %v59
  %v70 = vpop.xlane.xlu0 %69
  %71 = vadd.xlane.f32.xlu0 %v60
  %v72 = vpop.xlane.xlu0 %71
  %v73 = vmul.f32 %v62, %v42
  %v74 = vmul.f32 %v64, %v42
  %v75 = vmul.f32 %v66, %v42
  %v76 = vmul.f32 %v68, %v42
  %v77 = vmul.f32 %v70, %v42
  %v78 = vmul.f32 %v72, %v42
  %v79 = vadd.f32 %v73, 1e-05
  %v80 = vadd.f32 %v74, 1e-05
  %v81 = vadd.f32 %v75, 1e-05
  %v82 = vadd.f32 %v76, 1e-05
  %v83 = vadd.f32 %v77, 1e-05
  %v84 = vadd.f32 %v78, 1e-05
  %v85 = vrsqrt.pop %v79
  %v86 = vrsqrt.pop %v80
  %v87 = vrsqrt.pop %v81
  %v88 = vrsqrt.pop %v82
  %v89 = vrsqrt.pop %v83
  %v90 = vrsqrt.pop %v84
  %v91 = vmul.f32 %v49, %v85
  %v92 = vmul.f32 %v50, %v86
  %v93 = vmul.f32 %v51, %v87
  %v94 = vmul.f32 %v52, %v88
  %v95 = vmul.f32 %v53, %v89
  %v96 = vmul.f32 %v54, %v90
  %v97 = vld [vmem:[%s2] sm:$0x1]
  %v99 = vlaneseq
  %v100 = vshrl.u32 %v99, 7
  %v101 = vsub.s32 0, %v100
  %v102 = vrot.slane %v97, %v101
  %v104 = vmul.f32 %v91, %v102
  %v105 = vmul.f32 %v92, %v102
  %v106 = vmul.f32 %v93, %v102
  %v107 = vmul.f32 %v94, %v102
  %v108 = vmul.f32 %v95, %v102
  %v109 = vmul.f32 %v96, %v102
  %v110 = vld [vmem:[%s3] sm:$0x1]
  %v112 = vlaneseq
  %v113 = vshrl.u32 %v112, 7
  %v114 = vsub.s32 0, %v113
  %v115 = vrot.slane %v110, %v114
  %v117 = vadd.f32 %v104, %v115
  %v118 = vadd.f32 %v105, %v115
  %v119 = vadd.f32 %v106, %v115
  %v120 = vadd.f32 %v107, %v115
  %v121 = vadd.f32 %v108, %v115
  %v122 = vadd.f32 %v109, %v115
  %v123 = vpack.c.bf16 %v118, %v117
  %v124 = vpack.c.bf16 %v120, %v119
  %v125 = vpack.c.bf16 %v122, %v121
  %v126 = vld [vmem:[%s1] sm:$0xf]
  %v127 = vld [vmem:[%s1 + $0x4] sm:$0xf]
  %v128 = vld [vmem:[%s1 + $0x8] sm:$0xf]
  %v129 = vld [vmem:[%s1 + $0xc] sm:$0xf]
  %v130 = vld [vmem:[%s1 + $0x10] sm:$0xf]
  %v131 = vld [vmem:[%s1 + $0x14] sm:$0xf]
  %v132 = vld [vmem:[%s1 + $0x18] sm:$0xf]
  %v133 = vld [vmem:[%s1 + $0x1c] sm:$0xf]
  %v134 = vld [vmem:[%s1 + $0x20] sm:$0xf]
  %v135 = vld [vmem:[%s1 + $0x24] sm:$0xf]
  %v136 = vld [vmem:[%s1 + $0x28] sm:$0xf]
  %v137 = vld [vmem:[%s1 + $0x2c] sm:$0xf]
  %v138 = vld [vmem:[%s1 + $0x30] sm:$0xf]
  %v139 = vld [vmem:[%s1 + $0x34] sm:$0xf]
  %v140 = vld [vmem:[%s1 + $0x38] sm:$0xf]
  %v141 = vld [vmem:[%s1 + $0x3c] sm:$0xf]
  %v158 = vunpack.c.l.b16 %v126
  %v159 = vunpack.c.l.b16 %v127
  %v160 = vunpack.c.l.b16 %v128
  %v161 = vunpack.c.l.b16 %v129
  %v162 = vunpack.c.l.b16 %v130
  %v163 = vunpack.c.l.b16 %v131
  %v164 = vunpack.c.l.b16 %v132
  %v165 = vunpack.c.l.b16 %v133
  %v166 = vunpack.c.l.b16 %v134
  %v167 = vunpack.c.l.b16 %v135
  %v168 = vunpack.c.l.b16 %v136
  %v169 = vunpack.c.l.b16 %v137
  %v170 = vunpack.c.l.b16 %v138
  %v171 = vunpack.c.l.b16 %v139
  %v172 = vunpack.c.l.b16 %v140
  %v173 = vunpack.c.l.b16 %v141
  %v174 = vpack.c.b16 %v159, %v158
  %v175 = vpack.c.b16 %v161, %v160
  %v176 = vpack.c.b16 %v163, %v162
  %v177 = vpack.c.b16 %v165, %v164
  %v178 = vpack.c.b16 %v167, %v166
  %v179 = vpack.c.b16 %v169, %v168
  %v180 = vpack.c.b16 %v171, %v170
  %v181 = vpack.c.b16 %v173, %v172
  %190 = vmatprep.subr.bf16.mxu0 0
  %191 = vmatpush1.bf16.msra.mxu0 %v181
  %192 = vmatprep.subr.bf16.mxu0 0
  %193 = vmatpush1.bf16.msra.mxu0 %v180
  %194 = vmatprep.subr.bf16.mxu0 0
  %195 = vmatpush1.bf16.msra.mxu0 %v179
  %196 = vmatprep.subr.bf16.mxu0 0
  %197 = vmatpush1.bf16.msra.mxu0 %v178
  %198 = vmatprep.subr.bf16.mxu0 0
  %199 = vmatpush1.bf16.msra.mxu0 %v177
  %200 = vmatprep.subr.bf16.mxu0 0
  %201 = vmatpush1.bf16.msra.mxu0 %v176
  %202 = vmatprep.subr.bf16.mxu0 0
  %203 = vmatpush1.bf16.msra.mxu0 %v175
  %204 = vmatprep.subr.bf16.mxu0 0
  %205 = vmatpush1.bf16.msra.mxu0 %v174
  %206 = vmatprep.subr.bf16.mxu0 0
  %207 = vmatpush2.bf16.msra.mxu0 0
  %208 = vmatprep.subr.bf16.mxu0 0
  %209 = vmatpush2.bf16.msra.mxu0 0
  %210 = vmatprep.subr.bf16.mxu0 0
  %211 = vmatpush2.bf16.msra.mxu0 0
  %212 = vmatprep.subr.bf16.mxu0 0
  %213 = vmatpush2.bf16.msra.mxu0 0
  %214 = vmatprep.subr.bf16.mxu0 0
  %215 = vmatpush2.bf16.msra.mxu0 0
  %216 = vmatprep.subr.bf16.mxu0 0
  %217 = vmatpush2.bf16.msra.mxu0 0
  %218 = vmatprep.subr.bf16.mxu0 0
  %219 = vmatpush2.bf16.msra.mxu0 0
  %220 = vmatprep.subr.bf16.mxu0 0
  %221 = vmatpush2.bf16.msra.mxu0 0
  %222 = vmatprep.mubr.bf16.mxu0 0
  %223 = vmatmul.mubr.bf16.gmra.mxu0 %v123
  %v224 = vpop.f32.mrf.mxu0
  %v225 = vadd.f32 0.0, %v224
  %v226 = vpop.f32.mrf.mxu0
  %v227 = vpop.f32.mrf.mxu0
  %v228 = vadd.f32 0.0, %v227
  %v229 = vpop.f32.mrf.mxu0
  %230 = vmatprep.mubr.bf16.mxu0 0
  %231 = vmatmul.mubr.bf16.gmra.mxu0 %v124
  %v232 = vpop.f32.mrf.mxu0
  %v233 = vadd.f32 0.0, %v232
  %v234 = vpop.f32.mrf.mxu0
  %v235 = vpop.f32.mrf.mxu0
  %v236 = vadd.f32 0.0, %v235
  %v237 = vpop.f32.mrf.mxu0
  %238 = vmatprep.mubr.bf16.mxu0 0
  %239 = vmatmul.mubr.bf16.gmra.mxu0 %v125
  %v240 = vpop.f32.mrf.mxu0
  %v241 = vadd.f32 0.0, %v240
  %v242 = vpop.f32.mrf.mxu0
  %v243 = vpop.f32.mrf.mxu0
  %v244 = vadd.f32 0.0, %v243
  %v245 = vpop.f32.mrf.mxu0
  %246 = vdwg.mxu0
  %247 = vst [vmem:[%s4] sm:$0xff] %v225
  %248 = vst [vmem:[%s4 + $0x8] sm:$0xff] %v228
  %249 = vst [vmem:[%s4 + $0x10] sm:$0xff] %v233
  %250 = vst [vmem:[%s4 + $0x18] sm:$0xff] %v236
  %251 = vst [vmem:[%s4 + $0x20] sm:$0xff] %v241
  %252 = vst [vmem:[%s4 + $0x28] sm:$0xff] %v244
  // Predicated region
  $region18: #{vision_transformer_forward.33} parent=0 // pred_check
    _
  $region19: #{vision_transformer_forward.33} parent=0 // pred_check_branch
    %254 = sbr.rel (0) target = $region21
  $region20: #{vision_transformer_forward.33} parent=0 // pred_region
    _
  $region21: #{vision_transformer_forward.33} parent=0 // pred_fallthru
    _
  // Predicated region
  $region22: #{vision_transformer_forward.33} parent=0 // pred_check
    _
  $region23: #{vision_transformer_forward.33} parent=0 // pred_check_branch
    %256 = sbr.rel (0) target = $region25
  $region24: #{vision_transformer_forward.33} parent=0 // pred_region
    _
  $region25: #{vision_transformer_forward.33} parent=0 // pred_fallthru
    _

// kernel: vision_transformer_forward.32
$region0: #{vision_transformer_forward.32}
  #allocation0 [shape = 'u32[]', space=smem, size = 0x4, offset = 0x4, fixed_abs, tag = 'smem constant byte address 0x4 - core index']
  #allocation1 [shape = 'u32[144,128]{1,0:T(1,128)}', space=vmem, size = 0x12000, scoped, tag = 'internal scratch']
  %s0 = inlined_call_operand.vmem [shape: bf16[16,128], index: 0, kind: input, shape index: {}]
  %s1 = inlined_call_operand.vmem [shape: bf16[128,128], index: 1, kind: input, shape index: {}]
  %s2 = inlined_call_operand.vmem [shape: f32[1,128], index: 2, kind: input, shape index: {}]
  %s3 = inlined_call_operand.vmem [shape: f32[1,128], index: 3, kind: input, shape index: {}]
  %s4 = inlined_call_operand.vmem [shape: f32[16,128], index: 4, kind: output, shape index: {}]
  %s5 = sld [smem:[#allocation0]]
  $region26: #{vision_transformer_forward.32} parent=0
    _
  %s7 = ssub.s32 1, %s5
  %s8 = scalar_select 0, %s7, %s5
  // Predicated region
  $region2: #{vision_transformer_forward.32} parent=0 // pred_check
    _
  $region3: #{vision_transformer_forward.32} parent=0 // pred_check_branch
    %10 = sbr.rel (0) target = $region5
  $region4: #{vision_transformer_forward.32} parent=0 // pred_region
    _
  $region5: #{vision_transformer_forward.32} parent=0 // pred_fallthru
    _
  // Predicated region
  $region6: #{vision_transformer_forward.32} parent=0 // pred_check
    _
  $region7: #{vision_transformer_forward.32} parent=0 // pred_check_branch
    %12 = sbr.rel (0) target = $region9
  $region8: #{vision_transformer_forward.32} parent=0 // pred_region
    _
  $region9: #{vision_transformer_forward.32} parent=0 // pred_fallthru
    _
  // Predicated region
  $region10: #{vision_transformer_forward.32} parent=0 // pred_check
    _
  $region11: #{vision_transformer_forward.32} parent=0 // pred_check_branch
    %14 = sbr.rel (0) target = $region13
  $region12: #{vision_transformer_forward.32} parent=0 // pred_region
    _
  $region13: #{vision_transformer_forward.32} parent=0 // pred_fallthru
    _
  // Predicated region
  $region14: #{vision_transformer_forward.32} parent=0 // pred_check
    _
  $region15: #{vision_transformer_forward.32} parent=0 // pred_check_branch
    %16 = sbr.rel (0) target = $region17
  $region16: #{vision_transformer_forward.32} parent=0 // pred_region
    _
  $region17: #{vision_transformer_forward.32} parent=0 // pred_fallthru
    _
  %v18 = vld [vmem:[%s0] sm:$0xf]
  %v19 = vld [vmem:[%s0 + $0x4] sm:$0xf]
  %v20 = vunpack.c.l.bf16 %v18
  %v21 = vunpack.c.l.bf16 %v19
  %22 = vadd.xlane.f32.xlu0 %v20
  %v23 = vpop.xlane.xlu0 %22
  %24 = vadd.xlane.f32.xlu0 %v21
  %v25 = vpop.xlane.xlu0 %24
  %v26 = vrcp.pop 128.0
  %v27 = vmul.f32 %v23, %v26
  %v28 = vmul.f32 %v25, %v26
  %v29 = vsub.f32 %v20, %v27
  %v30 = vsub.f32 %v21, %v28
  %v31 = vmul.f32 %v29, %v29
  %v32 = vmul.f32 %v30, %v30
  %33 = vadd.xlane.f32.xlu0 %v31
  %v34 = vpop.xlane.xlu0 %33
  %35 = vadd.xlane.f32.xlu0 %v32
  %v36 = vpop.xlane.xlu0 %35
  %v37 = vmul.f32 %v34, %v26
  %v38 = vmul.f32 %v36, %v26
  %v39 = vadd.f32 %v37, 1e-05
  %v40 = vadd.f32 %v38, 1e-05
  %v41 = vrsqrt.pop %v39
  %v42 = vrsqrt.pop %v40
  %v43 = vmul.f32 %v29, %v41
  %v44 = vmul.f32 %v30, %v42
  %v45 = vld [vmem:[%s2] sm:$0x1]
  %v47 = vlaneseq
  %v48 = vshrl.u32 %v47, 7
  %v49 = vsub.s32 0, %v48
  %v50 = vrot.slane %v45, %v49
  %v52 = vmul.f32 %v43, %v50
  %v53 = vmul.f32 %v44, %v50
  %v54 = vld [vmem:[%s3] sm:$0x1]
  %v56 = vlaneseq
  %v57 = vshrl.u32 %v56, 7
  %v58 = vsub.s32 0, %v57
  %v59 = vrot.slane %v54, %v58
  %v61 = vadd.f32 %v52, %v59
  %v62 = vadd.f32 %v53, %v59
  %v63 = vpack.c.bf16 %v62, %v61
  %v64 = vld [vmem:[%s1] sm:$0xf]
  %v65 = vld [vmem:[%s1 + $0x4] sm:$0xf]
  %v66 = vld [vmem:[%s1 + $0x8] sm:$0xf]
  %v67 = vld [vmem:[%s1 + $0xc] sm:$0xf]
  %v68 = vld [vmem:[%s1 + $0x10] sm:$0xf]
  %v69 = vld [vmem:[%s1 + $0x14] sm:$0xf]
  %v70 = vld [vmem:[%s1 + $0x18] sm:$0xf]
  %v71 = vld [vmem:[%s1 + $0x1c] sm:$0xf]
  %v72 = vld [vmem:[%s1 + $0x20] sm:$0xf]
  %v73 = vld [vmem:[%s1 + $0x24] sm:$0xf]
  %v74 = vld [vmem:[%s1 + $0x28] sm:$0xf]
  %v75 = vld [vmem:[%s1 + $0x2c] sm:$0xf]
  %v76 = vld [vmem:[%s1 + $0x30] sm:$0xf]
  %v77 = vld [vmem:[%s1 + $0x34] sm:$0xf]
  %v78 = vld [vmem:[%s1 + $0x38] sm:$0xf]
  %v79 = vld [vmem:[%s1 + $0x3c] sm:$0xf]
  %v96 = vunpack.c.l.b16 %v64
  %v97 = vunpack.c.l.b16 %v65
  %v98 = vunpack.c.l.b16 %v66
  %v99 = vunpack.c.l.b16 %v67
  %v100 = vunpack.c.l.b16 %v68
  %v101 = vunpack.c.l.b16 %v69
  %v102 = vunpack.c.l.b16 %v70
  %v103 = vunpack.c.l.b16 %v71
  %v104 = vunpack.c.l.b16 %v72
  %v105 = vunpack.c.l.b16 %v73
  %v106 = vunpack.c.l.b16 %v74
  %v107 = vunpack.c.l.b16 %v75
  %v108 = vunpack.c.l.b16 %v76
  %v109 = vunpack.c.l.b16 %v77
  %v110 = vunpack.c.l.b16 %v78
  %v111 = vunpack.c.l.b16 %v79
  %v112 = vpack.c.b16 %v97, %v96
  %v113 = vpack.c.b16 %v99, %v98
  %v114 = vpack.c.b16 %v101, %v100
  %v115 = vpack.c.b16 %v103, %v102
  %v116 = vpack.c.b16 %v105, %v104
  %v117 = vpack.c.b16 %v107, %v106
  %v118 = vpack.c.b16 %v109, %v108
  %v119 = vpack.c.b16 %v111, %v110
  %128 = vmatprep.subr.bf16.mxu0 0
  %129 = vmatpush1.bf16.msra.mxu0 %v119
  %130 = vmatprep.subr.bf16.mxu0 0
  %131 = vmatpush1.bf16.msra.mxu0 %v118
  %132 = vmatprep.subr.bf16.mxu0 0
  %133 = vmatpush1.bf16.msra.mxu0 %v117
  %134 = vmatprep.subr.bf16.mxu0 0
  %135 = vmatpush1.bf16.msra.mxu0 %v116
  %136 = vmatprep.subr.bf16.mxu0 0
  %137 = vmatpush1.bf16.msra.mxu0 %v115
  %138 = vmatprep.subr.bf16.mxu0 0
  %139 = vmatpush1.bf16.msra.mxu0 %v114
  %140 = vmatprep.subr.bf16.mxu0 0
  %141 = vmatpush1.bf16.msra.mxu0 %v113
  %142 = vmatprep.subr.bf16.mxu0 0
  %143 = vmatpush1.bf16.msra.mxu0 %v112
  %144 = vmatprep.subr.bf16.mxu0 0
  %145 = vmatpush2.bf16.msra.mxu0 0
  %146 = vmatprep.subr.bf16.mxu0 0
  %147 = vmatpush2.bf16.msra.mxu0 0
  %148 = vmatprep.subr.bf16.mxu0 0
  %149 = vmatpush2.bf16.msra.mxu0 0
  %150 = vmatprep.subr.bf16.mxu0 0
  %151 = vmatpush2.bf16.msra.mxu0 0
  %152 = vmatprep.subr.bf16.mxu0 0
  %153 = vmatpush2.bf16.msra.mxu0 0
  %154 = vmatprep.subr.bf16.mxu0 0
  %155 = vmatpush2.bf16.msra.mxu0 0
  %156 = vmatprep.subr.bf16.mxu0 0
  %157 = vmatpush2.bf16.msra.mxu0 0
  %158 = vmatprep.subr.bf16.mxu0 0
  %159 = vmatpush2.bf16.msra.mxu0 0
  %160 = vmatprep.mubr.bf16.mxu0 0
  %161 = vmatmul.mubr.bf16.gmra.mxu0 %v63
  %v162 = vpop.f32.mrf.mxu0
  %v163 = vadd.f32 0.0, %v162
  %v164 = vpop.f32.mrf.mxu0
  %v165 = vpop.f32.mrf.mxu0
  %v166 = vadd.f32 0.0, %v165
  %v167 = vpop.f32.mrf.mxu0
  %168 = vdwg.mxu0
  %169 = vst [vmem:[%s4] sm:$0xff] %v163
  %170 = vst [vmem:[%s4 + $0x8] sm:$0xff] %v166
  // Predicated region
  $region18: #{vision_transformer_forward.32} parent=0 // pred_check
    _
  $region19: #{vision_transformer_forward.32} parent=0 // pred_check_branch
    %172 = sbr.rel (0) target = $region21
  $region20: #{vision_transformer_forward.32} parent=0 // pred_region
    _
  $region21: #{vision_transformer_forward.32} parent=0 // pred_fallthru
    _
  // Predicated region
  $region22: #{vision_transformer_forward.32} parent=0 // pred_check
    _
  $region23: #{vision_transformer_forward.32} parent=0 // pred_check_branch
    %174 = sbr.rel (0) target = $region25
  $region24: #{vision_transformer_forward.32} parent=0 // pred_region
    _
  $region25: #{vision_transformer_forward.32} parent=0 // pred_fallthru
    _

</llo_original>
